<compile_context>
chip_gen: v6e
topology: v6e:2x2x1
jax: 0.10.0
libtpu: 0.0.40
codegen_flags: <defaults>
</compile_context>

<pallas_src>
import jax
import jax.numpy as jnp
from jax.experimental import pallas as pl
from jax.experimental.pallas import tpu as pltpu

# ----------------------------- model config ---------------------------------
EDGE_FEAT_DIMS = [8, 8]
NUM_FILTERS = [8, 8]
FC_IN_DIM = 4          # dim of data.bc
FC_OUT_DIM = 8
FCSKIP = [0, 1]        # fcskipcon_indx
GEOM_IN_DIM = 2
OUT_DIM = 3
HIDDEN_NODES = 32
EA_DIM = 4             # dim of data.edge_attr
N_NODES = 8
N_EDGES = 16

_f32 = jnp.float32


# ------------------------------ static plan ----------------------------------
def build_plan():
    """Static (Python-level) description of the layer stack: for every
    Processor+Smoothing block, the dims of the node-feature pieces entering
    it, the incoming edge-feature dim and whether an FC skip branch follows."""
    plan = []
    pieces = [3]                           # x = data.x[:, :3]
    de = EA_DIM
    for i, (ef, nf) in enumerate(zip(EDGE_FEAT_DIMS, NUM_FILTERS)):
        layer = dict(in_pieces=tuple(pieces), de=de, ef=ef, nf=nf, fc=None)
        pieces = [nf, GEOM_IN_DIM]         # smoothing output + skip_info
        de = nf                            # smoothing edge features
        if FCSKIP and i == FCSKIP[0]:
            layer['fc'] = dict(first=True, fin=FC_IN_DIM)
            pieces.append(FC_OUT_DIM)
        elif i in FCSKIP:
            layer['fc'] = dict(first=False, fin=FC_IN_DIM + FC_OUT_DIM)
            pieces.append(FC_OUT_DIM)
        plan.append(layer)
    return plan, tuple(pieces)             # final pieces feeding the decoder


# ------------------------------ fused kernel ---------------------------------
def make_fused_kernel(plan, final_pieces):
    """Build the single fused kernel.  Operands are unpacked positionally in
    exactly the order produced by the host-side flatteners below."""

    def kernel(*refs):
        out_ref = refs[-1]
        it = iter(refs[:-1])

        def nxt():
            return next(it)[...]

        def dot(a, b):
            return jnp.dot(a, b, preferred_element_type=jnp.float32)

        def lrelu(v):
            return jnp.where(v > 0.0, v, 0.01 * v)

        gi = nxt()        # (E, N): rows select x_i = x[dst]
        gj = nxt()        # (E, N): rows select x_j = x[src]
        s_sum = nxt()     # (N, E): scatter-sum by src
        s_mean = nxt()    # (N, E): scatter-mean by src
        x0 = nxt()        # (N, 3)
        skip = nxt()      # (N, GEOM_IN_DIM)
        ea = nxt()        # (E, EA_DIM)
        bc = nxt()        # (N, FC_IN_DIM)

        x_parts = [x0]    # node features kept as pieces (no concatenation)
        fc_out = None

        for layer in plan:
            n_pieces = len(layer['in_pieces'])
            w_mean = [nxt() for _ in range(n_pieces)]
            w_diff = [nxt() for _ in range(n_pieces)]
            w_ea = nxt()
            eb1, ew2, eb2 = nxt(), nxt(), nxt()
            w_nx = [nxt() for _ in range(n_pieces)]
            w_nagg = nxt()
            nb1, nw2, nb2 = nxt(), nxt(), nxt()

            # --- ProcessorLayer.message + edge_mlp (cat folded into partial dots)
            h = dot(ea, w_ea) + eb1
            for p, wm, wd in zip(x_parts, w_mean, w_diff):
                pi = dot(gi, p)                              # x_i piece
                pj = dot(gj, p)                              # x_j piece
                h = h + dot((pi + pj) * 0.5, wm) + dot(jnp.abs(pi - pj) * 0.5, wd)
            h = jnp.maximum(h, 0.0)
            ue = dot(h, ew2) + eb2                           # (E, ef)

            # --- ProcessorLayer.aggregate (scatter-sum by src) + node_mlp
            agg = dot(s_sum, ue)                             # (N, ef)
            h2 = dot(agg, w_nagg) + nb1
            for p, wn in zip(x_parts, w_nx):
                h2 = h2 + dot(p, wn)
            h2 = jnp.maximum(h2, 0.0)
            x = jnp.maximum(dot(h2, nw2) + nb2, 0.0)         # (N, nf)

            # --- SmoothingLayer: edges=(x_i+x_j)/2, nodes=scatter-mean by src
            ue_s = (dot(gi, x) + dot(gj, x)) * 0.5           # (E, nf)
            x = dot(s_mean, ue_s)                            # (N, nf)
            ea = ue_s

            x_parts = [x, skip]

            # --- FC skip branch: Linear -> LeakyReLU -> Linear -> LeakyReLU -> Linear
            if layer['fc'] is not None:
                if layer['fc']['first']:
                    fw1_bc = nxt()
                    f = dot(bc, fw1_bc)
                else:
                    fw1_bc = nxt()
                    fw1_fc = nxt()
                    f = dot(bc, fw1_bc) + dot(fc_out, fw1_fc)
                fb1, fw2, fb2, fw3, fb3 = nxt(), nxt(), nxt(), nxt(), nxt()
                f = lrelu(f + fb1)
                f = lrelu(dot(f, fw2) + fb2)
                fc_out = dot(f, fw3) + fb3                   # (N, FC_OUT_DIM)
                x_parts.append(fc_out)

        # --- decoder (cat folded into per-piece partial dots)
        dw = [nxt() for _ in range(len(final_pieces))]
        db = nxt()
        pred = db
        for p, w in zip(x_parts, dw):
            pred = pred + dot(p, w)
        out_ref[...] = pred

    return kernel


# ------------------- host-side, once-per-model preparation -------------------
def build_graph_operators(edge_index, n):
    """One-hot gather/scatter operators; depend only on topology -> build once."""
    src, dst = edge_index[0], edge_index[1]
    gj = jax.nn.one_hot(src, n, dtype=_f32)          # x_j = gj @ x
    gi = jax.nn.one_hot(dst, n, dtype=_f32)          # x_i = gi @ x
    s_sum = gj.T                                     # scatter-sum by src
    deg = jnp.maximum(jnp.sum(s_sum, axis=1, keepdims=True), 1.0)
    s_mean = s_sum / deg                             # scatter-mean by src
    return gi, gj, s_sum, s_mean


def prepare_static_operands(plan, final_pieces, params):
    """Split every weight matrix once (per model) into the row blocks the fused
    kernel consumes, in the exact order the kernel unpacks them."""
    ops = []
    fc_idx = 0
    for li, layer in enumerate(plan):
        pp = params['proc'][li]
        dims = layer['in_pieces']
        de, nf = layer['de'], layer['nf']
        off = 0
        for d in dims:                                   # (xi+xj)/2 block
            ops.append(pp['ew1'][off:off + d]); off += d
        for d in dims:                                   # |xi-xj|/2 block
            ops.append(pp['ew1'][off:off + d]); off += d
        ops.append(pp['ew1'][off:off + de])              # edge_attr block
        ops += [pp['eb1'], pp['ew2'], pp['eb2']]
        off = 0
        for d in dims:                                   # x block of node_mlp
            ops.append(pp['nw1'][off:off + d]); off += d
        ops.append(pp['nw1'][off:off + nf])              # aggregated messages
        ops += [pp['nb1'], pp['nw2'], pp['nb2']]
        if layer['fc'] is not None:
            fp = params['fc'][fc_idx]; fc_idx += 1
            if layer['fc']['first']:
                ops.append(fp['w1'])
            else:
                ops.append(fp['w1'][:FC_IN_DIM])
                ops.append(fp['w1'][FC_IN_DIM:])
            ops += [fp['b1'], fp['w2'], fp['b2'], fp['w3'], fp['b3']]
    dw = params['dec']['w']
    off = 0
    for d in final_pieces:                               # decoder per-piece
        ops.append(dw[off:off + d]); off += d
    ops.append(params['dec']['b'])
    return ops


def make_flowgnn_forward(plan, final_pieces, params, edge_index, n_nodes):
    """Returns fwd(x_full, edge_attr, bc) -> (N, OUT_DIM).  Graph operators and
    weight slices are prepared once; per forward there is a single pallas_call."""
    graph_ops = list(build_graph_operators(edge_index, n_nodes))
    weight_ops = prepare_static_operands(plan, final_pieces, params)
    kernel = make_fused_kernel(plan, final_pieces)
    vmem = pl.BlockSpec(memory_space=pltpu.MemorySpace.VMEM)

    def forward(x_full, edge_attr, bc):
        x0 = x_full[:, :3]
        skip = x_full[:, :GEOM_IN_DIM]
        ops = graph_ops + [x0, skip, edge_attr, bc] + weight_ops
        return pl.pallas_call(
            kernel,
            out_shape=jax.ShapeDtypeStruct((n_nodes, OUT_DIM), _f32),
            in_specs=[vmem] * len(ops),
            out_specs=vmem,
        )(*ops)

    return forward


# ----------------------------- parameter setup -------------------------------
def _linear_init(key, din, dout):
    kw, kb = jax.random.split(key)
    limit = 1.0 / jnp.sqrt(jnp.float32(din))
    w = jax.random.uniform(kw, (din, dout), _f32, -limit, limit)
    b = jax.random.uniform(kb, (1, dout), _f32, -limit, limit)
    return w, b


def build_params(key, plan, final_pieces):
    params = {'proc': [], 'fc': []}
    for layer in plan:
        dx = sum(layer['in_pieces'])
        de, ef, nf = layer['de'], layer['ef'], layer['nf']
        keys = jax.random.split(key, 6)
        key = keys[5]
        ew1, eb1 = _linear_init(keys[0], 2 * dx + de, HIDDEN_NODES)
        ew2, eb2 = _linear_init(keys[1], HIDDEN_NODES, ef)
        nw1, nb1 = _linear_init(keys[2], dx + nf, HIDDEN_NODES)
        nw2, nb2 = _linear_init(keys[3], HIDDEN_NODES, nf)
        params['proc'].append(dict(ew1=ew1, eb1=eb1, ew2=ew2, eb2=eb2,
                                   nw1=nw1, nb1=nb1, nw2=nw2, nb2=nb2))
        if layer['fc'] is not None:
            fkeys = jax.random.split(keys[4], 3)
            w1, b1 = _linear_init(fkeys[0], layer['fc']['fin'], 24)
            w2, b2 = _linear_init(fkeys[1], 24, 64)
            w3, b3 = _linear_init(fkeys[2], 64, FC_OUT_DIM)
            params['fc'].append(dict(w1=w1, b1=b1, w2=w2, b2=b2, w3=w3, b3=b3))
    dw, db = _linear_init(key, sum(final_pieces), OUT_DIM)
    params['dec'] = dict(w=dw, b=db)
    return params


# ------------------------- pure-JAX reference (check) ------------------------
def ref_forward(params, x_full, edge_index, edge_attr, bc):
    n = x_full.shape[0]
    src, dst = edge_index[0], edge_index[1]
    deg = jnp.maximum(jnp.zeros((n,), _f32).at[src].add(1.0), 1.0)

    def lrelu(v):
        return jnp.where(v > 0.0, v, 0.01 * v)

    x = x_full[:, :3]
    skip = x[:, :GEOM_IN_DIM]
    fc_out = None
    fc_counter = 0
    for i in range(len(NUM_FILTERS)):
        pp = params['proc'][i]
        xi, xj = x[dst], x[src]
        m = jnp.concatenate([(xi + xj) / 2, jnp.abs(xi - xj) / 2, edge_attr], axis=1)
        h = jnp.maximum(m @ pp['ew1'] + pp['eb1'], 0.0)
        ue = h @ pp['ew2'] + pp['eb2']
        agg = jnp.zeros((n, ue.shape[1]), _f32).at[src].add(ue)
        un = jnp.concatenate([x, agg], axis=1)
        h2 = jnp.maximum(un @ pp['nw1'] + pp['nb1'], 0.0)
        x = jnp.maximum(h2 @ pp['nw2'] + pp['nb2'], 0.0)
        edge_attr = ue
        # smoothing
        ue2 = (x[dst] + x[src]) / 2
        x = jnp.zeros((n, x.shape[1]), _f32).at[src].add(ue2) / deg[:, None]
        edge_attr = ue2
        x = jnp.concatenate([x, skip], axis=1)
        if i == FCSKIP[0]:
            fp = params['fc'][0]
            fc_out = lrelu(bc @ fp['w1'] + fp['b1'])
            fc_out = lrelu(fc_out @ fp['w2'] + fp['b2'])
            fc_out = fc_out @ fp['w3'] + fp['b3']
            x = jnp.concatenate([x, fc_out], axis=1)
            fc_counter += 1
        elif i in FCSKIP:
            fp = params['fc'][fc_counter]
            z = jnp.concatenate([bc, fc_out], axis=1)
            fc_out = lrelu(z @ fp['w1'] + fp['b1'])
            fc_out = lrelu(fc_out @ fp['w2'] + fp['b2'])
            fc_out = fc_out @ fp['w3'] + fp['b3']
            x = jnp.concatenate([x, fc_out], axis=1)
            fc_counter += 1
    return x @ params['dec']['w'] + params['dec']['b']


# ---------------------------------- main --------------------------------------
if __name__ == "__main__":
    key = jax.random.PRNGKey(0)
    kp, kx, ke, kb = jax.random.split(key, 4)

    plan, final_pieces = build_plan()
    params = build_params(kp, plan, final_pieces)

    # synthetic graph: each node is the source of exactly 2 edges
    src = jnp.repeat(jnp.arange(N_NODES, dtype=jnp.int32), 2)
    off = jnp.tile(jnp.array([1, 3], dtype=jnp.int32), N_NODES)
    dst = (src + off) % N_NODES
    edge_index = jnp.stack([src, dst], axis=0)                  # (2, E)

    x_full = jax.random.normal(kx, (N_NODES, 5), _f32)          # data.x
    edge_attr = jax.random.normal(ke, (N_EDGES, EA_DIM), _f32)  # data.edge_attr
    bc = jax.random.normal(kb, (N_NODES, FC_IN_DIM), _f32)      # data.bc

    forward = make_flowgnn_forward(plan, final_pieces, params, edge_index, N_NODES)
    pred = jax.block_until_ready(forward(x_full, edge_attr, bc))

    ref = jax.block_until_ready(ref_forward(params, x_full, edge_index, edge_attr, bc))
    assert pred.shape == (N_NODES, OUT_DIM)
    assert jnp.allclose(pred, ref, rtol=1e-4, atol=1e-5), "mismatch vs reference"

    print("KERNEL_OK")
</pallas_src>

<mosaic_0001>
module attributes {stable_mosaic.version = 11 : i64} {
  func.func @kernel(%arg0: memref<16x8xf32, #tpu.memory_space<vmem>>, %arg1: memref<16x8xf32, #tpu.memory_space<vmem>>, %arg2: memref<8x16xf32, #tpu.memory_space<vmem>>, %arg3: memref<8x16xf32, #tpu.memory_space<vmem>>, %arg4: memref<8x3xf32, #tpu.memory_space<vmem>>, %arg5: memref<8x2xf32, #tpu.memory_space<vmem>>, %arg6: memref<16x4xf32, #tpu.memory_space<vmem>>, %arg7: memref<8x4xf32, #tpu.memory_space<vmem>>, %arg8: memref<3x32xf32, #tpu.memory_space<vmem>>, %arg9: memref<3x32xf32, #tpu.memory_space<vmem>>, %arg10: memref<4x32xf32, #tpu.memory_space<vmem>>, %arg11: memref<1x32xf32, #tpu.memory_space<vmem>>, %arg12: memref<32x8xf32, #tpu.memory_space<vmem>>, %arg13: memref<1x8xf32, #tpu.memory_space<vmem>>, %arg14: memref<3x32xf32, #tpu.memory_space<vmem>>, %arg15: memref<8x32xf32, #tpu.memory_space<vmem>>, %arg16: memref<1x32xf32, #tpu.memory_space<vmem>>, %arg17: memref<32x8xf32, #tpu.memory_space<vmem>>, %arg18: memref<1x8xf32, #tpu.memory_space<vmem>>, %arg19: memref<4x24xf32, #tpu.memory_space<vmem>>, %arg20: memref<1x24xf32, #tpu.memory_space<vmem>>, %arg21: memref<24x64xf32, #tpu.memory_space<vmem>>, %arg22: memref<1x64xf32, #tpu.memory_space<vmem>>, %arg23: memref<64x8xf32, #tpu.memory_space<vmem>>, %arg24: memref<1x8xf32, #tpu.memory_space<vmem>>, %arg25: memref<8x32xf32, #tpu.memory_space<vmem>>, %arg26: memref<2x32xf32, #tpu.memory_space<vmem>>, %arg27: memref<8x32xf32, #tpu.memory_space<vmem>>, %arg28: memref<8x32xf32, #tpu.memory_space<vmem>>, %arg29: memref<2x32xf32, #tpu.memory_space<vmem>>, %arg30: memref<8x32xf32, #tpu.memory_space<vmem>>, %arg31: memref<8x32xf32, #tpu.memory_space<vmem>>, %arg32: memref<1x32xf32, #tpu.memory_space<vmem>>, %arg33: memref<32x8xf32, #tpu.memory_space<vmem>>, %arg34: memref<1x8xf32, #tpu.memory_space<vmem>>, %arg35: memref<8x32xf32, #tpu.memory_space<vmem>>, %arg36: memref<2x32xf32, #tpu.memory_space<vmem>>, %arg37: memref<8x32xf32, #tpu.memory_space<vmem>>, %arg38: memref<8x32xf32, #tpu.memory_space<vmem>>, %arg39: memref<1x32xf32, #tpu.memory_space<vmem>>, %arg40: memref<32x8xf32, #tpu.memory_space<vmem>>, %arg41: memref<1x8xf32, #tpu.memory_space<vmem>>, %arg42: memref<4x24xf32, #tpu.memory_space<vmem>>, %arg43: memref<8x24xf32, #tpu.memory_space<vmem>>, %arg44: memref<1x24xf32, #tpu.memory_space<vmem>>, %arg45: memref<24x64xf32, #tpu.memory_space<vmem>>, %arg46: memref<1x64xf32, #tpu.memory_space<vmem>>, %arg47: memref<64x8xf32, #tpu.memory_space<vmem>>, %arg48: memref<1x8xf32, #tpu.memory_space<vmem>>, %arg49: memref<8x3xf32, #tpu.memory_space<vmem>>, %arg50: memref<2x3xf32, #tpu.memory_space<vmem>>, %arg51: memref<8x3xf32, #tpu.memory_space<vmem>>, %arg52: memref<1x3xf32, #tpu.memory_space<vmem>>, %arg53: memref<8x3xf32, #tpu.memory_space<vmem>>) attributes {dimension_semantics = [], scalar_prefetch = 0 : i64, scratch_operands = 0 : i64, tpu.core_type = #tpu.core_type<tc>} {
    %c0 = arith.constant 0 : index
    %c0_0 = arith.constant 0 : index
    %0 = vector.load %arg0[%c0, %c0_0] : memref<16x8xf32, #tpu.memory_space<vmem>>, vector<16x8xf32>
    %c0_1 = arith.constant 0 : index
    %c0_2 = arith.constant 0 : index
    %1 = vector.load %arg1[%c0_1, %c0_2] : memref<16x8xf32, #tpu.memory_space<vmem>>, vector<16x8xf32>
    %c0_3 = arith.constant 0 : index
    %c0_4 = arith.constant 0 : index
    %2 = vector.load %arg2[%c0_3, %c0_4] : memref<8x16xf32, #tpu.memory_space<vmem>>, vector<8x16xf32>
    %c0_5 = arith.constant 0 : index
    %c0_6 = arith.constant 0 : index
    %3 = vector.load %arg3[%c0_5, %c0_6] : memref<8x16xf32, #tpu.memory_space<vmem>>, vector<8x16xf32>
    %c0_7 = arith.constant 0 : index
    %c0_8 = arith.constant 0 : index
    %4 = vector.load %arg4[%c0_7, %c0_8] : memref<8x3xf32, #tpu.memory_space<vmem>>, vector<8x3xf32>
    %c0_9 = arith.constant 0 : index
    %c0_10 = arith.constant 0 : index
    %5 = vector.load %arg5[%c0_9, %c0_10] : memref<8x2xf32, #tpu.memory_space<vmem>>, vector<8x2xf32>
    %c0_11 = arith.constant 0 : index
    %c0_12 = arith.constant 0 : index
    %6 = vector.load %arg6[%c0_11, %c0_12] : memref<16x4xf32, #tpu.memory_space<vmem>>, vector<16x4xf32>
    %c0_13 = arith.constant 0 : index
    %c0_14 = arith.constant 0 : index
    %7 = vector.load %arg7[%c0_13, %c0_14] : memref<8x4xf32, #tpu.memory_space<vmem>>, vector<8x4xf32>
    %c0_15 = arith.constant 0 : index
    %c0_16 = arith.constant 0 : index
    %8 = vector.load %arg8[%c0_15, %c0_16] : memref<3x32xf32, #tpu.memory_space<vmem>>, vector<3x32xf32>
    %c0_17 = arith.constant 0 : index
    %c0_18 = arith.constant 0 : index
    %9 = vector.load %arg9[%c0_17, %c0_18] : memref<3x32xf32, #tpu.memory_space<vmem>>, vector<3x32xf32>
    %c0_19 = arith.constant 0 : index
    %c0_20 = arith.constant 0 : index
    %10 = vector.load %arg10[%c0_19, %c0_20] : memref<4x32xf32, #tpu.memory_space<vmem>>, vector<4x32xf32>
    %c0_21 = arith.constant 0 : index
    %c0_22 = arith.constant 0 : index
    %11 = vector.load %arg11[%c0_21, %c0_22] : memref<1x32xf32, #tpu.memory_space<vmem>>, vector<1x32xf32>
    %c0_23 = arith.constant 0 : index
    %c0_24 = arith.constant 0 : index
    %12 = vector.load %arg12[%c0_23, %c0_24] : memref<32x8xf32, #tpu.memory_space<vmem>>, vector<32x8xf32>
    %c0_25 = arith.constant 0 : index
    %c0_26 = arith.constant 0 : index
    %13 = vector.load %arg13[%c0_25, %c0_26] : memref<1x8xf32, #tpu.memory_space<vmem>>, vector<1x8xf32>
    %c0_27 = arith.constant 0 : index
    %c0_28 = arith.constant 0 : index
    %14 = vector.load %arg14[%c0_27, %c0_28] : memref<3x32xf32, #tpu.memory_space<vmem>>, vector<3x32xf32>
    %c0_29 = arith.constant 0 : index
    %c0_30 = arith.constant 0 : index
    %15 = vector.load %arg15[%c0_29, %c0_30] : memref<8x32xf32, #tpu.memory_space<vmem>>, vector<8x32xf32>
    %c0_31 = arith.constant 0 : index
    %c0_32 = arith.constant 0 : index
    %16 = vector.load %arg16[%c0_31, %c0_32] : memref<1x32xf32, #tpu.memory_space<vmem>>, vector<1x32xf32>
    %c0_33 = arith.constant 0 : index
    %c0_34 = arith.constant 0 : index
    %17 = vector.load %arg17[%c0_33, %c0_34] : memref<32x8xf32, #tpu.memory_space<vmem>>, vector<32x8xf32>
    %c0_35 = arith.constant 0 : index
    %c0_36 = arith.constant 0 : index
    %18 = vector.load %arg18[%c0_35, %c0_36] : memref<1x8xf32, #tpu.memory_space<vmem>>, vector<1x8xf32>
    %cst = arith.constant dense<0.000000e+00> : vector<16x32xf32>
    %19 = tpu.matmul %6, %10, %cst {dimension_numbers = #tpu.dot_dimension_numbers<[1], [0], [0], [1], [0, 0, 1, 1], [], []>} : vector<16x4xf32>, vector<4x32xf32>, vector<16x32xf32> -> vector<16x32xf32>
    %20 = vector.broadcast %11 : vector<1x32xf32> to vector<16x32xf32>
    %21 = arith.addf %19, %20 : vector<16x32xf32>
    %cst_37 = arith.constant dense<0.000000e+00> : vector<16x3xf32>
    %22 = tpu.matmul %0, %4, %cst_37 {dimension_numbers = #tpu.dot_dimension_numbers<[1], [0], [0], [1], [0, 0, 1, 1], [], []>} : vector<16x8xf32>, vector<8x3xf32>, vector<16x3xf32> -> vector<16x3xf32>
    %cst_38 = arith.constant dense<0.000000e+00> : vector<16x3xf32>
    %23 = tpu.matmul %1, %4, %cst_38 {dimension_numbers = #tpu.dot_dimension_numbers<[1], [0], [0], [1], [0, 0, 1, 1], [], []>} : vector<16x8xf32>, vector<8x3xf32>, vector<16x3xf32> -> vector<16x3xf32>
    %24 = arith.addf %22, %23 : vector<16x3xf32>
    %cst_39 = arith.constant 5.000000e-01 : f32
    %25 = vector.broadcast %cst_39 : f32 to vector<16x3xf32>
    %26 = arith.mulf %24, %25 : vector<16x3xf32>
    %cst_40 = arith.constant dense<0.000000e+00> : vector<16x32xf32>
    %27 = tpu.matmul %26, %8, %cst_40 {dimension_numbers = #tpu.dot_dimension_numbers<[1], [0], [0], [1], [0, 0, 1, 1], [], []>} : vector<16x3xf32>, vector<3x32xf32>, vector<16x32xf32> -> vector<16x32xf32>
    %28 = arith.addf %21, %27 : vector<16x32xf32>
    %29 = arith.subf %22, %23 : vector<16x3xf32>
    %30 = math.absf %29 : vector<16x3xf32>
    %cst_41 = arith.constant 5.000000e-01 : f32
    %31 = vector.broadcast %cst_41 : f32 to vector<16x3xf32>
    %32 = arith.mulf %30, %31 : vector<16x3xf32>
    %cst_42 = arith.constant dense<0.000000e+00> : vector<16x32xf32>
    %33 = tpu.matmul %32, %9, %cst_42 {dimension_numbers = #tpu.dot_dimension_numbers<[1], [0], [0], [1], [0, 0, 1, 1], [], []>} : vector<16x3xf32>, vector<3x32xf32>, vector<16x32xf32> -> vector<16x32xf32>
    %34 = arith.addf %28, %33 : vector<16x32xf32>
    %cst_43 = arith.constant 0.000000e+00 : f32
    %35 = vector.broadcast %cst_43 : f32 to vector<16x32xf32>
    %36 = arith.maximumf %34, %35 : vector<16x32xf32>
    %cst_44 = arith.constant dense<0.000000e+00> : vector<16x8xf32>
    %37 = tpu.matmul %36, %12, %cst_44 {dimension_numbers = #tpu.dot_dimension_numbers<[1], [0], [0], [1], [0, 0, 1, 1], [], []>} : vector<16x32xf32>, vector<32x8xf32>, vector<16x8xf32> -> vector<16x8xf32>
    %38 = vector.broadcast %13 : vector<1x8xf32> to vector<16x8xf32>
    %39 = arith.addf %37, %38 : vector<16x8xf32>
    %cst_45 = arith.constant dense<0.000000e+00> : vector<8x8xf32>
    %40 = tpu.matmul %2, %39, %cst_45 {dimension_numbers = #tpu.dot_dimension_numbers<[1], [0], [0], [1], [0, 0, 1, 1], [], []>} : vector<8x16xf32>, vector<16x8xf32>, vector<8x8xf32> -> vector<8x8xf32>
    %cst_46 = arith.constant dense<0.000000e+00> : vector<8x32xf32>
    %41 = tpu.matmul %40, %15, %cst_46 {dimension_numbers = #tpu.dot_dimension_numbers<[1], [0], [0], [1], [0, 0, 1, 1], [], []>} : vector<8x8xf32>, vector<8x32xf32>, vector<8x32xf32> -> vector<8x32xf32>
    %42 = vector.broadcast %16 : vector<1x32xf32> to vector<8x32xf32>
    %43 = arith.addf %41, %42 : vector<8x32xf32>
    %cst_47 = arith.constant dense<0.000000e+00> : vector<8x32xf32>
    %44 = tpu.matmul %4, %14, %cst_47 {dimension_numbers = #tpu.dot_dimension_numbers<[1], [0], [0], [1], [0, 0, 1, 1], [], []>} : vector<8x3xf32>, vector<3x32xf32>, vector<8x32xf32> -> vector<8x32xf32>
    %45 = arith.addf %43, %44 : vector<8x32xf32>
    %cst_48 = arith.constant 0.000000e+00 : f32
    %46 = vector.broadcast %cst_48 : f32 to vector<8x32xf32>
    %47 = arith.maximumf %45, %46 : vector<8x32xf32>
    %cst_49 = arith.constant dense<0.000000e+00> : vector<8x8xf32>
    %48 = tpu.matmul %47, %17, %cst_49 {dimension_numbers = #tpu.dot_dimension_numbers<[1], [0], [0], [1], [0, 0, 1, 1], [], []>} : vector<8x32xf32>, vector<32x8xf32>, vector<8x8xf32> -> vector<8x8xf32>
    %49 = vector.broadcast %18 : vector<1x8xf32> to vector<8x8xf32>
    %50 = arith.addf %48, %49 : vector<8x8xf32>
    %cst_50 = arith.constant 0.000000e+00 : f32
    %51 = vector.broadcast %cst_50 : f32 to vector<8x8xf32>
    %52 = arith.maximumf %50, %51 : vector<8x8xf32>
    %cst_51 = arith.constant dense<0.000000e+00> : vector<16x8xf32>
    %53 = tpu.matmul %0, %52, %cst_51 {dimension_numbers = #tpu.dot_dimension_numbers<[1], [0], [0], [1], [0, 0, 1, 1], [], []>} : vector<16x8xf32>, vector<8x8xf32>, vector<16x8xf32> -> vector<16x8xf32>
    %cst_52 = arith.constant dense<0.000000e+00> : vector<16x8xf32>
    %54 = tpu.matmul %1, %52, %cst_52 {dimension_numbers = #tpu.dot_dimension_numbers<[1], [0], [0], [1], [0, 0, 1, 1], [], []>} : vector<16x8xf32>, vector<8x8xf32>, vector<16x8xf32> -> vector<16x8xf32>
    %55 = arith.addf %53, %54 : vector<16x8xf32>
    %cst_53 = arith.constant 5.000000e-01 : f32
    %56 = vector.broadcast %cst_53 : f32 to vector<16x8xf32>
    %57 = arith.mulf %55, %56 : vector<16x8xf32>
    %cst_54 = arith.constant dense<0.000000e+00> : vector<8x8xf32>
    %58 = tpu.matmul %3, %57, %cst_54 {dimension_numbers = #tpu.dot_dimension_numbers<[1], [0], [0], [1], [0, 0, 1, 1], [], []>} : vector<8x16xf32>, vector<16x8xf32>, vector<8x8xf32> -> vector<8x8xf32>
    %c0_55 = arith.constant 0 : index
    %c0_56 = arith.constant 0 : index
    %59 = vector.load %arg19[%c0_55, %c0_56] : memref<4x24xf32, #tpu.memory_space<vmem>>, vector<4x24xf32>
    %cst_57 = arith.constant dense<0.000000e+00> : vector<8x24xf32>
    %60 = tpu.matmul %7, %59, %cst_57 {dimension_numbers = #tpu.dot_dimension_numbers<[1], [0], [0], [1], [0, 0, 1, 1], [], []>} : vector<8x4xf32>, vector<4x24xf32>, vector<8x24xf32> -> vector<8x24xf32>
    %c0_58 = arith.constant 0 : index
    %c0_59 = arith.constant 0 : index
    %61 = vector.load %arg20[%c0_58, %c0_59] : memref<1x24xf32, #tpu.memory_space<vmem>>, vector<1x24xf32>
    %c0_60 = arith.constant 0 : index
    %c0_61 = arith.constant 0 : index
    %62 = vector.load %arg21[%c0_60, %c0_61] : memref<24x64xf32, #tpu.memory_space<vmem>>, vector<24x64xf32>
    %c0_62 = arith.constant 0 : index
    %c0_63 = arith.constant 0 : index
    %63 = vector.load %arg22[%c0_62, %c0_63] : memref<1x64xf32, #tpu.memory_space<vmem>>, vector<1x64xf32>
    %c0_64 = arith.constant 0 : index
    %c0_65 = arith.constant 0 : index
    %64 = vector.load %arg23[%c0_64, %c0_65] : memref<64x8xf32, #tpu.memory_space<vmem>>, vector<64x8xf32>
    %c0_66 = arith.constant 0 : index
    %c0_67 = arith.constant 0 : index
    %65 = vector.load %arg24[%c0_66, %c0_67] : memref<1x8xf32, #tpu.memory_space<vmem>>, vector<1x8xf32>
    %66 = vector.broadcast %61 : vector<1x24xf32> to vector<8x24xf32>
    %67 = arith.addf %60, %66 : vector<8x24xf32>
    %cst_68 = arith.constant 0.000000e+00 : f32
    %68 = vector.broadcast %cst_68 : f32 to vector<8x24xf32>
    %69 = arith.cmpf ogt, %67, %68 : vector<8x24xf32>
    %cst_69 = arith.constant 0.00999999977 : f32
    %70 = vector.broadcast %cst_69 : f32 to vector<8x24xf32>
    %71 = arith.mulf %70, %67 : vector<8x24xf32>
    %72 = arith.select %69, %67, %71 : vector<8x24xi1>, vector<8x24xf32>
    %cst_70 = arith.constant dense<0.000000e+00> : vector<8x64xf32>
    %73 = tpu.matmul %72, %62, %cst_70 {dimension_numbers = #tpu.dot_dimension_numbers<[1], [0], [0], [1], [0, 0, 1, 1], [], []>} : vector<8x24xf32>, vector<24x64xf32>, vector<8x64xf32> -> vector<8x64xf32>
    %74 = vector.broadcast %63 : vector<1x64xf32> to vector<8x64xf32>
    %75 = arith.addf %73, %74 : vector<8x64xf32>
    %cst_71 = arith.constant 0.000000e+00 : f32
    %76 = vector.broadcast %cst_71 : f32 to vector<8x64xf32>
    %77 = arith.cmpf ogt, %75, %76 : vector<8x64xf32>
    %cst_72 = arith.constant 0.00999999977 : f32
    %78 = vector.broadcast %cst_72 : f32 to vector<8x64xf32>
    %79 = arith.mulf %78, %75 : vector<8x64xf32>
    %80 = arith.select %77, %75, %79 : vector<8x64xi1>, vector<8x64xf32>
    %cst_73 = arith.constant dense<0.000000e+00> : vector<8x8xf32>
    %81 = tpu.matmul %80, %64, %cst_73 {dimension_numbers = #tpu.dot_dimension_numbers<[1], [0], [0], [1], [0, 0, 1, 1], [], []>} : vector<8x64xf32>, vector<64x8xf32>, vector<8x8xf32> -> vector<8x8xf32>
    %82 = vector.broadcast %65 : vector<1x8xf32> to vector<8x8xf32>
    %83 = arith.addf %81, %82 : vector<8x8xf32>
    %c0_74 = arith.constant 0 : index
    %c0_75 = arith.constant 0 : index
    %84 = vector.load %arg25[%c0_74, %c0_75] : memref<8x32xf32, #tpu.memory_space<vmem>>, vector<8x32xf32>
    %c0_76 = arith.constant 0 : index
    %c0_77 = arith.constant 0 : index
    %85 = vector.load %arg26[%c0_76, %c0_77] : memref<2x32xf32, #tpu.memory_space<vmem>>, vector<2x32xf32>
    %c0_78 = arith.constant 0 : index
    %c0_79 = arith.constant 0 : index
    %86 = vector.load %arg27[%c0_78, %c0_79] : memref<8x32xf32, #tpu.memory_space<vmem>>, vector<8x32xf32>
    %c0_80 = arith.constant 0 : index
    %c0_81 = arith.constant 0 : index
    %87 = vector.load %arg28[%c0_80, %c0_81] : memref<8x32xf32, #tpu.memory_space<vmem>>, vector<8x32xf32>
    %c0_82 = arith.constant 0 : index
    %c0_83 = arith.constant 0 : index
    %88 = vector.load %arg29[%c0_82, %c0_83] : memref<2x32xf32, #tpu.memory_space<vmem>>, vector<2x32xf32>
    %c0_84 = arith.constant 0 : index
    %c0_85 = arith.constant 0 : index
    %89 = vector.load %arg30[%c0_84, %c0_85] : memref<8x32xf32, #tpu.memory_space<vmem>>, vector<8x32xf32>
    %c0_86 = arith.constant 0 : index
    %c0_87 = arith.constant 0 : index
    %90 = vector.load %arg31[%c0_86, %c0_87] : memref<8x32xf32, #tpu.memory_space<vmem>>, vector<8x32xf32>
    %c0_88 = arith.constant 0 : index
    %c0_89 = arith.constant 0 : index
    %91 = vector.load %arg32[%c0_88, %c0_89] : memref<1x32xf32, #tpu.memory_space<vmem>>, vector<1x32xf32>
    %c0_90 = arith.constant 0 : index
    %c0_91 = arith.constant 0 : index
    %92 = vector.load %arg33[%c0_90, %c0_91] : memref<32x8xf32, #tpu.memory_space<vmem>>, vector<32x8xf32>
    %c0_92 = arith.constant 0 : index
    %c0_93 = arith.constant 0 : index
    %93 = vector.load %arg34[%c0_92, %c0_93] : memref<1x8xf32, #tpu.memory_space<vmem>>, vector<1x8xf32>
    %c0_94 = arith.constant 0 : index
    %c0_95 = arith.constant 0 : index
    %94 = vector.load %arg35[%c0_94, %c0_95] : memref<8x32xf32, #tpu.memory_space<vmem>>, vector<8x32xf32>
    %c0_96 = arith.constant 0 : index
    %c0_97 = arith.constant 0 : index
    %95 = vector.load %arg36[%c0_96, %c0_97] : memref<2x32xf32, #tpu.memory_space<vmem>>, vector<2x32xf32>
    %c0_98 = arith.constant 0 : index
    %c0_99 = arith.constant 0 : index
    %96 = vector.load %arg37[%c0_98, %c0_99] : memref<8x32xf32, #tpu.memory_space<vmem>>, vector<8x32xf32>
    %c0_100 = arith.constant 0 : index
    %c0_101 = arith.constant 0 : index
    %97 = vector.load %arg38[%c0_100, %c0_101] : memref<8x32xf32, #tpu.memory_space<vmem>>, vector<8x32xf32>
    %c0_102 = arith.constant 0 : index
    %c0_103 = arith.constant 0 : index
    %98 = vector.load %arg39[%c0_102, %c0_103] : memref<1x32xf32, #tpu.memory_space<vmem>>, vector<1x32xf32>
    %c0_104 = arith.constant 0 : index
    %c0_105 = arith.constant 0 : index
    %99 = vector.load %arg40[%c0_104, %c0_105] : memref<32x8xf32, #tpu.memory_space<vmem>>, vector<32x8xf32>
    %c0_106 = arith.constant 0 : index
    %c0_107 = arith.constant 0 : index
    %100 = vector.load %arg41[%c0_106, %c0_107] : memref<1x8xf32, #tpu.memory_space<vmem>>, vector<1x8xf32>
    %cst_108 = arith.constant dense<0.000000e+00> : vector<16x32xf32>
    %101 = tpu.matmul %57, %90, %cst_108 {dimension_numbers = #tpu.dot_dimension_numbers<[1], [0], [0], [1], [0, 0, 1, 1], [], []>} : vector<16x8xf32>, vector<8x32xf32>, vector<16x32xf32> -> vector<16x32xf32>
    %102 = vector.broadcast %91 : vector<1x32xf32> to vector<16x32xf32>
    %103 = arith.addf %101, %102 : vector<16x32xf32>
    %cst_109 = arith.constant dense<0.000000e+00> : vector<16x8xf32>
    %104 = tpu.matmul %0, %58, %cst_109 {dimension_numbers = #tpu.dot_dimension_numbers<[1], [0], [0], [1], [0, 0, 1, 1], [], []>} : vector<16x8xf32>, vector<8x8xf32>, vector<16x8xf32> -> vector<16x8xf32>
    %cst_110 = arith.constant dense<0.000000e+00> : vector<16x8xf32>
    %105 = tpu.matmul %1, %58, %cst_110 {dimension_numbers = #tpu.dot_dimension_numbers<[1], [0], [0], [1], [0, 0, 1, 1], [], []>} : vector<16x8xf32>, vector<8x8xf32>, vector<16x8xf32> -> vector<16x8xf32>
    %106 = arith.addf %104, %105 : vector<16x8xf32>
    %cst_111 = arith.constant 5.000000e-01 : f32
    %107 = vector.broadcast %cst_111 : f32 to vector<16x8xf32>
    %108 = arith.mulf %106, %107 : vector<16x8xf32>
    %cst_112 = arith.constant dense<0.000000e+00> : vector<16x32xf32>
    %109 = tpu.matmul %108, %84, %cst_112 {dimension_numbers = #tpu.dot_dimension_numbers<[1], [0], [0], [1], [0, 0, 1, 1], [], []>} : vector<16x8xf32>, vector<8x32xf32>, vector<16x32xf32> -> vector<16x32xf32>
    %110 = arith.addf %103, %109 : vector<16x32xf32>
    %111 = arith.subf %104, %105 : vector<16x8xf32>
    %112 = math.absf %111 : vector<16x8xf32>
    %cst_113 = arith.constant 5.000000e-01 : f32
    %113 = vector.broadcast %cst_113 : f32 to vector<16x8xf32>
    %114 = arith.mulf %112, %113 : vector<16x8xf32>
    %cst_114 = arith.constant dense<0.000000e+00> : vector<16x32xf32>
    %115 = tpu.matmul %114, %87, %cst_114 {dimension_numbers = #tpu.dot_dimension_numbers<[1], [0], [0], [1], [0, 0, 1, 1], [], []>} : vector<16x8xf32>, vector<8x32xf32>, vector<16x32xf32> -> vector<16x32xf32>
    %116 = arith.addf %110, %115 : vector<16x32xf32>
    %cst_115 = arith.constant dense<0.000000e+00> : vector<16x2xf32>
    %117 = tpu.matmul %0, %5, %cst_115 {dimension_numbers = #tpu.dot_dimension_numbers<[1], [0], [0], [1], [0, 0, 1, 1], [], []>} : vector<16x8xf32>, vector<8x2xf32>, vector<16x2xf32> -> vector<16x2xf32>
    %cst_116 = arith.constant dense<0.000000e+00> : vector<16x2xf32>
    %118 = tpu.matmul %1, %5, %cst_116 {dimension_numbers = #tpu.dot_dimension_numbers<[1], [0], [0], [1], [0, 0, 1, 1], [], []>} : vector<16x8xf32>, vector<8x2xf32>, vector<16x2xf32> -> vector<16x2xf32>
    %119 = arith.addf %117, %118 : vector<16x2xf32>
    %cst_117 = arith.constant 5.000000e-01 : f32
    %120 = vector.broadcast %cst_117 : f32 to vector<16x2xf32>
    %121 = arith.mulf %119, %120 : vector<16x2xf32>
    %cst_118 = arith.constant dense<0.000000e+00> : vector<16x32xf32>
    %122 = tpu.matmul %121, %85, %cst_118 {dimension_numbers = #tpu.dot_dimension_numbers<[1], [0], [0], [1], [0, 0, 1, 1], [], []>} : vector<16x2xf32>, vector<2x32xf32>, vector<16x32xf32> -> vector<16x32xf32>
    %123 = arith.addf %116, %122 : vector<16x32xf32>
    %124 = arith.subf %117, %118 : vector<16x2xf32>
    %125 = math.absf %124 : vector<16x2xf32>
    %cst_119 = arith.constant 5.000000e-01 : f32
    %126 = vector.broadcast %cst_119 : f32 to vector<16x2xf32>
    %127 = arith.mulf %125, %126 : vector<16x2xf32>
    %cst_120 = arith.constant dense<0.000000e+00> : vector<16x32xf32>
    %128 = tpu.matmul %127, %88, %cst_120 {dimension_numbers = #tpu.dot_dimension_numbers<[1], [0], [0], [1], [0, 0, 1, 1], [], []>} : vector<16x2xf32>, vector<2x32xf32>, vector<16x32xf32> -> vector<16x32xf32>
    %129 = arith.addf %123, %128 : vector<16x32xf32>
    %cst_121 = arith.constant dense<0.000000e+00> : vector<16x8xf32>
    %130 = tpu.matmul %0, %83, %cst_121 {dimension_numbers = #tpu.dot_dimension_numbers<[1], [0], [0], [1], [0, 0, 1, 1], [], []>} : vector<16x8xf32>, vector<8x8xf32>, vector<16x8xf32> -> vector<16x8xf32>
    %cst_122 = arith.constant dense<0.000000e+00> : vector<16x8xf32>
    %131 = tpu.matmul %1, %83, %cst_122 {dimension_numbers = #tpu.dot_dimension_numbers<[1], [0], [0], [1], [0, 0, 1, 1], [], []>} : vector<16x8xf32>, vector<8x8xf32>, vector<16x8xf32> -> vector<16x8xf32>
    %132 = arith.addf %130, %131 : vector<16x8xf32>
    %cst_123 = arith.constant 5.000000e-01 : f32
    %133 = vector.broadcast %cst_123 : f32 to vector<16x8xf32>
    %134 = arith.mulf %132, %133 : vector<16x8xf32>
    %cst_124 = arith.constant dense<0.000000e+00> : vector<16x32xf32>
    %135 = tpu.matmul %134, %86, %cst_124 {dimension_numbers = #tpu.dot_dimension_numbers<[1], [0], [0], [1], [0, 0, 1, 1], [], []>} : vector<16x8xf32>, vector<8x32xf32>, vector<16x32xf32> -> vector<16x32xf32>
    %136 = arith.addf %129, %135 : vector<16x32xf32>
    %137 = arith.subf %130, %131 : vector<16x8xf32>
    %138 = math.absf %137 : vector<16x8xf32>
    %cst_125 = arith.constant 5.000000e-01 : f32
    %139 = vector.broadcast %cst_125 : f32 to vector<16x8xf32>
    %140 = arith.mulf %138, %139 : vector<16x8xf32>
    %cst_126 = arith.constant dense<0.000000e+00> : vector<16x32xf32>
    %141 = tpu.matmul %140, %89, %cst_126 {dimension_numbers = #tpu.dot_dimension_numbers<[1], [0], [0], [1], [0, 0, 1, 1], [], []>} : vector<16x8xf32>, vector<8x32xf32>, vector<16x32xf32> -> vector<16x32xf32>
    %142 = arith.addf %136, %141 : vector<16x32xf32>
    %cst_127 = arith.constant 0.000000e+00 : f32
    %143 = vector.broadcast %cst_127 : f32 to vector<16x32xf32>
    %144 = arith.maximumf %142, %143 : vector<16x32xf32>
    %cst_128 = arith.constant dense<0.000000e+00> : vector<16x8xf32>
    %145 = tpu.matmul %144, %92, %cst_128 {dimension_numbers = #tpu.dot_dimension_numbers<[1], [0], [0], [1], [0, 0, 1, 1], [], []>} : vector<16x32xf32>, vector<32x8xf32>, vector<16x8xf32> -> vector<16x8xf32>
    %146 = vector.broadcast %93 : vector<1x8xf32> to vector<16x8xf32>
    %147 = arith.addf %145, %146 : vector<16x8xf32>
    %cst_129 = arith.constant dense<0.000000e+00> : vector<8x8xf32>
    %148 = tpu.matmul %2, %147, %cst_129 {dimension_numbers = #tpu.dot_dimension_numbers<[1], [0], [0], [1], [0, 0, 1, 1], [], []>} : vector<8x16xf32>, vector<16x8xf32>, vector<8x8xf32> -> vector<8x8xf32>
    %cst_130 = arith.constant dense<0.000000e+00> : vector<8x32xf32>
    %149 = tpu.matmul %148, %97, %cst_130 {dimension_numbers = #tpu.dot_dimension_numbers<[1], [0], [0], [1], [0, 0, 1, 1], [], []>} : vector<8x8xf32>, vector<8x32xf32>, vector<8x32xf32> -> vector<8x32xf32>
    %150 = vector.broadcast %98 : vector<1x32xf32> to vector<8x32xf32>
    %151 = arith.addf %149, %150 : vector<8x32xf32>
    %cst_131 = arith.constant dense<0.000000e+00> : vector<8x32xf32>
    %152 = tpu.matmul %58, %94, %cst_131 {dimension_numbers = #tpu.dot_dimension_numbers<[1], [0], [0], [1], [0, 0, 1, 1], [], []>} : vector<8x8xf32>, vector<8x32xf32>, vector<8x32xf32> -> vector<8x32xf32>
    %153 = arith.addf %151, %152 : vector<8x32xf32>
    %cst_132 = arith.constant dense<0.000000e+00> : vector<8x32xf32>
    %154 = tpu.matmul %5, %95, %cst_132 {dimension_numbers = #tpu.dot_dimension_numbers<[1], [0], [0], [1], [0, 0, 1, 1], [], []>} : vector<8x2xf32>, vector<2x32xf32>, vector<8x32xf32> -> vector<8x32xf32>
    %155 = arith.addf %153, %154 : vector<8x32xf32>
    %cst_133 = arith.constant dense<0.000000e+00> : vector<8x32xf32>
    %156 = tpu.matmul %83, %96, %cst_133 {dimension_numbers = #tpu.dot_dimension_numbers<[1], [0], [0], [1], [0, 0, 1, 1], [], []>} : vector<8x8xf32>, vector<8x32xf32>, vector<8x32xf32> -> vector<8x32xf32>
    %157 = arith.addf %155, %156 : vector<8x32xf32>
    %cst_134 = arith.constant 0.000000e+00 : f32
    %158 = vector.broadcast %cst_134 : f32 to vector<8x32xf32>
    %159 = arith.maximumf %157, %158 : vector<8x32xf32>
    %cst_135 = arith.constant dense<0.000000e+00> : vector<8x8xf32>
    %160 = tpu.matmul %159, %99, %cst_135 {dimension_numbers = #tpu.dot_dimension_numbers<[1], [0], [0], [1], [0, 0, 1, 1], [], []>} : vector<8x32xf32>, vector<32x8xf32>, vector<8x8xf32> -> vector<8x8xf32>
    %161 = vector.broadcast %100 : vector<1x8xf32> to vector<8x8xf32>
    %162 = arith.addf %160, %161 : vector<8x8xf32>
    %cst_136 = arith.constant 0.000000e+00 : f32
    %163 = vector.broadcast %cst_136 : f32 to vector<8x8xf32>
    %164 = arith.maximumf %162, %163 : vector<8x8xf32>
    %cst_137 = arith.constant dense<0.000000e+00> : vector<16x8xf32>
    %165 = tpu.matmul %0, %164, %cst_137 {dimension_numbers = #tpu.dot_dimension_numbers<[1], [0], [0], [1], [0, 0, 1, 1], [], []>} : vector<16x8xf32>, vector<8x8xf32>, vector<16x8xf32> -> vector<16x8xf32>
    %cst_138 = arith.constant dense<0.000000e+00> : vector<16x8xf32>
    %166 = tpu.matmul %1, %164, %cst_138 {dimension_numbers = #tpu.dot_dimension_numbers<[1], [0], [0], [1], [0, 0, 1, 1], [], []>} : vector<16x8xf32>, vector<8x8xf32>, vector<16x8xf32> -> vector<16x8xf32>
    %167 = arith.addf %165, %166 : vector<16x8xf32>
    %cst_139 = arith.constant 5.000000e-01 : f32
    %168 = vector.broadcast %cst_139 : f32 to vector<16x8xf32>
    %169 = arith.mulf %167, %168 : vector<16x8xf32>
    %cst_140 = arith.constant dense<0.000000e+00> : vector<8x8xf32>
    %170 = tpu.matmul %3, %169, %cst_140 {dimension_numbers = #tpu.dot_dimension_numbers<[1], [0], [0], [1], [0, 0, 1, 1], [], []>} : vector<8x16xf32>, vector<16x8xf32>, vector<8x8xf32> -> vector<8x8xf32>
    %c0_141 = arith.constant 0 : index
    %c0_142 = arith.constant 0 : index
    %171 = vector.load %arg42[%c0_141, %c0_142] : memref<4x24xf32, #tpu.memory_space<vmem>>, vector<4x24xf32>
    %c0_143 = arith.constant 0 : index
    %c0_144 = arith.constant 0 : index
    %172 = vector.load %arg43[%c0_143, %c0_144] : memref<8x24xf32, #tpu.memory_space<vmem>>, vector<8x24xf32>
    %cst_145 = arith.constant dense<0.000000e+00> : vector<8x24xf32>
    %173 = tpu.matmul %7, %171, %cst_145 {dimension_numbers = #tpu.dot_dimension_numbers<[1], [0], [0], [1], [0, 0, 1, 1], [], []>} : vector<8x4xf32>, vector<4x24xf32>, vector<8x24xf32> -> vector<8x24xf32>
    %cst_146 = arith.constant dense<0.000000e+00> : vector<8x24xf32>
    %174 = tpu.matmul %83, %172, %cst_146 {dimension_numbers = #tpu.dot_dimension_numbers<[1], [0], [0], [1], [0, 0, 1, 1], [], []>} : vector<8x8xf32>, vector<8x24xf32>, vector<8x24xf32> -> vector<8x24xf32>
    %175 = arith.addf %173, %174 : vector<8x24xf32>
    %c0_147 = arith.constant 0 : index
    %c0_148 = arith.constant 0 : index
    %176 = vector.load %arg44[%c0_147, %c0_148] : memref<1x24xf32, #tpu.memory_space<vmem>>, vector<1x24xf32>
    %c0_149 = arith.constant 0 : index
    %c0_150 = arith.constant 0 : index
    %177 = vector.load %arg45[%c0_149, %c0_150] : memref<24x64xf32, #tpu.memory_space<vmem>>, vector<24x64xf32>
    %c0_151 = arith.constant 0 : index
    %c0_152 = arith.constant 0 : index
    %178 = vector.load %arg46[%c0_151, %c0_152] : memref<1x64xf32, #tpu.memory_space<vmem>>, vector<1x64xf32>
    %c0_153 = arith.constant 0 : index
    %c0_154 = arith.constant 0 : index
    %179 = vector.load %arg47[%c0_153, %c0_154] : memref<64x8xf32, #tpu.memory_space<vmem>>, vector<64x8xf32>
    %c0_155 = arith.constant 0 : index
    %c0_156 = arith.constant 0 : index
    %180 = vector.load %arg48[%c0_155, %c0_156] : memref<1x8xf32, #tpu.memory_space<vmem>>, vector<1x8xf32>
    %181 = vector.broadcast %176 : vector<1x24xf32> to vector<8x24xf32>
    %182 = arith.addf %175, %181 : vector<8x24xf32>
    %cst_157 = arith.constant 0.000000e+00 : f32
    %183 = vector.broadcast %cst_157 : f32 to vector<8x24xf32>
    %184 = arith.cmpf ogt, %182, %183 : vector<8x24xf32>
    %cst_158 = arith.constant 0.00999999977 : f32
    %185 = vector.broadcast %cst_158 : f32 to vector<8x24xf32>
    %186 = arith.mulf %185, %182 : vector<8x24xf32>
    %187 = arith.select %184, %182, %186 : vector<8x24xi1>, vector<8x24xf32>
    %cst_159 = arith.constant dense<0.000000e+00> : vector<8x64xf32>
    %188 = tpu.matmul %187, %177, %cst_159 {dimension_numbers = #tpu.dot_dimension_numbers<[1], [0], [0], [1], [0, 0, 1, 1], [], []>} : vector<8x24xf32>, vector<24x64xf32>, vector<8x64xf32> -> vector<8x64xf32>
    %189 = vector.broadcast %178 : vector<1x64xf32> to vector<8x64xf32>
    %190 = arith.addf %188, %189 : vector<8x64xf32>
    %cst_160 = arith.constant 0.000000e+00 : f32
    %191 = vector.broadcast %cst_160 : f32 to vector<8x64xf32>
    %192 = arith.cmpf ogt, %190, %191 : vector<8x64xf32>
    %cst_161 = arith.constant 0.00999999977 : f32
    %193 = vector.broadcast %cst_161 : f32 to vector<8x64xf32>
    %194 = arith.mulf %193, %190 : vector<8x64xf32>
    %195 = arith.select %192, %190, %194 : vector<8x64xi1>, vector<8x64xf32>
    %cst_162 = arith.constant dense<0.000000e+00> : vector<8x8xf32>
    %196 = tpu.matmul %195, %179, %cst_162 {dimension_numbers = #tpu.dot_dimension_numbers<[1], [0], [0], [1], [0, 0, 1, 1], [], []>} : vector<8x64xf32>, vector<64x8xf32>, vector<8x8xf32> -> vector<8x8xf32>
    %197 = vector.broadcast %180 : vector<1x8xf32> to vector<8x8xf32>
    %198 = arith.addf %196, %197 : vector<8x8xf32>
    %c0_163 = arith.constant 0 : index
    %c0_164 = arith.constant 0 : index
    %199 = vector.load %arg49[%c0_163, %c0_164] : memref<8x3xf32, #tpu.memory_space<vmem>>, vector<8x3xf32>
    %c0_165 = arith.constant 0 : index
    %c0_166 = arith.constant 0 : index
    %200 = vector.load %arg50[%c0_165, %c0_166] : memref<2x3xf32, #tpu.memory_space<vmem>>, vector<2x3xf32>
    %c0_167 = arith.constant 0 : index
    %c0_168 = arith.constant 0 : index
    %201 = vector.load %arg51[%c0_167, %c0_168] : memref<8x3xf32, #tpu.memory_space<vmem>>, vector<8x3xf32>
    %c0_169 = arith.constant 0 : index
    %c0_170 = arith.constant 0 : index
    %202 = vector.load %arg52[%c0_169, %c0_170] : memref<1x3xf32, #tpu.memory_space<vmem>>, vector<1x3xf32>
    %cst_171 = arith.constant dense<0.000000e+00> : vector<8x3xf32>
    %203 = tpu.matmul %170, %199, %cst_171 {dimension_numbers = #tpu.dot_dimension_numbers<[1], [0], [0], [1], [0, 0, 1, 1], [], []>} : vector<8x8xf32>, vector<8x3xf32>, vector<8x3xf32> -> vector<8x3xf32>
    %204 = vector.broadcast %202 : vector<1x3xf32> to vector<8x3xf32>
    %205 = arith.addf %204, %203 : vector<8x3xf32>
    %cst_172 = arith.constant dense<0.000000e+00> : vector<8x3xf32>
    %206 = tpu.matmul %5, %200, %cst_172 {dimension_numbers = #tpu.dot_dimension_numbers<[1], [0], [0], [1], [0, 0, 1, 1], [], []>} : vector<8x2xf32>, vector<2x3xf32>, vector<8x3xf32> -> vector<8x3xf32>
    %207 = arith.addf %205, %206 : vector<8x3xf32>
    %cst_173 = arith.constant dense<0.000000e+00> : vector<8x3xf32>
    %208 = tpu.matmul %198, %201, %cst_173 {dimension_numbers = #tpu.dot_dimension_numbers<[1], [0], [0], [1], [0, 0, 1, 1], [], []>} : vector<8x8xf32>, vector<8x3xf32>, vector<8x3xf32> -> vector<8x3xf32>
    %209 = arith.addf %207, %208 : vector<8x3xf32>
    %c0_174 = arith.constant 0 : index
    %c0_175 = arith.constant 0 : index
    %210 = vector.load %arg53[%c0_174, %c0_175] : memref<8x3xf32, #tpu.memory_space<vmem>>, vector<8x3xf32>
    tpu.vector_store %arg53[%c0_174, %c0_175], %209 {strides = array<i32>} : memref<8x3xf32, #tpu.memory_space<vmem>>, vector<8x3xf32>,
    return
  }
}

</mosaic_0001>

<llo_original>
// kernel: tpu_custom_call.1
$region0: #{tpu_custom_call.1}
  #allocation0 [shape = 'u32[]', space=smem, size = 0x4, offset = 0x4, fixed_abs, tag = 'smem constant byte address 0x4 - core index']
  #allocation1 [shape = 'u32[144,128]{1,0:T(1,128)}', space=vmem, size = 0x12000, scoped, tag = 'internal scratch']
  %s0 = inlined_call_operand.smem [shape: u32[54], index: -1, kind: input, shape index: {}]
  %s1 = sld [smem:[%s0]]
  %s2 = scalar_lea.smem %s0, 1
  %s3 = sld [smem:[%s2]]
  %s4 = scalar_lea.smem %s0, 2
  %s5 = sld [smem:[%s4]]
  %s6 = scalar_lea.smem %s0, 3
  %s7 = sld [smem:[%s6]]
  %s8 = scalar_lea.smem %s0, 4
  %s9 = sld [smem:[%s8]]
  %s10 = scalar_lea.smem %s0, 5
  %s11 = sld [smem:[%s10]]
  %s12 = scalar_lea.smem %s0, 6
  %s13 = sld [smem:[%s12]]
  %s14 = scalar_lea.smem %s0, 7
  %s15 = sld [smem:[%s14]]
  %s16 = scalar_lea.smem %s0, 8
  %s17 = sld [smem:[%s16]]
  %s18 = scalar_lea.smem %s0, 9
  %s19 = sld [smem:[%s18]]
  %s20 = scalar_lea.smem %s0, 10
  %s21 = sld [smem:[%s20]]
  %s22 = scalar_lea.smem %s0, 11
  %s23 = sld [smem:[%s22]]
  %s24 = scalar_lea.smem %s0, 12
  %s25 = sld [smem:[%s24]]
  %s26 = scalar_lea.smem %s0, 13
  %s27 = sld [smem:[%s26]]
  %s28 = scalar_lea.smem %s0, 14
  %s29 = sld [smem:[%s28]]
  %s30 = scalar_lea.smem %s0, 15
  %s31 = sld [smem:[%s30]]
  %s32 = scalar_lea.smem %s0, 16
  %s33 = sld [smem:[%s32]]
  %s34 = scalar_lea.smem %s0, 17
  %s35 = sld [smem:[%s34]]
  %s36 = scalar_lea.smem %s0, 18
  %s37 = sld [smem:[%s36]]
  %s38 = scalar_lea.smem %s0, 19
  %s39 = sld [smem:[%s38]]
  %s40 = scalar_lea.smem %s0, 20
  %s41 = sld [smem:[%s40]]
  %s42 = scalar_lea.smem %s0, 21
  %s43 = sld [smem:[%s42]]
  %s44 = scalar_lea.smem %s0, 22
  %s45 = sld [smem:[%s44]]
  %s46 = scalar_lea.smem %s0, 23
  %s47 = sld [smem:[%s46]]
  %s48 = scalar_lea.smem %s0, 24
  %s49 = sld [smem:[%s48]]
  %s50 = scalar_lea.smem %s0, 25
  %s51 = sld [smem:[%s50]]
  %s52 = scalar_lea.smem %s0, 26
  %s53 = sld [smem:[%s52]]
  %s54 = scalar_lea.smem %s0, 27
  %s55 = sld [smem:[%s54]]
  %s56 = scalar_lea.smem %s0, 28
  %s57 = sld [smem:[%s56]]
  %s58 = scalar_lea.smem %s0, 29
  %s59 = sld [smem:[%s58]]
  %s60 = scalar_lea.smem %s0, 30
  %s61 = sld [smem:[%s60]]
  %s62 = scalar_lea.smem %s0, 31
  %s63 = sld [smem:[%s62]]
  %s64 = scalar_lea.smem %s0, 32
  %s65 = sld [smem:[%s64]]
  %s66 = scalar_lea.smem %s0, 33
  %s67 = sld [smem:[%s66]]
  %s68 = scalar_lea.smem %s0, 34
  %s69 = sld [smem:[%s68]]
  %s70 = scalar_lea.smem %s0, 35
  %s71 = sld [smem:[%s70]]
  %s72 = scalar_lea.smem %s0, 36
  %s73 = sld [smem:[%s72]]
  %s74 = scalar_lea.smem %s0, 37
  %s75 = sld [smem:[%s74]]
  %s76 = scalar_lea.smem %s0, 38
  %s77 = sld [smem:[%s76]]
  %s78 = scalar_lea.smem %s0, 39
  %s79 = sld [smem:[%s78]]
  %s80 = scalar_lea.smem %s0, 40
  %s81 = sld [smem:[%s80]]
  %s82 = scalar_lea.smem %s0, 41
  %s83 = sld [smem:[%s82]]
  %s84 = scalar_lea.smem %s0, 42
  %s85 = sld [smem:[%s84]]
  %s86 = scalar_lea.smem %s0, 43
  %s87 = sld [smem:[%s86]]
  %s88 = scalar_lea.smem %s0, 44
  %s89 = sld [smem:[%s88]]
  %s90 = scalar_lea.smem %s0, 45
  %s91 = sld [smem:[%s90]]
  %s92 = scalar_lea.smem %s0, 46
  %s93 = sld [smem:[%s92]]
  %s94 = scalar_lea.smem %s0, 47
  %s95 = sld [smem:[%s94]]
  %s96 = scalar_lea.smem %s0, 48
  %s97 = sld [smem:[%s96]]
  %s98 = scalar_lea.smem %s0, 49
  %s99 = sld [smem:[%s98]]
  %s100 = scalar_lea.smem %s0, 50
  %s101 = sld [smem:[%s100]]
  %s102 = scalar_lea.smem %s0, 51
  %s103 = sld [smem:[%s102]]
  %s104 = scalar_lea.smem %s0, 52
  %s105 = sld [smem:[%s104]]
  %s106 = scalar_lea.smem %s0, 53
  %s107 = sld [smem:[%s106]]
  %s108 = sld [smem:[#allocation0]]
  $region238: #{tpu_custom_call.1} parent=0
    _
  %s110 = ssub.s32 1, %s108
  %s111 = scalar_select 0, %s110, %s108
  $region1: #{tpu_custom_call.1} parent=0
    #allocation2 [shape = 'u8[512]{0}', space=vmem, size = 0x400, scoped, tag = 'input window, operand 44, single buffered']
    #allocation3 [shape = 's32[1]{0}', space=sflag, size = 0x4, scoped, tag = 'scoped memory for tpu_custom_call.1']
    #allocation4 [shape = 'u8[512]{0}', space=vmem, size = 0x400, scoped, tag = 'input window, operand 46, single buffered']
    #allocation5 [shape = 's32[1]{0}', space=sflag, size = 0x4, scoped, tag = 'scoped memory for tpu_custom_call.1']
    #allocation6 [shape = 'u8[512]{0}', space=vmem, size = 0x400, scoped, tag = 'input window, operand 48, single buffered']
    #allocation7 [shape = 'u8[512]{0}', space=vmem, size = 0x400, scoped, tag = 'input window, operand 52, single buffered']
    #allocation8 [shape = 's32[1]{0}', space=sflag, size = 0x4, scoped, tag = 'scoped memory for tpu_custom_call.1']
    %112 = vsyncpa [#allocation3], 0
    %113 = vsyncpa [#allocation5], 0
    %114 = vsyncpa [#allocation8], 0
    // Predicated region
    $region2: #{tpu_custom_call.1} parent=1 // pred_check
      _
    $region3: #{tpu_custom_call.1} parent=1 // pred_check_branch
      %116 = sbr.rel (0) target = $region5
    $region4: #{tpu_custom_call.1} parent=1 // pred_region
      _
    $region5: #{tpu_custom_call.1} parent=1 // pred_fallthru
      _
    // Predicated region
    $region6: #{tpu_custom_call.1} parent=1 // pred_check
      _
    $region7: #{tpu_custom_call.1} parent=1 // pred_check_branch
      %118 = sbr.rel (0) target = $region9
    $region8: #{tpu_custom_call.1} parent=1 // pred_region
      _
    $region9: #{tpu_custom_call.1} parent=1 // pred_fallthru
      _
    // Predicated region
    $region10: #{tpu_custom_call.1} parent=1 // pred_check
      _
    $region11: #{tpu_custom_call.1} parent=1 // pred_check_branch
      %120 = sbr.rel (0) target = $region13
    $region12: #{tpu_custom_call.1} parent=1 // pred_region
      _
    $region13: #{tpu_custom_call.1} parent=1 // pred_fallthru
      _
    // Predicated region
    $region14: #{tpu_custom_call.1} parent=1 // pred_check
      _
    $region15: #{tpu_custom_call.1} parent=1 // pred_check_branch
      %122 = sbr.rel (0) target = $region17
    $region16: #{tpu_custom_call.1} parent=1 // pred_region
      _
    $region17: #{tpu_custom_call.1} parent=1 // pred_fallthru
      _
    // Predicated region
    $region18: #{tpu_custom_call.1} parent=1 // pred_check
      _
    $region19: #{tpu_custom_call.1} parent=1 // pred_check_branch
      %124 = sbr.rel (0) target = $region21
    $region20: #{tpu_custom_call.1} parent=1 // pred_region
      _
    $region21: #{tpu_custom_call.1} parent=1 // pred_fallthru
      _
    // Predicated region
    $region22: #{tpu_custom_call.1} parent=1 // pred_check
      _
    $region23: #{tpu_custom_call.1} parent=1 // pred_check_branch
      %126 = sbr.rel (0) target = $region25
    $region24: #{tpu_custom_call.1} parent=1 // pred_region
      _
    $region25: #{tpu_custom_call.1} parent=1 // pred_fallthru
      _
    // Predicated region
    $region26: #{tpu_custom_call.1} parent=1 // pred_check
      _
    $region27: #{tpu_custom_call.1} parent=1 // pred_check_branch
      %128 = sbr.rel (0) target = $region29
    $region28: #{tpu_custom_call.1} parent=1 // pred_region
      _
    $region29: #{tpu_custom_call.1} parent=1 // pred_fallthru
      _
    // Predicated region
    $region30: #{tpu_custom_call.1} parent=1 // pred_check
      _
    $region31: #{tpu_custom_call.1} parent=1 // pred_check_branch
      %130 = sbr.rel (0) target = $region33
    $region32: #{tpu_custom_call.1} parent=1 // pred_region
      _
    $region33: #{tpu_custom_call.1} parent=1 // pred_fallthru
      _
    // Predicated region
    $region34: #{tpu_custom_call.1} parent=1 // pred_check
      _
    $region35: #{tpu_custom_call.1} parent=1 // pred_check_branch
      %132 = sbr.rel (0) target = $region37
    $region36: #{tpu_custom_call.1} parent=1 // pred_region
      _
    $region37: #{tpu_custom_call.1} parent=1 // pred_fallthru
      _
    // Predicated region
    $region38: #{tpu_custom_call.1} parent=1 // pred_check
      _
    $region39: #{tpu_custom_call.1} parent=1 // pred_check_branch
      %134 = sbr.rel (0) target = $region41
    $region40: #{tpu_custom_call.1} parent=1 // pred_region
      _
    $region41: #{tpu_custom_call.1} parent=1 // pred_fallthru
      _
    // Predicated region
    $region42: #{tpu_custom_call.1} parent=1 // pred_check
      _
    $region43: #{tpu_custom_call.1} parent=1 // pred_check_branch
      %136 = sbr.rel (0) target = $region45
    $region44: #{tpu_custom_call.1} parent=1 // pred_region
      _
    $region45: #{tpu_custom_call.1} parent=1 // pred_fallthru
      _
    // Predicated region
    $region46: #{tpu_custom_call.1} parent=1 // pred_check
      _
    $region47: #{tpu_custom_call.1} parent=1 // pred_check_branch
      %138 = sbr.rel (0) target = $region49
    $region48: #{tpu_custom_call.1} parent=1 // pred_region
      _
    $region49: #{tpu_custom_call.1} parent=1 // pred_fallthru
      _
    // Predicated region
    $region50: #{tpu_custom_call.1} parent=1 // pred_check
      _
    $region51: #{tpu_custom_call.1} parent=1 // pred_check_branch
      %140 = sbr.rel (0) target = $region53
    $region52: #{tpu_custom_call.1} parent=1 // pred_region
      _
    $region53: #{tpu_custom_call.1} parent=1 // pred_fallthru
      _
    // Predicated region
    $region54: #{tpu_custom_call.1} parent=1 // pred_check
      _
    $region55: #{tpu_custom_call.1} parent=1 // pred_check_branch
      %142 = sbr.rel (0) target = $region57
    $region56: #{tpu_custom_call.1} parent=1 // pred_region
      _
    $region57: #{tpu_custom_call.1} parent=1 // pred_fallthru
      _
    // Predicated region
    $region58: #{tpu_custom_call.1} parent=1 // pred_check
      _
    $region59: #{tpu_custom_call.1} parent=1 // pred_check_branch
      %144 = sbr.rel (0) target = $region61
    $region60: #{tpu_custom_call.1} parent=1 // pred_region
      _
    $region61: #{tpu_custom_call.1} parent=1 // pred_fallthru
      _
    // Predicated region
    $region62: #{tpu_custom_call.1} parent=1 // pred_check
      _
    $region63: #{tpu_custom_call.1} parent=1 // pred_check_branch
      %146 = sbr.rel (0) target = $region65
    $region64: #{tpu_custom_call.1} parent=1 // pred_region
      _
    $region65: #{tpu_custom_call.1} parent=1 // pred_fallthru
      _
    // Predicated region
    $region66: #{tpu_custom_call.1} parent=1 // pred_check
      _
    $region67: #{tpu_custom_call.1} parent=1 // pred_check_branch
      %148 = sbr.rel (0) target = $region69
    $region68: #{tpu_custom_call.1} parent=1 // pred_region
      _
    $region69: #{tpu_custom_call.1} parent=1 // pred_fallthru
      _
    // Predicated region
    $region70: #{tpu_custom_call.1} parent=1 // pred_check
      _
    $region71: #{tpu_custom_call.1} parent=1 // pred_check_branch
      %150 = sbr.rel (0) target = $region73
    $region72: #{tpu_custom_call.1} parent=1 // pred_region
      _
    $region73: #{tpu_custom_call.1} parent=1 // pred_fallthru
      _
    // Predicated region
    $region74: #{tpu_custom_call.1} parent=1 // pred_check
      _
    $region75: #{tpu_custom_call.1} parent=1 // pred_check_branch
      %152 = sbr.rel (0) target = $region77
    $region76: #{tpu_custom_call.1} parent=1 // pred_region
      _
    $region77: #{tpu_custom_call.1} parent=1 // pred_fallthru
      _
    // Predicated region
    $region78: #{tpu_custom_call.1} parent=1 // pred_check
      _
    $region79: #{tpu_custom_call.1} parent=1 // pred_check_branch
      %154 = sbr.rel (0) target = $region81
    $region80: #{tpu_custom_call.1} parent=1 // pred_region
      _
    $region81: #{tpu_custom_call.1} parent=1 // pred_fallthru
      _
    // Predicated region
    $region82: #{tpu_custom_call.1} parent=1 // pred_check
      _
    $region83: #{tpu_custom_call.1} parent=1 // pred_check_branch
      %156 = sbr.rel (0) target = $region85
    $region84: #{tpu_custom_call.1} parent=1 // pred_region
      _
    $region85: #{tpu_custom_call.1} parent=1 // pred_fallthru
      _
    // Predicated region
    $region86: #{tpu_custom_call.1} parent=1 // pred_check
      _
    $region87: #{tpu_custom_call.1} parent=1 // pred_check_branch
      %158 = sbr.rel (0) target = $region89
    $region88: #{tpu_custom_call.1} parent=1 // pred_region
      _
    $region89: #{tpu_custom_call.1} parent=1 // pred_fallthru
      _
    // Predicated region
    $region90: #{tpu_custom_call.1} parent=1 // pred_check
      _
    $region91: #{tpu_custom_call.1} parent=1 // pred_check_branch
      %160 = sbr.rel (0) target = $region93
    $region92: #{tpu_custom_call.1} parent=1 // pred_region
      _
    $region93: #{tpu_custom_call.1} parent=1 // pred_fallthru
      _
    // Predicated region
    $region94: #{tpu_custom_call.1} parent=1 // pred_check
      _
    $region95: #{tpu_custom_call.1} parent=1 // pred_check_branch
      %162 = sbr.rel (0) target = $region97
    $region96: #{tpu_custom_call.1} parent=1 // pred_region
      _
    $region97: #{tpu_custom_call.1} parent=1 // pred_fallthru
      _
    // Predicated region
    $region98: #{tpu_custom_call.1} parent=1 // pred_check
      _
    $region99: #{tpu_custom_call.1} parent=1 // pred_check_branch
      %164 = sbr.rel (0) target = $region101
    $region100: #{tpu_custom_call.1} parent=1 // pred_region
      _
    $region101: #{tpu_custom_call.1} parent=1 // pred_fallthru
      _
    // Predicated region
    $region102: #{tpu_custom_call.1} parent=1 // pred_check
      _
    $region103: #{tpu_custom_call.1} parent=1 // pred_check_branch
      %166 = sbr.rel (0) target = $region105
    $region104: #{tpu_custom_call.1} parent=1 // pred_region
      _
    $region105: #{tpu_custom_call.1} parent=1 // pred_fallthru
      _
    // Predicated region
    $region106: #{tpu_custom_call.1} parent=1 // pred_check
      _
    $region107: #{tpu_custom_call.1} parent=1 // pred_check_branch
      %168 = sbr.rel (0) target = $region109
    $region108: #{tpu_custom_call.1} parent=1 // pred_region
      _
    $region109: #{tpu_custom_call.1} parent=1 // pred_fallthru
      _
    // Predicated region
    $region110: #{tpu_custom_call.1} parent=1 // pred_check
      _
    $region111: #{tpu_custom_call.1} parent=1 // pred_check_branch
      %170 = sbr.rel (0) target = $region113
    $region112: #{tpu_custom_call.1} parent=1 // pred_region
      _
    $region113: #{tpu_custom_call.1} parent=1 // pred_fallthru
      _
    // Predicated region
    $region114: #{tpu_custom_call.1} parent=1 // pred_check
      _
    $region115: #{tpu_custom_call.1} parent=1 // pred_check_branch
      %172 = sbr.rel (0) target = $region117
    $region116: #{tpu_custom_call.1} parent=1 // pred_region
      _
    $region117: #{tpu_custom_call.1} parent=1 // pred_fallthru
      _
    // Predicated region
    $region118: #{tpu_custom_call.1} parent=1 // pred_check
      _
    $region119: #{tpu_custom_call.1} parent=1 // pred_check_branch
      %174 = sbr.rel (0) target = $region121
    $region120: #{tpu_custom_call.1} parent=1 // pred_region
      _
    $region121: #{tpu_custom_call.1} parent=1 // pred_fallthru
      _
    // Predicated region
    $region122: #{tpu_custom_call.1} parent=1 // pred_check
      _
    $region123: #{tpu_custom_call.1} parent=1 // pred_check_branch
      %176 = sbr.rel (0) target = $region125
    $region124: #{tpu_custom_call.1} parent=1 // pred_region
      _
    $region125: #{tpu_custom_call.1} parent=1 // pred_fallthru
      _
    // Predicated region
    $region126: #{tpu_custom_call.1} parent=1 // pred_check
      _
    $region127: #{tpu_custom_call.1} parent=1 // pred_check_branch
      %178 = sbr.rel (0) target = $region129
    $region128: #{tpu_custom_call.1} parent=1 // pred_region
      _
    $region129: #{tpu_custom_call.1} parent=1 // pred_fallthru
      _
    // Predicated region
    $region130: #{tpu_custom_call.1} parent=1 // pred_check
      _
    $region131: #{tpu_custom_call.1} parent=1 // pred_check_branch
      %180 = sbr.rel (0) target = $region133
    $region132: #{tpu_custom_call.1} parent=1 // pred_region
      _
    $region133: #{tpu_custom_call.1} parent=1 // pred_fallthru
      _
    // Predicated region
    $region134: #{tpu_custom_call.1} parent=1 // pred_check
      _
    $region135: #{tpu_custom_call.1} parent=1 // pred_check_branch
      %182 = sbr.rel (0) target = $region137
    $region136: #{tpu_custom_call.1} parent=1 // pred_region
      _
    $region137: #{tpu_custom_call.1} parent=1 // pred_fallthru
      _
    // Predicated region
    $region138: #{tpu_custom_call.1} parent=1 // pred_check
      _
    $region139: #{tpu_custom_call.1} parent=1 // pred_check_branch
      %184 = sbr.rel (0) target = $region141
    $region140: #{tpu_custom_call.1} parent=1 // pred_region
      _
    $region141: #{tpu_custom_call.1} parent=1 // pred_fallthru
      _
    // Predicated region
    $region142: #{tpu_custom_call.1} parent=1 // pred_check
      _
    $region143: #{tpu_custom_call.1} parent=1 // pred_check_branch
      %186 = sbr.rel (0) target = $region145
    $region144: #{tpu_custom_call.1} parent=1 // pred_region
      _
    $region145: #{tpu_custom_call.1} parent=1 // pred_fallthru
      _
    // Predicated region
    $region146: #{tpu_custom_call.1} parent=1 // pred_check
      _
    $region147: #{tpu_custom_call.1} parent=1 // pred_check_branch
      %188 = sbr.rel (0) target = $region149
    $region148: #{tpu_custom_call.1} parent=1 // pred_region
      _
    $region149: #{tpu_custom_call.1} parent=1 // pred_fallthru
      _
    // Predicated region
    $region150: #{tpu_custom_call.1} parent=1 // pred_check
      _
    $region151: #{tpu_custom_call.1} parent=1 // pred_check_branch
      %190 = sbr.rel (0) target = $region153
    $region152: #{tpu_custom_call.1} parent=1 // pred_region
      _
    $region153: #{tpu_custom_call.1} parent=1 // pred_fallthru
      _
    // Predicated region
    $region154: #{tpu_custom_call.1} parent=1 // pred_check
      _
    $region155: #{tpu_custom_call.1} parent=1 // pred_check_branch
      %192 = sbr.rel (0) target = $region157
    $region156: #{tpu_custom_call.1} parent=1 // pred_region
      _
    $region157: #{tpu_custom_call.1} parent=1 // pred_fallthru
      _
    // Predicated region
    $region158: #{tpu_custom_call.1} parent=1 // pred_check
      _
    $region159: #{tpu_custom_call.1} parent=1 // pred_check_branch
      %194 = sbr.rel (0) target = $region161
    $region160: #{tpu_custom_call.1} parent=1 // pred_region
      _
    $region161: #{tpu_custom_call.1} parent=1 // pred_fallthru
      _
    // Predicated region
    $region162: #{tpu_custom_call.1} parent=1 // pred_check
      _
    $region163: #{tpu_custom_call.1} parent=1 // pred_check_branch
      %196 = sbr.rel (0) target = $region165
    $region164: #{tpu_custom_call.1} parent=1 // pred_region
      _
    $region165: #{tpu_custom_call.1} parent=1 // pred_fallthru
      _
    // Predicated region
    $region166: #{tpu_custom_call.1} parent=1 // pred_check
      _
    $region167: #{tpu_custom_call.1} parent=1 // pred_check_branch
      %198 = sbr.rel (0) target = $region169
    $region168: #{tpu_custom_call.1} parent=1 // pred_region
      _
    $region169: #{tpu_custom_call.1} parent=1 // pred_fallthru
      _
    // Predicated region
    $region170: #{tpu_custom_call.1} parent=1 // pred_check
      _
    $region171: #{tpu_custom_call.1} parent=1 // pred_check_branch
      %200 = sbr.rel (0) target = $region173
    $region172: #{tpu_custom_call.1} parent=1 // pred_region
      _
    $region173: #{tpu_custom_call.1} parent=1 // pred_fallthru
      _
    // Predicated region
    $region174: #{tpu_custom_call.1} parent=1 // pred_check
      _
    $region175: #{tpu_custom_call.1} parent=1 // pred_check_branch
      %202 = sbr.rel (0) target = $region177
    $region176: #{tpu_custom_call.1} parent=1 // pred_region
      _
    $region177: #{tpu_custom_call.1} parent=1 // pred_fallthru
      _
    // Predicated region
    $region178: #{tpu_custom_call.1} parent=1 // pred_check
      _
    $region179: #{tpu_custom_call.1} parent=1 // pred_check_branch
      %204 = sbr.rel (0) target = $region181
    $region180: #{tpu_custom_call.1} parent=1 // pred_region
      %s206 = ssub.s32 16, 16
      %207 = vsyncadd [#allocation3], %s206
      %s209 = sshll.u32 [#allocation2], 4
      %s210 = int_to_ptr.vmem [resolvable:$true] %s209
      %212 = dma.hbm_to_vmem [thread:$0]  %s89, 16, %s210, [#allocation3]
    $region181: #{tpu_custom_call.1} parent=1 // pred_fallthru
      _
    // Predicated region
    $region182: #{tpu_custom_call.1} parent=1 // pred_check
      _
    $region183: #{tpu_custom_call.1} parent=1 // pred_check_branch
      %214 = sbr.rel (0) target = $region185
    $region184: #{tpu_custom_call.1} parent=1 // pred_region
      _
    $region185: #{tpu_custom_call.1} parent=1 // pred_fallthru
      _
    // Predicated region
    $region186: #{tpu_custom_call.1} parent=1 // pred_check
      _
    $region187: #{tpu_custom_call.1} parent=1 // pred_check_branch
      %216 = sbr.rel (0) target = $region189
    $region188: #{tpu_custom_call.1} parent=1 // pred_region
      %s218 = ssub.s32 16, 16
      %219 = vsyncadd [#allocation5], %s218
      %s221 = sshll.u32 [#allocation4], 4
      %s222 = int_to_ptr.vmem [resolvable:$true] %s221
      %224 = dma.hbm_to_vmem [thread:$0]  %s93, 16, %s222, [#allocation5]
    $region189: #{tpu_custom_call.1} parent=1 // pred_fallthru
      _
    // Predicated region
    $region190: #{tpu_custom_call.1} parent=1 // pred_check
      _
    $region191: #{tpu_custom_call.1} parent=1 // pred_check_branch
      %226 = sbr.rel (0) target = $region193
    $region192: #{tpu_custom_call.1} parent=1 // pred_region
      _
    $region193: #{tpu_custom_call.1} parent=1 // pred_fallthru
      _
    // Predicated region
    $region194: #{tpu_custom_call.1} parent=1 // pred_check
      _
    $region195: #{tpu_custom_call.1} parent=1 // pred_check_branch
      %228 = sbr.rel (0) target = $region197
    $region196: #{tpu_custom_call.1} parent=1 // pred_region
      %s230 = ssub.s32 16, 16
      %231 = vsyncadd [#allocation5], %s230
      %s233 = sshll.u32 [#allocation6], 4
      %s234 = int_to_ptr.vmem [resolvable:$true] %s233
      %236 = dma.hbm_to_vmem [thread:$0]  %s97, 16, %s234, [#allocation5]
    $region197: #{tpu_custom_call.1} parent=1 // pred_fallthru
      _
    // Predicated region
    $region198: #{tpu_custom_call.1} parent=1 // pred_check
      _
    $region199: #{tpu_custom_call.1} parent=1 // pred_check_branch
      %238 = sbr.rel (0) target = $region201
    $region200: #{tpu_custom_call.1} parent=1 // pred_region
      _
    $region201: #{tpu_custom_call.1} parent=1 // pred_fallthru
      _
    // Predicated region
    $region202: #{tpu_custom_call.1} parent=1 // pred_check
      _
    $region203: #{tpu_custom_call.1} parent=1 // pred_check_branch
      %240 = sbr.rel (0) target = $region205
    $region204: #{tpu_custom_call.1} parent=1 // pred_region
      _
    $region205: #{tpu_custom_call.1} parent=1 // pred_fallthru
      _
    // Predicated region
    $region206: #{tpu_custom_call.1} parent=1 // pred_check
      _
    $region207: #{tpu_custom_call.1} parent=1 // pred_check_branch
      %242 = sbr.rel (0) target = $region209
    $region208: #{tpu_custom_call.1} parent=1 // pred_region
      _
    $region209: #{tpu_custom_call.1} parent=1 // pred_fallthru
      _
    // Predicated region
    $region210: #{tpu_custom_call.1} parent=1 // pred_check
      _
    $region211: #{tpu_custom_call.1} parent=1 // pred_check_branch
      %244 = sbr.rel (0) target = $region213
    $region212: #{tpu_custom_call.1} parent=1 // pred_region
      %s246 = ssub.s32 16, 16
      %247 = vsyncadd [#allocation8], %s246
      %s249 = sshll.u32 [#allocation7], 4
      %s250 = int_to_ptr.vmem [resolvable:$true] %s249
      %252 = dma.hbm_to_vmem [thread:$0]  %s105, 16, %s250, [#allocation8]
    $region213: #{tpu_custom_call.1} parent=1 // pred_fallthru
      _
    // Predicated region
    $region214: #{tpu_custom_call.1} parent=1 // pred_check
      _
    $region215: #{tpu_custom_call.1} parent=1 // pred_check_branch
      %254 = sbr.rel (0) target = $region217
    $region216: #{tpu_custom_call.1} parent=1 // pred_region
      %255 = dma.done [#allocation3], 16
    $region217: #{tpu_custom_call.1} parent=1 // pred_fallthru
      _
    // Predicated region
    $region218: #{tpu_custom_call.1} parent=1 // pred_check
      _
    $region219: #{tpu_custom_call.1} parent=1 // pred_check_branch
      %257 = sbr.rel (0) target = $region221
    $region220: #{tpu_custom_call.1} parent=1 // pred_region
      %258 = dma.done [#allocation5], 16
    $region221: #{tpu_custom_call.1} parent=1 // pred_fallthru
      _
    // Predicated region
    $region222: #{tpu_custom_call.1} parent=1 // pred_check
      _
    $region223: #{tpu_custom_call.1} parent=1 // pred_check_branch
      %260 = sbr.rel (0) target = $region225
    $region224: #{tpu_custom_call.1} parent=1 // pred_region
      %261 = dma.done [#allocation5], 16
    $region225: #{tpu_custom_call.1} parent=1 // pred_fallthru
      _
    // Predicated region
    $region226: #{tpu_custom_call.1} parent=1 // pred_check
      _
    $region227: #{tpu_custom_call.1} parent=1 // pred_check_branch
      %263 = sbr.rel (0) target = $region229
    $region228: #{tpu_custom_call.1} parent=1 // pred_region
      %264 = dma.done [#allocation8], 16
    $region229: #{tpu_custom_call.1} parent=1 // pred_fallthru
      _
    %v265 = vld [vmem:[%s1] sm:$0xff]
    %v266 = vld [vmem:[%s1 + $0x8] sm:$0xff]
    %v267 = vld [vmem:[%s3] sm:$0xff]
    %v268 = vld [vmem:[%s3 + $0x8] sm:$0xff]
    %v269 = vld [vmem:[%s5] sm:$0xff]
    %v270 = vld [vmem:[%s7] sm:$0xff]
    %v271 = vld [vmem:[%s9] sm:$0xff]
    %v272 = vld [vmem:[%s11] sm:$0xff]
    %v273 = vld [vmem:[%s13] sm:$0xff]
    %v274 = vld [vmem:[%s13 + $0x8] sm:$0xff]
    %v275 = vld [vmem:[%s15] sm:$0xff]
    %v276 = vld [vmem:[%s17] sm:$0x7]
    %v277 = vld [vmem:[%s19] sm:$0x7]
    %v278 = vld [vmem:[%s21] sm:$0xf]
    %v279 = vld [vmem:[%s23] sm:$0x1]
    %v280 = vld [vmem:[%s25] sm:$0xff]
    %v281 = vld [vmem:[%s25 + $0x8] sm:$0xff]
    %v282 = vld [vmem:[%s25 + $0x10] sm:$0xff]
    %v283 = vld [vmem:[%s25 + $0x18] sm:$0xff]
    %v284 = vld [vmem:[%s27] sm:$0x1]
    %v285 = vld [vmem:[%s29] sm:$0x7]
    %v286 = vld [vmem:[%s31] sm:$0xff]
    %v287 = vld [vmem:[%s33] sm:$0x1]
    %v288 = vld [vmem:[%s35] sm:$0xff]
    %v289 = vld [vmem:[%s35 + $0x8] sm:$0xff]
    %v290 = vld [vmem:[%s35 + $0x10] sm:$0xff]
    %v291 = vld [vmem:[%s35 + $0x18] sm:$0xff]
    %v292 = vld [vmem:[%s37] sm:$0x1]
    %v294 = vlaneseq
    %v295 = vshrl.u32 %v294, 7
    %v296 = vsub.s32 0, %v295
    %v297 = vrot.slane %v279, %v296
    %vm299 = vcmask 31744
    %v301 = vsel %vm299, %v273, 0
    %v304 = vsel %vm299, %v274, 0
    %vm306 = vcmask 1043456
    %v308 = vsel %vm306, %v278, 0
    %310 = vmatprep.subr.mxu0 0.0
    %311 = vmatpush1.msra.mxu0 0.0
    %312 = vmatprep.subr.mxu0 0.0
    %313 = vmatpush1.msra.mxu0 0.0
    %314 = vmatprep.subr.mxu0 0.0
    %315 = vmatpush1.msra.mxu0 0.0
    %316 = vmatprep.subr.mxu0 0.0
    %317 = vmatpush1.msra.mxu0 0.0
    %318 = vmatprep.subr.mxu0 0.0
    %319 = vmatpush1.msra.mxu0 0.0
    %320 = vmatprep.subr.mxu0 0.0
    %321 = vmatpush1.msra.mxu0 0.0
    %322 = vmatprep.subr.mxu0 0.0
    %323 = vmatpush1.msra.mxu0 0.0
    %324 = vmatprep.subr.mxu0 0.0
    %325 = vmatpush1.msra.mxu0 0.0
    %326 = vmatprep.subr.mxu0 0.0
    %327 = vmatpush1.msra.mxu0 0.0
    %328 = vmatprep.subr.mxu0 0.0
    %329 = vmatpush1.msra.mxu0 0.0
    %330 = vmatprep.subr.mxu0 0.0
    %331 = vmatpush1.msra.mxu0 0.0
    %332 = vmatprep.subr.mxu0 0.0
    %333 = vmatpush1.msra.mxu0 0.0
    %334 = vmatprep.subr.mxu0 0.0
    %335 = vmatpush1.msra.mxu0 0.0
    %336 = vmatprep.subr.mxu0 0.0
    %337 = vmatpush1.msra.mxu0 0.0
    %338 = vmatprep.subr.mxu0 0.0
    %339 = vmatpush1.msra.mxu0 0.0
    %340 = vmatprep.subr.mxu0 0.0
    %341 = vmatpush1.msra.mxu0 %v308
    %342 = vmatprep.subr.mxu0 0.0
    %343 = vmatpush2.msra.mxu0 0.0
    %344 = vmatprep.subr.mxu0 0.0
    %345 = vmatpush2.msra.mxu0 0.0
    %346 = vmatprep.subr.mxu0 0.0
    %347 = vmatpush2.msra.mxu0 0.0
    %348 = vmatprep.subr.mxu0 0.0
    %349 = vmatpush2.msra.mxu0 0.0
    %350 = vmatprep.subr.mxu0 0.0
    %351 = vmatpush2.msra.mxu0 0.0
    %352 = vmatprep.subr.mxu0 0.0
    %353 = vmatpush2.msra.mxu0 0.0
    %354 = vmatprep.subr.mxu0 0.0
    %355 = vmatpush2.msra.mxu0 0.0
    %356 = vmatprep.subr.mxu0 0.0
    %357 = vmatpush2.msra.mxu0 0.0
    %358 = vmatprep.subr.mxu0 0.0
    %359 = vmatpush2.msra.mxu0 0.0
    %360 = vmatprep.subr.mxu0 0.0
    %361 = vmatpush2.msra.mxu0 0.0
    %362 = vmatprep.subr.mxu0 0.0
    %363 = vmatpush2.msra.mxu0 0.0
    %364 = vmatprep.subr.mxu0 0.0
    %365 = vmatpush2.msra.mxu0 0.0
    %366 = vmatprep.subr.mxu0 0.0
    %367 = vmatpush2.msra.mxu0 0.0
    %368 = vmatprep.subr.mxu0 0.0
    %369 = vmatpush2.msra.mxu0 0.0
    %370 = vmatprep.subr.mxu0 0.0
    %371 = vmatpush2.msra.mxu0 0.0
    %372 = vmatprep.subr.mxu0 0.0
    %373 = vmatpush2.msra.mxu0 0.0
    %374 = vmatprep.mubr.f32.mxu0 0.0
    %375 = vmatmul.mubr.f32.gmra.mxu0 %v301
    %v376 = vpop.f32.mrf.mxu0
    %v377 = vadd.f32 %v297, %v376
    %v378 = vpop.f32.mrf.mxu0
    %379 = vmatprep.mubr.f32.mxu0 0.0
    %380 = vmatmul.mubr.f32.gmra.mxu0 %v304
    %v381 = vpop.f32.mrf.mxu0
    %v382 = vadd.f32 %v297, %v381
    %v383 = vpop.f32.mrf.mxu0
    %384 = vdwg.mxu0
    %vm385 = vcmask 64512
    %v387 = vsel %vm385, %v265, 0
    %v390 = vsel %vm385, %v266, 0
    %392 = vmatprep.subr.mxu0 0.0
    %393 = vmatpush1.msra.mxu0 0.0
    %394 = vmatprep.subr.mxu0 0.0
    %395 = vmatpush1.msra.mxu0 0.0
    %396 = vmatprep.subr.mxu0 0.0
    %397 = vmatpush1.msra.mxu0 0.0
    %398 = vmatprep.subr.mxu0 0.0
    %399 = vmatpush1.msra.mxu0 0.0
    %400 = vmatprep.subr.mxu0 0.0
    %401 = vmatpush1.msra.mxu0 0.0
    %402 = vmatprep.subr.mxu0 0.0
    %403 = vmatpush1.msra.mxu0 0.0
    %404 = vmatprep.subr.mxu0 0.0
    %405 = vmatpush1.msra.mxu0 0.0
    %406 = vmatprep.subr.mxu0 0.0
    %407 = vmatpush1.msra.mxu0 0.0
    %408 = vmatprep.subr.mxu0 0.0
    %409 = vmatpush1.msra.mxu0 0.0
    %410 = vmatprep.subr.mxu0 0.0
    %411 = vmatpush1.msra.mxu0 0.0
    %412 = vmatprep.subr.mxu0 0.0
    %413 = vmatpush1.msra.mxu0 0.0
    %414 = vmatprep.subr.mxu0 0.0
    %415 = vmatpush1.msra.mxu0 0.0
    %416 = vmatprep.subr.mxu0 0.0
    %417 = vmatpush1.msra.mxu0 0.0
    %418 = vmatprep.subr.mxu0 0.0
    %419 = vmatpush1.msra.mxu0 0.0
    %420 = vmatprep.subr.mxu0 0.0
    %421 = vmatpush1.msra.mxu0 0.0
    %422 = vmatprep.subr.mxu0 0.0
    %423 = vmatpush1.msra.mxu0 %v271
    %424 = vmatprep.subr.mxu0 0.0
    %425 = vmatpush2.msra.mxu0 0.0
    %426 = vmatprep.subr.mxu0 0.0
    %427 = vmatpush2.msra.mxu0 0.0
    %428 = vmatprep.subr.mxu0 0.0
    %429 = vmatpush2.msra.mxu0 0.0
    %430 = vmatprep.subr.mxu0 0.0
    %431 = vmatpush2.msra.mxu0 0.0
    %432 = vmatprep.subr.mxu0 0.0
    %433 = vmatpush2.msra.mxu0 0.0
    %434 = vmatprep.subr.mxu0 0.0
    %435 = vmatpush2.msra.mxu0 0.0
    %436 = vmatprep.subr.mxu0 0.0
    %437 = vmatpush2.msra.mxu0 0.0
    %438 = vmatprep.subr.mxu0 0.0
    %439 = vmatpush2.msra.mxu0 0.0
    %440 = vmatprep.subr.mxu0 0.0
    %441 = vmatpush2.msra.mxu0 0.0
    %442 = vmatprep.subr.mxu0 0.0
    %443 = vmatpush2.msra.mxu0 0.0
    %444 = vmatprep.subr.mxu0 0.0
    %445 = vmatpush2.msra.mxu0 0.0
    %446 = vmatprep.subr.mxu0 0.0
    %447 = vmatpush2.msra.mxu0 0.0
    %448 = vmatprep.subr.mxu0 0.0
    %449 = vmatpush2.msra.mxu0 0.0
    %450 = vmatprep.subr.mxu0 0.0
    %451 = vmatpush2.msra.mxu0 0.0
    %452 = vmatprep.subr.mxu0 0.0
    %453 = vmatpush2.msra.mxu0 0.0
    %454 = vmatprep.subr.mxu0 0.0
    %455 = vmatpush2.msra.mxu0 0.0
    %456 = vmatprep.mubr.f32.mxu0 0.0
    %457 = vmatmul.mubr.f32.gmra.mxu0 %v387
    %v458 = vpop.f32.mrf.mxu0
    %v459 = vadd.f32 0.0, %v458
    %v460 = vpop.f32.mrf.mxu0
    %461 = vmatprep.mubr.f32.mxu0 0.0
    %462 = vmatmul.mubr.f32.gmra.mxu0 %v390
    %v463 = vpop.f32.mrf.mxu0
    %v464 = vadd.f32 0.0, %v463
    %v465 = vpop.f32.mrf.mxu0
    %466 = vdwg.mxu0
    %v468 = vsel %vm385, %v267, 0
    %v471 = vsel %vm385, %v268, 0
    %473 = vmatprep.subr.mxu0 0.0
    %474 = vmatpush1.msra.mxu0 0.0
    %475 = vmatprep.subr.mxu0 0.0
    %476 = vmatpush1.msra.mxu0 0.0
    %477 = vmatprep.subr.mxu0 0.0
    %478 = vmatpush1.msra.mxu0 0.0
    %479 = vmatprep.subr.mxu0 0.0
    %480 = vmatpush1.msra.mxu0 0.0
    %481 = vmatprep.subr.mxu0 0.0
    %482 = vmatpush1.msra.mxu0 0.0
    %483 = vmatprep.subr.mxu0 0.0
    %484 = vmatpush1.msra.mxu0 0.0
    %485 = vmatprep.subr.mxu0 0.0
    %486 = vmatpush1.msra.mxu0 0.0
    %487 = vmatprep.subr.mxu0 0.0
    %488 = vmatpush1.msra.mxu0 0.0
    %489 = vmatprep.subr.mxu0 0.0
    %490 = vmatpush1.msra.mxu0 0.0
    %491 = vmatprep.subr.mxu0 0.0
    %492 = vmatpush1.msra.mxu0 0.0
    %493 = vmatprep.subr.mxu0 0.0
    %494 = vmatpush1.msra.mxu0 0.0
    %495 = vmatprep.subr.mxu0 0.0
    %496 = vmatpush1.msra.mxu0 0.0
    %497 = vmatprep.subr.mxu0 0.0
    %498 = vmatpush1.msra.mxu0 0.0
    %499 = vmatprep.subr.mxu0 0.0
    %500 = vmatpush1.msra.mxu0 0.0
    %501 = vmatprep.subr.mxu0 0.0
    %502 = vmatpush1.msra.mxu0 0.0
    %503 = vmatprep.subr.mxu0 0.0
    %504 = vmatpush1.msra.mxu0 %v271
    %505 = vmatprep.subr.mxu0 0.0
    %506 = vmatpush2.msra.mxu0 0.0
    %507 = vmatprep.subr.mxu0 0.0
    %508 = vmatpush2.msra.mxu0 0.0
    %509 = vmatprep.subr.mxu0 0.0
    %510 = vmatpush2.msra.mxu0 0.0
    %511 = vmatprep.subr.mxu0 0.0
    %512 = vmatpush2.msra.mxu0 0.0
    %513 = vmatprep.subr.mxu0 0.0
    %514 = vmatpush2.msra.mxu0 0.0
    %515 = vmatprep.subr.mxu0 0.0
    %516 = vmatpush2.msra.mxu0 0.0
    %517 = vmatprep.subr.mxu0 0.0
    %518 = vmatpush2.msra.mxu0 0.0
    %519 = vmatprep.subr.mxu0 0.0
    %520 = vmatpush2.msra.mxu0 0.0
    %521 = vmatprep.subr.mxu0 0.0
    %522 = vmatpush2.msra.mxu0 0.0
    %523 = vmatprep.subr.mxu0 0.0
    %524 = vmatpush2.msra.mxu0 0.0
    %525 = vmatprep.subr.mxu0 0.0
    %526 = vmatpush2.msra.mxu0 0.0
    %527 = vmatprep.subr.mxu0 0.0
    %528 = vmatpush2.msra.mxu0 0.0
    %529 = vmatprep.subr.mxu0 0.0
    %530 = vmatpush2.msra.mxu0 0.0
    %531 = vmatprep.subr.mxu0 0.0
    %532 = vmatpush2.msra.mxu0 0.0
    %533 = vmatprep.subr.mxu0 0.0
    %534 = vmatpush2.msra.mxu0 0.0
    %535 = vmatprep.subr.mxu0 0.0
    %536 = vmatpush2.msra.mxu0 0.0
    %537 = vmatprep.mubr.f32.mxu0 0.0
    %538 = vmatmul.mubr.f32.gmra.mxu0 %v468
    %v539 = vpop.f32.mrf.mxu0
    %v540 = vadd.f32 0.0, %v539
    %v541 = vpop.f32.mrf.mxu0
    %542 = vmatprep.mubr.f32.mxu0 0.0
    %543 = vmatmul.mubr.f32.gmra.mxu0 %v471
    %v544 = vpop.f32.mrf.mxu0
    %v545 = vadd.f32 0.0, %v544
    %v546 = vpop.f32.mrf.mxu0
    %547 = vdwg.mxu0
    %v548 = vadd.f32 %v459, %v540
    %v549 = vadd.f32 %v464, %v545
    %v550 = vmul.f32 %v548, 0.5
    %v551 = vmul.f32 %v549, 0.5
    %vm552 = vcmask 23552
    %v554 = vsel %vm552, %v550, 0
    %v557 = vsel %vm552, %v551, 0
    %vm559 = vcmask 1042432
    %v561 = vsel %vm559, %v276, 0
    %563 = vmatprep.subr.mxu0 0.0
    %564 = vmatpush1.msra.mxu0 0.0
    %565 = vmatprep.subr.mxu0 0.0
    %566 = vmatpush1.msra.mxu0 0.0
    %567 = vmatprep.subr.mxu0 0.0
    %568 = vmatpush1.msra.mxu0 0.0
    %569 = vmatprep.subr.mxu0 0.0
    %570 = vmatpush1.msra.mxu0 0.0
    %571 = vmatprep.subr.mxu0 0.0
    %572 = vmatpush1.msra.mxu0 0.0
    %573 = vmatprep.subr.mxu0 0.0
    %574 = vmatpush1.msra.mxu0 0.0
    %575 = vmatprep.subr.mxu0 0.0
    %576 = vmatpush1.msra.mxu0 0.0
    %577 = vmatprep.subr.mxu0 0.0
    %578 = vmatpush1.msra.mxu0 0.0
    %579 = vmatprep.subr.mxu0 0.0
    %580 = vmatpush1.msra.mxu0 0.0
    %581 = vmatprep.subr.mxu0 0.0
    %582 = vmatpush1.msra.mxu0 0.0
    %583 = vmatprep.subr.mxu0 0.0
    %584 = vmatpush1.msra.mxu0 0.0
    %585 = vmatprep.subr.mxu0 0.0
    %586 = vmatpush1.msra.mxu0 0.0
    %587 = vmatprep.subr.mxu0 0.0
    %588 = vmatpush1.msra.mxu0 0.0
    %589 = vmatprep.subr.mxu0 0.0
    %590 = vmatpush1.msra.mxu0 0.0
    %591 = vmatprep.subr.mxu0 0.0
    %592 = vmatpush1.msra.mxu0 0.0
    %593 = vmatprep.subr.mxu0 0.0
    %594 = vmatpush1.msra.mxu0 %v561
    %595 = vmatprep.subr.mxu0 0.0
    %596 = vmatpush2.msra.mxu0 0.0
    %597 = vmatprep.subr.mxu0 0.0
    %598 = vmatpush2.msra.mxu0 0.0
    %599 = vmatprep.subr.mxu0 0.0
    %600 = vmatpush2.msra.mxu0 0.0
    %601 = vmatprep.subr.mxu0 0.0
    %602 = vmatpush2.msra.mxu0 0.0
    %603 = vmatprep.subr.mxu0 0.0
    %604 = vmatpush2.msra.mxu0 0.0
    %605 = vmatprep.subr.mxu0 0.0
    %606 = vmatpush2.msra.mxu0 0.0
    %607 = vmatprep.subr.mxu0 0.0
    %608 = vmatpush2.msra.mxu0 0.0
    %609 = vmatprep.subr.mxu0 0.0
    %610 = vmatpush2.msra.mxu0 0.0
    %611 = vmatprep.subr.mxu0 0.0
    %612 = vmatpush2.msra.mxu0 0.0
    %613 = vmatprep.subr.mxu0 0.0
    %614 = vmatpush2.msra.mxu0 0.0
    %615 = vmatprep.subr.mxu0 0.0
    %616 = vmatpush2.msra.mxu0 0.0
    %617 = vmatprep.subr.mxu0 0.0
    %618 = vmatpush2.msra.mxu0 0.0
    %619 = vmatprep.subr.mxu0 0.0
    %620 = vmatpush2.msra.mxu0 0.0
    %621 = vmatprep.subr.mxu0 0.0
    %622 = vmatpush2.msra.mxu0 0.0
    %623 = vmatprep.subr.mxu0 0.0
    %624 = vmatpush2.msra.mxu0 0.0
    %625 = vmatprep.subr.mxu0 0.0
    %626 = vmatpush2.msra.mxu0 0.0
    %627 = vmatprep.mubr.f32.mxu0 0.0
    %628 = vmatmul.mubr.f32.gmra.mxu0 %v554
    %v629 = vpop.f32.mrf.mxu0
    %v630 = vadd.f32 0.0, %v629
    %v631 = vpop.f32.mrf.mxu0
    %632 = vmatprep.mubr.f32.mxu0 0.0
    %633 = vmatmul.mubr.f32.gmra.mxu0 %v557
    %v634 = vpop.f32.mrf.mxu0
    %v635 = vadd.f32 0.0, %v634
    %v636 = vpop.f32.mrf.mxu0
    %637 = vdwg.mxu0
    %v638 = vadd.f32 %v377, %v630
    %v639 = vadd.f32 %v382, %v635
    %v640 = vsub.f32 %v459, %v540
    %v641 = vsub.f32 %v464, %v545
    %v642 = vand.u32 2147483647, %v640
    %v643 = vand.u32 2147483647, %v641
    %v644 = vmul.f32 %v642, 0.5
    %v645 = vmul.f32 %v643, 0.5
    %v647 = vsel %vm552, %v644, 0
    %v650 = vsel %vm552, %v645, 0
    %v653 = vsel %vm559, %v277, 0
    %655 = vmatprep.subr.mxu0 0.0
    %656 = vmatpush1.msra.mxu0 0.0
    %657 = vmatprep.subr.mxu0 0.0
    %658 = vmatpush1.msra.mxu0 0.0
    %659 = vmatprep.subr.mxu0 0.0
    %660 = vmatpush1.msra.mxu0 0.0
    %661 = vmatprep.subr.mxu0 0.0
    %662 = vmatpush1.msra.mxu0 0.0
    %663 = vmatprep.subr.mxu0 0.0
    %664 = vmatpush1.msra.mxu0 0.0
    %665 = vmatprep.subr.mxu0 0.0
    %666 = vmatpush1.msra.mxu0 0.0
    %667 = vmatprep.subr.mxu0 0.0
    %668 = vmatpush1.msra.mxu0 0.0
    %669 = vmatprep.subr.mxu0 0.0
    %670 = vmatpush1.msra.mxu0 0.0
    %671 = vmatprep.subr.mxu0 0.0
    %672 = vmatpush1.msra.mxu0 0.0
    %673 = vmatprep.subr.mxu0 0.0
    %674 = vmatpush1.msra.mxu0 0.0
    %675 = vmatprep.subr.mxu0 0.0
    %676 = vmatpush1.msra.mxu0 0.0
    %677 = vmatprep.subr.mxu0 0.0
    %678 = vmatpush1.msra.mxu0 0.0
    %679 = vmatprep.subr.mxu0 0.0
    %680 = vmatpush1.msra.mxu0 0.0
    %681 = vmatprep.subr.mxu0 0.0
    %682 = vmatpush1.msra.mxu0 0.0
    %683 = vmatprep.subr.mxu0 0.0
    %684 = vmatpush1.msra.mxu0 0.0
    %685 = vmatprep.subr.mxu0 0.0
    %686 = vmatpush1.msra.mxu0 %v653
    %687 = vmatprep.subr.mxu0 0.0
    %688 = vmatpush2.msra.mxu0 0.0
    %689 = vmatprep.subr.mxu0 0.0
    %690 = vmatpush2.msra.mxu0 0.0
    %691 = vmatprep.subr.mxu0 0.0
    %692 = vmatpush2.msra.mxu0 0.0
    %693 = vmatprep.subr.mxu0 0.0
    %694 = vmatpush2.msra.mxu0 0.0
    %695 = vmatprep.subr.mxu0 0.0
    %696 = vmatpush2.msra.mxu0 0.0
    %697 = vmatprep.subr.mxu0 0.0
    %698 = vmatpush2.msra.mxu0 0.0
    %699 = vmatprep.subr.mxu0 0.0
    %700 = vmatpush2.msra.mxu0 0.0
    %701 = vmatprep.subr.mxu0 0.0
    %702 = vmatpush2.msra.mxu0 0.0
    %703 = vmatprep.subr.mxu0 0.0
    %704 = vmatpush2.msra.mxu0 0.0
    %705 = vmatprep.subr.mxu0 0.0
    %706 = vmatpush2.msra.mxu0 0.0
    %707 = vmatprep.subr.mxu0 0.0
    %708 = vmatpush2.msra.mxu0 0.0
    %709 = vmatprep.subr.mxu0 0.0
    %710 = vmatpush2.msra.mxu0 0.0
    %711 = vmatprep.subr.mxu0 0.0
    %712 = vmatpush2.msra.mxu0 0.0
    %713 = vmatprep.subr.mxu0 0.0
    %714 = vmatpush2.msra.mxu0 0.0
    %715 = vmatprep.subr.mxu0 0.0
    %716 = vmatpush2.msra.mxu0 0.0
    %717 = vmatprep.subr.mxu0 0.0
    %718 = vmatpush2.msra.mxu0 0.0
    %719 = vmatprep.mubr.f32.mxu0 0.0
    %720 = vmatmul.mubr.f32.gmra.mxu0 %v647
    %v721 = vpop.f32.mrf.mxu0
    %v722 = vadd.f32 0.0, %v721
    %v723 = vpop.f32.mrf.mxu0
    %724 = vmatprep.mubr.f32.mxu0 0.0
    %725 = vmatmul.mubr.f32.gmra.mxu0 %v650
    %v726 = vpop.f32.mrf.mxu0
    %v727 = vadd.f32 0.0, %v726
    %v728 = vpop.f32.mrf.mxu0
    %729 = vdwg.mxu0
    %v730 = vadd.f32 %v638, %v722
    %v731 = vadd.f32 %v639, %v727
    %v732 = vmax.f32 %v730, 0.0
    %v733 = vmax.f32 %v731, 0.0
    %v735 = vlaneseq
    %v736 = vshrl.u32 %v735, 7
    %v737 = vsub.s32 0, %v736
    %v738 = vrot.slane %v284, %v737
    %vm740 = vcmask 261120
    %v742 = vsel %vm740, %v732, 0
    %v745 = vsel %vm740, %v733, 0
    %747 = vmatprep.subr.mxu0 0.0
    %748 = vmatpush1.msra.mxu0 0.0
    %749 = vmatprep.subr.mxu0 0.0
    %750 = vmatpush1.msra.mxu0 0.0
    %751 = vmatprep.subr.mxu0 0.0
    %752 = vmatpush1.msra.mxu0 0.0
    %753 = vmatprep.subr.mxu0 0.0
    %754 = vmatpush1.msra.mxu0 0.0
    %755 = vmatprep.subr.mxu0 0.0
    %756 = vmatpush1.msra.mxu0 0.0
    %757 = vmatprep.subr.mxu0 0.0
    %758 = vmatpush1.msra.mxu0 0.0
    %759 = vmatprep.subr.mxu0 0.0
    %760 = vmatpush1.msra.mxu0 0.0
    %761 = vmatprep.subr.mxu0 0.0
    %762 = vmatpush1.msra.mxu0 0.0
    %763 = vmatprep.subr.mxu0 0.0
    %764 = vmatpush1.msra.mxu0 0.0
    %765 = vmatprep.subr.mxu0 0.0
    %766 = vmatpush1.msra.mxu0 0.0
    %767 = vmatprep.subr.mxu0 0.0
    %768 = vmatpush1.msra.mxu0 0.0
    %769 = vmatprep.subr.mxu0 0.0
    %770 = vmatpush1.msra.mxu0 0.0
    %771 = vmatprep.subr.mxu0 0.0
    %772 = vmatpush1.msra.mxu0 %v283
    %773 = vmatprep.subr.mxu0 0.0
    %774 = vmatpush1.msra.mxu0 %v282
    %775 = vmatprep.subr.mxu0 0.0
    %776 = vmatpush1.msra.mxu0 %v281
    %777 = vmatprep.subr.mxu0 0.0
    %778 = vmatpush1.msra.mxu0 %v280
    %779 = vmatprep.subr.mxu0 0.0
    %780 = vmatpush2.msra.mxu0 0.0
    %781 = vmatprep.subr.mxu0 0.0
    %782 = vmatpush2.msra.mxu0 0.0
    %783 = vmatprep.subr.mxu0 0.0
    %784 = vmatpush2.msra.mxu0 0.0
    %785 = vmatprep.subr.mxu0 0.0
    %786 = vmatpush2.msra.mxu0 0.0
    %787 = vmatprep.subr.mxu0 0.0
    %788 = vmatpush2.msra.mxu0 0.0
    %789 = vmatprep.subr.mxu0 0.0
    %790 = vmatpush2.msra.mxu0 0.0
    %791 = vmatprep.subr.mxu0 0.0
    %792 = vmatpush2.msra.mxu0 0.0
    %793 = vmatprep.subr.mxu0 0.0
    %794 = vmatpush2.msra.mxu0 0.0
    %795 = vmatprep.subr.mxu0 0.0
    %796 = vmatpush2.msra.mxu0 0.0
    %797 = vmatprep.subr.mxu0 0.0
    %798 = vmatpush2.msra.mxu0 0.0
    %799 = vmatprep.subr.mxu0 0.0
    %800 = vmatpush2.msra.mxu0 0.0
    %801 = vmatprep.subr.mxu0 0.0
    %802 = vmatpush2.msra.mxu0 0.0
    %803 = vmatprep.subr.mxu0 0.0
    %804 = vmatpush2.msra.mxu0 0.0
    %805 = vmatprep.subr.mxu0 0.0
    %806 = vmatpush2.msra.mxu0 0.0
    %807 = vmatprep.subr.mxu0 0.0
    %808 = vmatpush2.msra.mxu0 0.0
    %809 = vmatprep.subr.mxu0 0.0
    %810 = vmatpush2.msra.mxu0 0.0
    %811 = vmatprep.mubr.f32.mxu0 0.0
    %812 = vmatmul.mubr.f32.gmra.mxu0 %v742
    %v813 = vpop.f32.mrf.mxu0
    %v814 = vadd.f32 %v738, %v813
    %v815 = vpop.f32.mrf.mxu0
    %816 = vmatprep.mubr.f32.mxu0 0.0
    %817 = vmatmul.mubr.f32.gmra.mxu0 %v745
    %v818 = vpop.f32.mrf.mxu0
    %v819 = vadd.f32 %v738, %v818
    %v820 = vpop.f32.mrf.mxu0
    %821 = vdwg.mxu0
    %vm822 = vcmask 130048
    %v824 = vsel %vm822, %v269, 0
    %826 = vmatprep.subr.mxu0 0.0
    %827 = vmatpush1.msra.mxu0 0.0
    %828 = vmatprep.subr.mxu0 0.0
    %829 = vmatpush1.msra.mxu0 0.0
    %830 = vmatprep.subr.mxu0 0.0
    %831 = vmatpush1.msra.mxu0 0.0
    %832 = vmatprep.subr.mxu0 0.0
    %833 = vmatpush1.msra.mxu0 0.0
    %834 = vmatprep.subr.mxu0 0.0
    %835 = vmatpush1.msra.mxu0 0.0
    %836 = vmatprep.subr.mxu0 0.0
    %837 = vmatpush1.msra.mxu0 0.0
    %838 = vmatprep.subr.mxu0 0.0
    %839 = vmatpush1.msra.mxu0 0.0
    %840 = vmatprep.subr.mxu0 0.0
    %841 = vmatpush1.msra.mxu0 0.0
    %842 = vmatprep.subr.mxu0 0.0
    %843 = vmatpush1.msra.mxu0 0.0
    %844 = vmatprep.subr.mxu0 0.0
    %845 = vmatpush1.msra.mxu0 0.0
    %846 = vmatprep.subr.mxu0 0.0
    %847 = vmatpush1.msra.mxu0 0.0
    %848 = vmatprep.subr.mxu0 0.0
    %849 = vmatpush1.msra.mxu0 0.0
    %850 = vmatprep.subr.mxu0 0.0
    %851 = vmatpush1.msra.mxu0 0.0
    %852 = vmatprep.subr.mxu0 0.0
    %853 = vmatpush1.msra.mxu0 0.0
    %854 = vmatprep.subr.mxu0 0.0
    %855 = vmatpush1.msra.mxu0 %v819
    %856 = vmatprep.subr.mxu0 0.0
    %857 = vmatpush1.msra.mxu0 %v814
    %858 = vmatprep.subr.mxu0 0.0
    %859 = vmatpush2.msra.mxu0 0.0
    %860 = vmatprep.subr.mxu0 0.0
    %861 = vmatpush2.msra.mxu0 0.0
    %862 = vmatprep.subr.mxu0 0.0
    %863 = vmatpush2.msra.mxu0 0.0
    %864 = vmatprep.subr.mxu0 0.0
    %865 = vmatpush2.msra.mxu0 0.0
    %866 = vmatprep.subr.mxu0 0.0
    %867 = vmatpush2.msra.mxu0 0.0
    %868 = vmatprep.subr.mxu0 0.0
    %869 = vmatpush2.msra.mxu0 0.0
    %870 = vmatprep.subr.mxu0 0.0
    %871 = vmatpush2.msra.mxu0 0.0
    %872 = vmatprep.subr.mxu0 0.0
    %873 = vmatpush2.msra.mxu0 0.0
    %874 = vmatprep.subr.mxu0 0.0
    %875 = vmatpush2.msra.mxu0 0.0
    %876 = vmatprep.subr.mxu0 0.0
    %877 = vmatpush2.msra.mxu0 0.0
    %878 = vmatprep.subr.mxu0 0.0
    %879 = vmatpush2.msra.mxu0 0.0
    %880 = vmatprep.subr.mxu0 0.0
    %881 = vmatpush2.msra.mxu0 0.0
    %882 = vmatprep.subr.mxu0 0.0
    %883 = vmatpush2.msra.mxu0 0.0
    %884 = vmatprep.subr.mxu0 0.0
    %885 = vmatpush2.msra.mxu0 0.0
    %886 = vmatprep.subr.mxu0 0.0
    %887 = vmatpush2.msra.mxu0 0.0
    %888 = vmatprep.subr.mxu0 0.0
    %889 = vmatpush2.msra.mxu0 0.0
    %890 = vmatprep.mubr.f32.mxu0 0.0
    %891 = vmatmul.mubr.f32.gmra.mxu0 %v824
    %v892 = vpop.f32.mrf.mxu0
    %v893 = vadd.f32 0.0, %v892
    %v894 = vpop.f32.mrf.mxu0
    %895 = vdwg.mxu0
    %v897 = vlaneseq
    %v898 = vshrl.u32 %v897, 7
    %v899 = vsub.s32 0, %v898
    %v900 = vrot.slane %v287, %v899
    %v903 = vsel %vm385, %v893, 0
    %905 = vmatprep.subr.mxu0 0.0
    %906 = vmatpush1.msra.mxu0 0.0
    %907 = vmatprep.subr.mxu0 0.0
    %908 = vmatpush1.msra.mxu0 0.0
    %909 = vmatprep.subr.mxu0 0.0
    %910 = vmatpush1.msra.mxu0 0.0
    %911 = vmatprep.subr.mxu0 0.0
    %912 = vmatpush1.msra.mxu0 0.0
    %913 = vmatprep.subr.mxu0 0.0
    %914 = vmatpush1.msra.mxu0 0.0
    %915 = vmatprep.subr.mxu0 0.0
    %916 = vmatpush1.msra.mxu0 0.0
    %917 = vmatprep.subr.mxu0 0.0
    %918 = vmatpush1.msra.mxu0 0.0
    %919 = vmatprep.subr.mxu0 0.0
    %920 = vmatpush1.msra.mxu0 0.0
    %921 = vmatprep.subr.mxu0 0.0
    %922 = vmatpush1.msra.mxu0 0.0
    %923 = vmatprep.subr.mxu0 0.0
    %924 = vmatpush1.msra.mxu0 0.0
    %925 = vmatprep.subr.mxu0 0.0
    %926 = vmatpush1.msra.mxu0 0.0
    %927 = vmatprep.subr.mxu0 0.0
    %928 = vmatpush1.msra.mxu0 0.0
    %929 = vmatprep.subr.mxu0 0.0
    %930 = vmatpush1.msra.mxu0 0.0
    %931 = vmatprep.subr.mxu0 0.0
    %932 = vmatpush1.msra.mxu0 0.0
    %933 = vmatprep.subr.mxu0 0.0
    %934 = vmatpush1.msra.mxu0 0.0
    %935 = vmatprep.subr.mxu0 0.0
    %936 = vmatpush1.msra.mxu0 %v286
    %937 = vmatprep.subr.mxu0 0.0
    %938 = vmatpush2.msra.mxu0 0.0
    %939 = vmatprep.subr.mxu0 0.0
    %940 = vmatpush2.msra.mxu0 0.0
    %941 = vmatprep.subr.mxu0 0.0
    %942 = vmatpush2.msra.mxu0 0.0
    %943 = vmatprep.subr.mxu0 0.0
    %944 = vmatpush2.msra.mxu0 0.0
    %945 = vmatprep.subr.mxu0 0.0
    %946 = vmatpush2.msra.mxu0 0.0
    %947 = vmatprep.subr.mxu0 0.0
    %948 = vmatpush2.msra.mxu0 0.0
    %949 = vmatprep.subr.mxu0 0.0
    %950 = vmatpush2.msra.mxu0 0.0
    %951 = vmatprep.subr.mxu0 0.0
    %952 = vmatpush2.msra.mxu0 0.0
    %953 = vmatprep.subr.mxu0 0.0
    %954 = vmatpush2.msra.mxu0 0.0
    %955 = vmatprep.subr.mxu0 0.0
    %956 = vmatpush2.msra.mxu0 0.0
    %957 = vmatprep.subr.mxu0 0.0
    %958 = vmatpush2.msra.mxu0 0.0
    %959 = vmatprep.subr.mxu0 0.0
    %960 = vmatpush2.msra.mxu0 0.0
    %961 = vmatprep.subr.mxu0 0.0
    %962 = vmatpush2.msra.mxu0 0.0
    %963 = vmatprep.subr.mxu0 0.0
    %964 = vmatpush2.msra.mxu0 0.0
    %965 = vmatprep.subr.mxu0 0.0
    %966 = vmatpush2.msra.mxu0 0.0
    %967 = vmatprep.subr.mxu0 0.0
    %968 = vmatpush2.msra.mxu0 0.0
    %969 = vmatprep.mubr.f32.mxu0 0.0
    %970 = vmatmul.mubr.f32.gmra.mxu0 %v903
    %v971 = vpop.f32.mrf.mxu0
    %v972 = vadd.f32 %v900, %v971
    %v973 = vpop.f32.mrf.mxu0
    %974 = vdwg.mxu0
    %v976 = vsel %vm552, %v271, 0
    %v979 = vsel %vm559, %v285, 0
    %981 = vmatprep.subr.mxu0 0.0
    %982 = vmatpush1.msra.mxu0 0.0
    %983 = vmatprep.subr.mxu0 0.0
    %984 = vmatpush1.msra.mxu0 0.0
    %985 = vmatprep.subr.mxu0 0.0
    %986 = vmatpush1.msra.mxu0 0.0
    %987 = vmatprep.subr.mxu0 0.0
    %988 = vmatpush1.msra.mxu0 0.0
    %989 = vmatprep.subr.mxu0 0.0
    %990 = vmatpush1.msra.mxu0 0.0
    %991 = vmatprep.subr.mxu0 0.0
    %992 = vmatpush1.msra.mxu0 0.0
    %993 = vmatprep.subr.mxu0 0.0
    %994 = vmatpush1.msra.mxu0 0.0
    %995 = vmatprep.subr.mxu0 0.0
    %996 = vmatpush1.msra.mxu0 0.0
    %997 = vmatprep.subr.mxu0 0.0
    %998 = vmatpush1.msra.mxu0 0.0
    %999 = vmatprep.subr.mxu0 0.0
    %1000 = vmatpush1.msra.mxu0 0.0
    %1001 = vmatprep.subr.mxu0 0.0
    %1002 = vmatpush1.msra.mxu0 0.0
    %1003 = vmatprep.subr.mxu0 0.0
    %1004 = vmatpush1.msra.mxu0 0.0
    %1005 = vmatprep.subr.mxu0 0.0
    %1006 = vmatpush1.msra.mxu0 0.0
    %1007 = vmatprep.subr.mxu0 0.0
    %1008 = vmatpush1.msra.mxu0 0.0
    %1009 = vmatprep.subr.mxu0 0.0
    %1010 = vmatpush1.msra.mxu0 0.0
    %1011 = vmatprep.subr.mxu0 0.0
    %1012 = vmatpush1.msra.mxu0 %v979
    %1013 = vmatprep.subr.mxu0 0.0
    %1014 = vmatpush2.msra.mxu0 0.0
    %1015 = vmatprep.subr.mxu0 0.0
    %1016 = vmatpush2.msra.mxu0 0.0
    %1017 = vmatprep.subr.mxu0 0.0
    %1018 = vmatpush2.msra.mxu0 0.0
    %1019 = vmatprep.subr.mxu0 0.0
    %1020 = vmatpush2.msra.mxu0 0.0
    %1021 = vmatprep.subr.mxu0 0.0
    %1022 = vmatpush2.msra.mxu0 0.0
    %1023 = vmatprep.subr.mxu0 0.0
    %1024 = vmatpush2.msra.mxu0 0.0
    %1025 = vmatprep.subr.mxu0 0.0
    %1026 = vmatpush2.msra.mxu0 0.0
    %1027 = vmatprep.subr.mxu0 0.0
    %1028 = vmatpush2.msra.mxu0 0.0
    %1029 = vmatprep.subr.mxu0 0.0
    %1030 = vmatpush2.msra.mxu0 0.0
    %1031 = vmatprep.subr.mxu0 0.0
    %1032 = vmatpush2.msra.mxu0 0.0
    %1033 = vmatprep.subr.mxu0 0.0
    %1034 = vmatpush2.msra.mxu0 0.0
    %1035 = vmatprep.subr.mxu0 0.0
    %1036 = vmatpush2.msra.mxu0 0.0
    %1037 = vmatprep.subr.mxu0 0.0
    %1038 = vmatpush2.msra.mxu0 0.0
    %1039 = vmatprep.subr.mxu0 0.0
    %1040 = vmatpush2.msra.mxu0 0.0
    %1041 = vmatprep.subr.mxu0 0.0
    %1042 = vmatpush2.msra.mxu0 0.0
    %1043 = vmatprep.subr.mxu0 0.0
    %1044 = vmatpush2.msra.mxu0 0.0
    %1045 = vmatprep.mubr.f32.mxu0 0.0
    %1046 = vmatmul.mubr.f32.gmra.mxu0 %v976
    %v1047 = vpop.f32.mrf.mxu0
    %v1048 = vadd.f32 0.0, %v1047
    %v1049 = vpop.f32.mrf.mxu0
    %1050 = vdwg.mxu0
    %v1051 = vadd.f32 %v972, %v1048
    %v1052 = vmax.f32 %v1051, 0.0
    %v1054 = vlaneseq
    %v1055 = vshrl.u32 %v1054, 7
    %v1056 = vsub.s32 0, %v1055
    %v1057 = vrot.slane %v292, %v1056
    %v1060 = vsel %vm740, %v1052, 0
    %1062 = vmatprep.subr.mxu0 0.0
    %1063 = vmatpush1.msra.mxu0 0.0
    %1064 = vmatprep.subr.mxu0 0.0
    %1065 = vmatpush1.msra.mxu0 0.0
    %1066 = vmatprep.subr.mxu0 0.0
    %1067 = vmatpush1.msra.mxu0 0.0
    %1068 = vmatprep.subr.mxu0 0.0
    %1069 = vmatpush1.msra.mxu0 0.0
    %1070 = vmatprep.subr.mxu0 0.0
    %1071 = vmatpush1.msra.mxu0 0.0
    %1072 = vmatprep.subr.mxu0 0.0
    %1073 = vmatpush1.msra.mxu0 0.0
    %1074 = vmatprep.subr.mxu0 0.0
    %1075 = vmatpush1.msra.mxu0 0.0
    %1076 = vmatprep.subr.mxu0 0.0
    %1077 = vmatpush1.msra.mxu0 0.0
    %1078 = vmatprep.subr.mxu0 0.0
    %1079 = vmatpush1.msra.mxu0 0.0
    %1080 = vmatprep.subr.mxu0 0.0
    %1081 = vmatpush1.msra.mxu0 0.0
    %1082 = vmatprep.subr.mxu0 0.0
    %1083 = vmatpush1.msra.mxu0 0.0
    %1084 = vmatprep.subr.mxu0 0.0
    %1085 = vmatpush1.msra.mxu0 0.0
    %1086 = vmatprep.subr.mxu0 0.0
    %1087 = vmatpush1.msra.mxu0 %v291
    %1088 = vmatprep.subr.mxu0 0.0
    %1089 = vmatpush1.msra.mxu0 %v290
    %1090 = vmatprep.subr.mxu0 0.0
    %1091 = vmatpush1.msra.mxu0 %v289
    %1092 = vmatprep.subr.mxu0 0.0
    %1093 = vmatpush1.msra.mxu0 %v288
    %1094 = vmatprep.subr.mxu0 0.0
    %1095 = vmatpush2.msra.mxu0 0.0
    %1096 = vmatprep.subr.mxu0 0.0
    %1097 = vmatpush2.msra.mxu0 0.0
    %1098 = vmatprep.subr.mxu0 0.0
    %1099 = vmatpush2.msra.mxu0 0.0
    %1100 = vmatprep.subr.mxu0 0.0
    %1101 = vmatpush2.msra.mxu0 0.0
    %1102 = vmatprep.subr.mxu0 0.0
    %1103 = vmatpush2.msra.mxu0 0.0
    %1104 = vmatprep.subr.mxu0 0.0
    %1105 = vmatpush2.msra.mxu0 0.0
    %1106 = vmatprep.subr.mxu0 0.0
    %1107 = vmatpush2.msra.mxu0 0.0
    %1108 = vmatprep.subr.mxu0 0.0
    %1109 = vmatpush2.msra.mxu0 0.0
    %1110 = vmatprep.subr.mxu0 0.0
    %1111 = vmatpush2.msra.mxu0 0.0
    %1112 = vmatprep.subr.mxu0 0.0
    %1113 = vmatpush2.msra.mxu0 0.0
    %1114 = vmatprep.subr.mxu0 0.0
    %1115 = vmatpush2.msra.mxu0 0.0
    %1116 = vmatprep.subr.mxu0 0.0
    %1117 = vmatpush2.msra.mxu0 0.0
    %1118 = vmatprep.subr.mxu0 0.0
    %1119 = vmatpush2.msra.mxu0 0.0
    %1120 = vmatprep.subr.mxu0 0.0
    %1121 = vmatpush2.msra.mxu0 0.0
    %1122 = vmatprep.subr.mxu0 0.0
    %1123 = vmatpush2.msra.mxu0 0.0
    %1124 = vmatprep.subr.mxu0 0.0
    %1125 = vmatpush2.msra.mxu0 0.0
    %1126 = vmatprep.mubr.f32.mxu0 0.0
    %1127 = vmatmul.mubr.f32.gmra.mxu0 %v1060
    %v1128 = vpop.f32.mrf.mxu0
    %v1129 = vadd.f32 %v1057, %v1128
    %v1130 = vpop.f32.mrf.mxu0
    %1131 = vdwg.mxu0
    %v1132 = vmax.f32 %v1129, 0.0
    %1133 = vmatprep.subr.mxu0 0.0
    %1134 = vmatpush1.msra.mxu0 0.0
    %1135 = vmatprep.subr.mxu0 0.0
    %1136 = vmatpush1.msra.mxu0 0.0
    %1137 = vmatprep.subr.mxu0 0.0
    %1138 = vmatpush1.msra.mxu0 0.0
    %1139 = vmatprep.subr.mxu0 0.0
    %1140 = vmatpush1.msra.mxu0 0.0
    %1141 = vmatprep.subr.mxu0 0.0
    %1142 = vmatpush1.msra.mxu0 0.0
    %1143 = vmatprep.subr.mxu0 0.0
    %1144 = vmatpush1.msra.mxu0 0.0
    %1145 = vmatprep.subr.mxu0 0.0
    %1146 = vmatpush1.msra.mxu0 0.0
    %1147 = vmatprep.subr.mxu0 0.0
    %1148 = vmatpush1.msra.mxu0 0.0
    %1149 = vmatprep.subr.mxu0 0.0
    %1150 = vmatpush1.msra.mxu0 0.0
    %1151 = vmatprep.subr.mxu0 0.0
    %1152 = vmatpush1.msra.mxu0 0.0
    %1153 = vmatprep.subr.mxu0 0.0
    %1154 = vmatpush1.msra.mxu0 0.0
    %1155 = vmatprep.subr.mxu0 0.0
    %1156 = vmatpush1.msra.mxu0 0.0
    %1157 = vmatprep.subr.mxu0 0.0
    %1158 = vmatpush1.msra.mxu0 0.0
    %1159 = vmatprep.subr.mxu0 0.0
    %1160 = vmatpush1.msra.mxu0 0.0
    %1161 = vmatprep.subr.mxu0 0.0
    %1162 = vmatpush1.msra.mxu0 0.0
    %1163 = vmatprep.subr.mxu0 0.0
    %1164 = vmatpush1.msra.mxu0 %v1132
    %1165 = vmatprep.subr.mxu0 0.0
    %1166 = vmatpush2.msra.mxu0 0.0
    %1167 = vmatprep.subr.mxu0 0.0
    %1168 = vmatpush2.msra.mxu0 0.0
    %1169 = vmatprep.subr.mxu0 0.0
    %1170 = vmatpush2.msra.mxu0 0.0
    %1171 = vmatprep.subr.mxu0 0.0
    %1172 = vmatpush2.msra.mxu0 0.0
    %1173 = vmatprep.subr.mxu0 0.0
    %1174 = vmatpush2.msra.mxu0 0.0
    %1175 = vmatprep.subr.mxu0 0.0
    %1176 = vmatpush2.msra.mxu0 0.0
    %1177 = vmatprep.subr.mxu0 0.0
    %1178 = vmatpush2.msra.mxu0 0.0
    %1179 = vmatprep.subr.mxu0 0.0
    %1180 = vmatpush2.msra.mxu0 0.0
    %1181 = vmatprep.subr.mxu0 0.0
    %1182 = vmatpush2.msra.mxu0 0.0
    %1183 = vmatprep.subr.mxu0 0.0
    %1184 = vmatpush2.msra.mxu0 0.0
    %1185 = vmatprep.subr.mxu0 0.0
    %1186 = vmatpush2.msra.mxu0 0.0
    %1187 = vmatprep.subr.mxu0 0.0
    %1188 = vmatpush2.msra.mxu0 0.0
    %1189 = vmatprep.subr.mxu0 0.0
    %1190 = vmatpush2.msra.mxu0 0.0
    %1191 = vmatprep.subr.mxu0 0.0
    %1192 = vmatpush2.msra.mxu0 0.0
    %1193 = vmatprep.subr.mxu0 0.0
    %1194 = vmatpush2.msra.mxu0 0.0
    %1195 = vmatprep.subr.mxu0 0.0
    %1196 = vmatpush2.msra.mxu0 0.0
    %1197 = vmatprep.mubr.f32.mxu0 0.0
    %1198 = vmatmul.mubr.f32.gmra.mxu0 %v468
    %v1199 = vpop.f32.mrf.mxu0
    %v1200 = vadd.f32 0.0, %v1199
    %v1201 = vpop.f32.mrf.mxu0
    %1202 = vmatprep.mubr.f32.mxu0 0.0
    %1203 = vmatmul.mubr.f32.gmra.mxu0 %v471
    %v1204 = vpop.f32.mrf.mxu0
    %v1205 = vadd.f32 0.0, %v1204
    %v1206 = vpop.f32.mrf.mxu0
    %1207 = vdwg.mxu0
    %1208 = vmatprep.subr.mxu0 0.0
    %1209 = vmatpush1.msra.mxu0 0.0
    %1210 = vmatprep.subr.mxu0 0.0
    %1211 = vmatpush1.msra.mxu0 0.0
    %1212 = vmatprep.subr.mxu0 0.0
    %1213 = vmatpush1.msra.mxu0 0.0
    %1214 = vmatprep.subr.mxu0 0.0
    %1215 = vmatpush1.msra.mxu0 0.0
    %1216 = vmatprep.subr.mxu0 0.0
    %1217 = vmatpush1.msra.mxu0 0.0
    %1218 = vmatprep.subr.mxu0 0.0
    %1219 = vmatpush1.msra.mxu0 0.0
    %1220 = vmatprep.subr.mxu0 0.0
    %1221 = vmatpush1.msra.mxu0 0.0
    %1222 = vmatprep.subr.mxu0 0.0
    %1223 = vmatpush1.msra.mxu0 0.0
    %1224 = vmatprep.subr.mxu0 0.0
    %1225 = vmatpush1.msra.mxu0 0.0
    %1226 = vmatprep.subr.mxu0 0.0
    %1227 = vmatpush1.msra.mxu0 0.0
    %1228 = vmatprep.subr.mxu0 0.0
    %1229 = vmatpush1.msra.mxu0 0.0
    %1230 = vmatprep.subr.mxu0 0.0
    %1231 = vmatpush1.msra.mxu0 0.0
    %1232 = vmatprep.subr.mxu0 0.0
    %1233 = vmatpush1.msra.mxu0 0.0
    %1234 = vmatprep.subr.mxu0 0.0
    %1235 = vmatpush1.msra.mxu0 0.0
    %1236 = vmatprep.subr.mxu0 0.0
    %1237 = vmatpush1.msra.mxu0 0.0
    %1238 = vmatprep.subr.mxu0 0.0
    %1239 = vmatpush1.msra.mxu0 %v1132
    %1240 = vmatprep.subr.mxu0 0.0
    %1241 = vmatpush2.msra.mxu0 0.0
    %1242 = vmatprep.subr.mxu0 0.0
    %1243 = vmatpush2.msra.mxu0 0.0
    %1244 = vmatprep.subr.mxu0 0.0
    %1245 = vmatpush2.msra.mxu0 0.0
    %1246 = vmatprep.subr.mxu0 0.0
    %1247 = vmatpush2.msra.mxu0 0.0
    %1248 = vmatprep.subr.mxu0 0.0
    %1249 = vmatpush2.msra.mxu0 0.0
    %1250 = vmatprep.subr.mxu0 0.0
    %1251 = vmatpush2.msra.mxu0 0.0
    %1252 = vmatprep.subr.mxu0 0.0
    %1253 = vmatpush2.msra.mxu0 0.0
    %1254 = vmatprep.subr.mxu0 0.0
    %1255 = vmatpush2.msra.mxu0 0.0
    %1256 = vmatprep.subr.mxu0 0.0
    %1257 = vmatpush2.msra.mxu0 0.0
    %1258 = vmatprep.subr.mxu0 0.0
    %1259 = vmatpush2.msra.mxu0 0.0
    %1260 = vmatprep.subr.mxu0 0.0
    %1261 = vmatpush2.msra.mxu0 0.0
    %1262 = vmatprep.subr.mxu0 0.0
    %1263 = vmatpush2.msra.mxu0 0.0
    %1264 = vmatprep.subr.mxu0 0.0
    %1265 = vmatpush2.msra.mxu0 0.0
    %1266 = vmatprep.subr.mxu0 0.0
    %1267 = vmatpush2.msra.mxu0 0.0
    %1268 = vmatprep.subr.mxu0 0.0
    %1269 = vmatpush2.msra.mxu0 0.0
    %1270 = vmatprep.subr.mxu0 0.0
    %1271 = vmatpush2.msra.mxu0 0.0
    %1272 = vmatprep.mubr.f32.mxu0 0.0
    %1273 = vmatmul.mubr.f32.gmra.mxu0 %v387
    %v1274 = vpop.f32.mrf.mxu0
    %v1275 = vadd.f32 %v1200, %v1274
    %v1276 = vpop.f32.mrf.mxu0
    %1277 = vmatprep.mubr.f32.mxu0 0.0
    %1278 = vmatmul.mubr.f32.gmra.mxu0 %v390
    %v1279 = vpop.f32.mrf.mxu0
    %v1280 = vadd.f32 %v1205, %v1279
    %v1281 = vpop.f32.mrf.mxu0
    %1282 = vdwg.mxu0
    %v1283 = vmul.f32 %v1275, 0.5
    %v1284 = vmul.f32 %v1280, 0.5
    %v1286 = vsel %vm822, %v270, 0
    %1288 = vmatprep.subr.mxu0 0.0
    %1289 = vmatpush1.msra.mxu0 0.0
    %1290 = vmatprep.subr.mxu0 0.0
    %1291 = vmatpush1.msra.mxu0 0.0
    %1292 = vmatprep.subr.mxu0 0.0
    %1293 = vmatpush1.msra.mxu0 0.0
    %1294 = vmatprep.subr.mxu0 0.0
    %1295 = vmatpush1.msra.mxu0 0.0
    %1296 = vmatprep.subr.mxu0 0.0
    %1297 = vmatpush1.msra.mxu0 0.0
    %1298 = vmatprep.subr.mxu0 0.0
    %1299 = vmatpush1.msra.mxu0 0.0
    %1300 = vmatprep.subr.mxu0 0.0
    %1301 = vmatpush1.msra.mxu0 0.0
    %1302 = vmatprep.subr.mxu0 0.0
    %1303 = vmatpush1.msra.mxu0 0.0
    %1304 = vmatprep.subr.mxu0 0.0
    %1305 = vmatpush1.msra.mxu0 0.0
    %1306 = vmatprep.subr.mxu0 0.0
    %1307 = vmatpush1.msra.mxu0 0.0
    %1308 = vmatprep.subr.mxu0 0.0
    %1309 = vmatpush1.msra.mxu0 0.0
    %1310 = vmatprep.subr.mxu0 0.0
    %1311 = vmatpush1.msra.mxu0 0.0
    %1312 = vmatprep.subr.mxu0 0.0
    %1313 = vmatpush1.msra.mxu0 0.0
    %1314 = vmatprep.subr.mxu0 0.0
    %1315 = vmatpush1.msra.mxu0 0.0
    %1316 = vmatprep.subr.mxu0 0.0
    %1317 = vmatpush1.msra.mxu0 %v1284
    %1318 = vmatprep.subr.mxu0 0.0
    %1319 = vmatpush1.msra.mxu0 %v1283
    %1320 = vmatprep.subr.mxu0 0.0
    %1321 = vmatpush2.msra.mxu0 0.0
    %1322 = vmatprep.subr.mxu0 0.0
    %1323 = vmatpush2.msra.mxu0 0.0
    %1324 = vmatprep.subr.mxu0 0.0
    %1325 = vmatpush2.msra.mxu0 0.0
    %1326 = vmatprep.subr.mxu0 0.0
    %1327 = vmatpush2.msra.mxu0 0.0
    %1328 = vmatprep.subr.mxu0 0.0
    %1329 = vmatpush2.msra.mxu0 0.0
    %1330 = vmatprep.subr.mxu0 0.0
    %1331 = vmatpush2.msra.mxu0 0.0
    %1332 = vmatprep.subr.mxu0 0.0
    %1333 = vmatpush2.msra.mxu0 0.0
    %1334 = vmatprep.subr.mxu0 0.0
    %1335 = vmatpush2.msra.mxu0 0.0
    %1336 = vmatprep.subr.mxu0 0.0
    %1337 = vmatpush2.msra.mxu0 0.0
    %1338 = vmatprep.subr.mxu0 0.0
    %1339 = vmatpush2.msra.mxu0 0.0
    %1340 = vmatprep.subr.mxu0 0.0
    %1341 = vmatpush2.msra.mxu0 0.0
    %1342 = vmatprep.subr.mxu0 0.0
    %1343 = vmatpush2.msra.mxu0 0.0
    %1344 = vmatprep.subr.mxu0 0.0
    %1345 = vmatpush2.msra.mxu0 0.0
    %1346 = vmatprep.subr.mxu0 0.0
    %1347 = vmatpush2.msra.mxu0 0.0
    %1348 = vmatprep.subr.mxu0 0.0
    %1349 = vmatpush2.msra.mxu0 0.0
    %1350 = vmatprep.subr.mxu0 0.0
    %1351 = vmatpush2.msra.mxu0 0.0
    %1352 = vmatprep.mubr.f32.mxu0 0.0
    %1353 = vmatmul.mubr.f32.gmra.mxu0 %v1286
    %v1354 = vpop.f32.mrf.mxu0
    %v1355 = vadd.f32 0.0, %v1354
    %v1356 = vpop.f32.mrf.mxu0
    %1357 = vdwg.mxu0
    %v1358 = vld [vmem:[%s39] sm:$0xf]
    %v1359 = vld [vmem:[%s41] sm:$0x1]
    %v1360 = vld [vmem:[%s43] sm:$0xff]
    %v1361 = vld [vmem:[%s43 + $0x8] sm:$0xff]
    %v1362 = vld [vmem:[%s43 + $0x10] sm:$0xff]
    %v1363 = vld [vmem:[%s45] sm:$0x1]
    %v1364 = vld [vmem:[%s47] sm:$0xff]
    %v1365 = vld [vmem:[%s47 + $0x8] sm:$0xff]
    %v1366 = vld [vmem:[%s47 + $0x10] sm:$0xff]
    %v1367 = vld [vmem:[%s47 + $0x18] sm:$0xff]
    %v1368 = vld [vmem:[%s47 + $0x20] sm:$0xff]
    %v1369 = vld [vmem:[%s47 + $0x28] sm:$0xff]
    %v1370 = vld [vmem:[%s47 + $0x30] sm:$0xff]
    %v1371 = vld [vmem:[%s47 + $0x38] sm:$0xff]
    %v1372 = vld [vmem:[%s49] sm:$0x1]
    %v1374 = vlaneseq
    %v1375 = vshrl.u32 %v1374, 7
    %v1376 = vsub.s32 0, %v1375
    %v1377 = vrot.slane %v1359, %v1376
    %v1380 = vsel %vm299, %v275, 0
    %v1383 = vsel %vm306, %v1358, 0
    %1385 = vmatprep.subr.mxu0 0.0
    %1386 = vmatpush1.msra.mxu0 0.0
    %1387 = vmatprep.subr.mxu0 0.0
    %1388 = vmatpush1.msra.mxu0 0.0
    %1389 = vmatprep.subr.mxu0 0.0
    %1390 = vmatpush1.msra.mxu0 0.0
    %1391 = vmatprep.subr.mxu0 0.0
    %1392 = vmatpush1.msra.mxu0 0.0
    %1393 = vmatprep.subr.mxu0 0.0
    %1394 = vmatpush1.msra.mxu0 0.0
    %1395 = vmatprep.subr.mxu0 0.0
    %1396 = vmatpush1.msra.mxu0 0.0
    %1397 = vmatprep.subr.mxu0 0.0
    %1398 = vmatpush1.msra.mxu0 0.0
    %1399 = vmatprep.subr.mxu0 0.0
    %1400 = vmatpush1.msra.mxu0 0.0
    %1401 = vmatprep.subr.mxu0 0.0
    %1402 = vmatpush1.msra.mxu0 0.0
    %1403 = vmatprep.subr.mxu0 0.0
    %1404 = vmatpush1.msra.mxu0 0.0
    %1405 = vmatprep.subr.mxu0 0.0
    %1406 = vmatpush1.msra.mxu0 0.0
    %1407 = vmatprep.subr.mxu0 0.0
    %1408 = vmatpush1.msra.mxu0 0.0
    %1409 = vmatprep.subr.mxu0 0.0
    %1410 = vmatpush1.msra.mxu0 0.0
    %1411 = vmatprep.subr.mxu0 0.0
    %1412 = vmatpush1.msra.mxu0 0.0
    %1413 = vmatprep.subr.mxu0 0.0
    %1414 = vmatpush1.msra.mxu0 0.0
    %1415 = vmatprep.subr.mxu0 0.0
    %1416 = vmatpush1.msra.mxu0 %v1383
    %1417 = vmatprep.subr.mxu0 0.0
    %1418 = vmatpush2.msra.mxu0 0.0
    %1419 = vmatprep.subr.mxu0 0.0
    %1420 = vmatpush2.msra.mxu0 0.0
    %1421 = vmatprep.subr.mxu0 0.0
    %1422 = vmatpush2.msra.mxu0 0.0
    %1423 = vmatprep.subr.mxu0 0.0
    %1424 = vmatpush2.msra.mxu0 0.0
    %1425 = vmatprep.subr.mxu0 0.0
    %1426 = vmatpush2.msra.mxu0 0.0
    %1427 = vmatprep.subr.mxu0 0.0
    %1428 = vmatpush2.msra.mxu0 0.0
    %1429 = vmatprep.subr.mxu0 0.0
    %1430 = vmatpush2.msra.mxu0 0.0
    %1431 = vmatprep.subr.mxu0 0.0
    %1432 = vmatpush2.msra.mxu0 0.0
    %1433 = vmatprep.subr.mxu0 0.0
    %1434 = vmatpush2.msra.mxu0 0.0
    %1435 = vmatprep.subr.mxu0 0.0
    %1436 = vmatpush2.msra.mxu0 0.0
    %1437 = vmatprep.subr.mxu0 0.0
    %1438 = vmatpush2.msra.mxu0 0.0
    %1439 = vmatprep.subr.mxu0 0.0
    %1440 = vmatpush2.msra.mxu0 0.0
    %1441 = vmatprep.subr.mxu0 0.0
    %1442 = vmatpush2.msra.mxu0 0.0
    %1443 = vmatprep.subr.mxu0 0.0
    %1444 = vmatpush2.msra.mxu0 0.0
    %1445 = vmatprep.subr.mxu0 0.0
    %1446 = vmatpush2.msra.mxu0 0.0
    %1447 = vmatprep.subr.mxu0 0.0
    %1448 = vmatpush2.msra.mxu0 0.0
    %1449 = vmatprep.mubr.f32.mxu0 0.0
    %1450 = vmatmul.mubr.f32.gmra.mxu0 %v1380
    %v1451 = vpop.f32.mrf.mxu0
    %v1452 = vadd.f32 %v1377, %v1451
    %v1453 = vpop.f32.mrf.mxu0
    %1454 = vdwg.mxu0
    %vm1455 = vcmp.gt.f32.partialorder %v1452, 0.0
    %v1456 = vmul.f32 %v1452, 0.01
    %v1457 = vsel %vm1455, %v1452, %v1456
    %v1459 = vlaneseq
    %v1460 = vshrl.u32 %v1459, 7
    %v1461 = vsub.s32 0, %v1460
    %v1462 = vrot.slane %v1363, %v1461
    %vm1464 = vcmask 195584
    %v1466 = vsel %vm1464, %v1457, 0
    %1468 = vmatprep.subr.mxu0 0.0
    %1469 = vmatpush1.msra.mxu0 0.0
    %1470 = vmatprep.subr.mxu0 0.0
    %1471 = vmatpush1.msra.mxu0 0.0
    %1472 = vmatprep.subr.mxu0 0.0
    %1473 = vmatpush1.msra.mxu0 0.0
    %1474 = vmatprep.subr.mxu0 0.0
    %1475 = vmatpush1.msra.mxu0 0.0
    %1476 = vmatprep.subr.mxu0 0.0
    %1477 = vmatpush1.msra.mxu0 0.0
    %1478 = vmatprep.subr.mxu0 0.0
    %1479 = vmatpush1.msra.mxu0 0.0
    %1480 = vmatprep.subr.mxu0 0.0
    %1481 = vmatpush1.msra.mxu0 0.0
    %1482 = vmatprep.subr.mxu0 0.0
    %1483 = vmatpush1.msra.mxu0 0.0
    %1484 = vmatprep.subr.mxu0 0.0
    %1485 = vmatpush1.msra.mxu0 0.0
    %1486 = vmatprep.subr.mxu0 0.0
    %1487 = vmatpush1.msra.mxu0 0.0
    %1488 = vmatprep.subr.mxu0 0.0
    %1489 = vmatpush1.msra.mxu0 0.0
    %1490 = vmatprep.subr.mxu0 0.0
    %1491 = vmatpush1.msra.mxu0 0.0
    %1492 = vmatprep.subr.mxu0 0.0
    %1493 = vmatpush1.msra.mxu0 0.0
    %1494 = vmatprep.subr.mxu0 0.0
    %1495 = vmatpush1.msra.mxu0 %v1362
    %1496 = vmatprep.subr.mxu0 0.0
    %1497 = vmatpush1.msra.mxu0 %v1361
    %1498 = vmatprep.subr.mxu0 0.0
    %1499 = vmatpush1.msra.mxu0 %v1360
    %1500 = vmatprep.subr.mxu0 0.0
    %1501 = vmatpush2.msra.mxu0 0.0
    %1502 = vmatprep.subr.mxu0 0.0
    %1503 = vmatpush2.msra.mxu0 0.0
    %1504 = vmatprep.subr.mxu0 0.0
    %1505 = vmatpush2.msra.mxu0 0.0
    %1506 = vmatprep.subr.mxu0 0.0
    %1507 = vmatpush2.msra.mxu0 0.0
    %1508 = vmatprep.subr.mxu0 0.0
    %1509 = vmatpush2.msra.mxu0 0.0
    %1510 = vmatprep.subr.mxu0 0.0
    %1511 = vmatpush2.msra.mxu0 0.0
    %1512 = vmatprep.subr.mxu0 0.0
    %1513 = vmatpush2.msra.mxu0 0.0
    %1514 = vmatprep.subr.mxu0 0.0
    %1515 = vmatpush2.msra.mxu0 0.0
    %1516 = vmatprep.subr.mxu0 0.0
    %1517 = vmatpush2.msra.mxu0 0.0
    %1518 = vmatprep.subr.mxu0 0.0
    %1519 = vmatpush2.msra.mxu0 0.0
    %1520 = vmatprep.subr.mxu0 0.0
    %1521 = vmatpush2.msra.mxu0 0.0
    %1522 = vmatprep.subr.mxu0 0.0
    %1523 = vmatpush2.msra.mxu0 0.0
    %1524 = vmatprep.subr.mxu0 0.0
    %1525 = vmatpush2.msra.mxu0 0.0
    %1526 = vmatprep.subr.mxu0 0.0
    %1527 = vmatpush2.msra.mxu0 0.0
    %1528 = vmatprep.subr.mxu0 0.0
    %1529 = vmatpush2.msra.mxu0 0.0
    %1530 = vmatprep.subr.mxu0 0.0
    %1531 = vmatpush2.msra.mxu0 0.0
    %1532 = vmatprep.mubr.f32.mxu0 0.0
    %1533 = vmatmul.mubr.f32.gmra.mxu0 %v1466
    %v1534 = vpop.f32.mrf.mxu0
    %v1535 = vadd.f32 %v1462, %v1534
    %v1536 = vpop.f32.mrf.mxu0
    %1537 = vdwg.mxu0
    %vm1538 = vcmp.gt.f32.partialorder %v1535, 0.0
    %v1539 = vmul.f32 %v1535, 0.01
    %v1540 = vsel %vm1538, %v1535, %v1539
    %v1542 = vlaneseq
    %v1543 = vshrl.u32 %v1542, 7
    %v1544 = vsub.s32 0, %v1543
    %v1545 = vrot.slane %v1372, %v1544
    %vm1547 = vcmask 523264
    %v1549 = vsel %vm1547, %v1540, 0
    %1551 = vmatprep.subr.mxu0 0.0
    %1552 = vmatpush1.msra.mxu0 0.0
    %1553 = vmatprep.subr.mxu0 0.0
    %1554 = vmatpush1.msra.mxu0 0.0
    %1555 = vmatprep.subr.mxu0 0.0
    %1556 = vmatpush1.msra.mxu0 0.0
    %1557 = vmatprep.subr.mxu0 0.0
    %1558 = vmatpush1.msra.mxu0 0.0
    %1559 = vmatprep.subr.mxu0 0.0
    %1560 = vmatpush1.msra.mxu0 0.0
    %1561 = vmatprep.subr.mxu0 0.0
    %1562 = vmatpush1.msra.mxu0 0.0
    %1563 = vmatprep.subr.mxu0 0.0
    %1564 = vmatpush1.msra.mxu0 0.0
    %1565 = vmatprep.subr.mxu0 0.0
    %1566 = vmatpush1.msra.mxu0 0.0
    %1567 = vmatprep.subr.mxu0 0.0
    %1568 = vmatpush1.msra.mxu0 %v1371
    %1569 = vmatprep.subr.mxu0 0.0
    %1570 = vmatpush1.msra.mxu0 %v1370
    %1571 = vmatprep.subr.mxu0 0.0
    %1572 = vmatpush1.msra.mxu0 %v1369
    %1573 = vmatprep.subr.mxu0 0.0
    %1574 = vmatpush1.msra.mxu0 %v1368
    %1575 = vmatprep.subr.mxu0 0.0
    %1576 = vmatpush1.msra.mxu0 %v1367
    %1577 = vmatprep.subr.mxu0 0.0
    %1578 = vmatpush1.msra.mxu0 %v1366
    %1579 = vmatprep.subr.mxu0 0.0
    %1580 = vmatpush1.msra.mxu0 %v1365
    %1581 = vmatprep.subr.mxu0 0.0
    %1582 = vmatpush1.msra.mxu0 %v1364
    %1583 = vmatprep.subr.mxu0 0.0
    %1584 = vmatpush2.msra.mxu0 0.0
    %1585 = vmatprep.subr.mxu0 0.0
    %1586 = vmatpush2.msra.mxu0 0.0
    %1587 = vmatprep.subr.mxu0 0.0
    %1588 = vmatpush2.msra.mxu0 0.0
    %1589 = vmatprep.subr.mxu0 0.0
    %1590 = vmatpush2.msra.mxu0 0.0
    %1591 = vmatprep.subr.mxu0 0.0
    %1592 = vmatpush2.msra.mxu0 0.0
    %1593 = vmatprep.subr.mxu0 0.0
    %1594 = vmatpush2.msra.mxu0 0.0
    %1595 = vmatprep.subr.mxu0 0.0
    %1596 = vmatpush2.msra.mxu0 0.0
    %1597 = vmatprep.subr.mxu0 0.0
    %1598 = vmatpush2.msra.mxu0 0.0
    %1599 = vmatprep.subr.mxu0 0.0
    %1600 = vmatpush2.msra.mxu0 0.0
    %1601 = vmatprep.subr.mxu0 0.0
    %1602 = vmatpush2.msra.mxu0 0.0
    %1603 = vmatprep.subr.mxu0 0.0
    %1604 = vmatpush2.msra.mxu0 0.0
    %1605 = vmatprep.subr.mxu0 0.0
    %1606 = vmatpush2.msra.mxu0 0.0
    %1607 = vmatprep.subr.mxu0 0.0
    %1608 = vmatpush2.msra.mxu0 0.0
    %1609 = vmatprep.subr.mxu0 0.0
    %1610 = vmatpush2.msra.mxu0 0.0
    %1611 = vmatprep.subr.mxu0 0.0
    %1612 = vmatpush2.msra.mxu0 0.0
    %1613 = vmatprep.subr.mxu0 0.0
    %1614 = vmatpush2.msra.mxu0 0.0
    %1615 = vmatprep.mubr.f32.mxu0 0.0
    %1616 = vmatmul.mubr.f32.gmra.mxu0 %v1549
    %v1617 = vpop.f32.mrf.mxu0
    %v1618 = vadd.f32 %v1545, %v1617
    %v1619 = vpop.f32.mrf.mxu0
    %1620 = vdwg.mxu0
    %v1621 = vld [vmem:[%s51] sm:$0xff]
    %v1622 = vld [vmem:[%s53] sm:$0x3]
    %v1623 = vld [vmem:[%s55] sm:$0xff]
    %v1624 = vld [vmem:[%s57] sm:$0xff]
    %v1625 = vld [vmem:[%s59] sm:$0x3]
    %v1626 = vld [vmem:[%s61] sm:$0xff]
    %v1627 = vld [vmem:[%s63] sm:$0xff]
    %v1628 = vld [vmem:[%s65] sm:$0x1]
    %v1629 = vld [vmem:[%s67] sm:$0xff]
    %v1630 = vld [vmem:[%s67 + $0x8] sm:$0xff]
    %v1631 = vld [vmem:[%s67 + $0x10] sm:$0xff]
    %v1632 = vld [vmem:[%s67 + $0x18] sm:$0xff]
    %v1633 = vld [vmem:[%s69] sm:$0x1]
    %v1634 = vld [vmem:[%s71] sm:$0xff]
    %v1635 = vld [vmem:[%s73] sm:$0x3]
    %v1636 = vld [vmem:[%s75] sm:$0xff]
    %v1637 = vld [vmem:[%s77] sm:$0xff]
    %v1638 = vld [vmem:[%s79] sm:$0x1]
    %v1639 = vld [vmem:[%s81] sm:$0xff]
    %v1640 = vld [vmem:[%s81 + $0x8] sm:$0xff]
    %v1641 = vld [vmem:[%s81 + $0x10] sm:$0xff]
    %v1642 = vld [vmem:[%s81 + $0x18] sm:$0xff]
    %v1643 = vld [vmem:[%s83] sm:$0x1]
    %v1645 = vlaneseq
    %v1646 = vshrl.u32 %v1645, 7
    %v1647 = vsub.s32 0, %v1646
    %v1648 = vrot.slane %v1628, %v1647
    %v1651 = vsel %vm385, %v1283, 0
    %v1654 = vsel %vm385, %v1284, 0
    %1656 = vmatprep.subr.mxu0 0.0
    %1657 = vmatpush1.msra.mxu0 0.0
    %1658 = vmatprep.subr.mxu0 0.0
    %1659 = vmatpush1.msra.mxu0 0.0
    %1660 = vmatprep.subr.mxu0 0.0
    %1661 = vmatpush1.msra.mxu0 0.0
    %1662 = vmatprep.subr.mxu0 0.0
    %1663 = vmatpush1.msra.mxu0 0.0
    %1664 = vmatprep.subr.mxu0 0.0
    %1665 = vmatpush1.msra.mxu0 0.0
    %1666 = vmatprep.subr.mxu0 0.0
    %1667 = vmatpush1.msra.mxu0 0.0
    %1668 = vmatprep.subr.mxu0 0.0
    %1669 = vmatpush1.msra.mxu0 0.0
    %1670 = vmatprep.subr.mxu0 0.0
    %1671 = vmatpush1.msra.mxu0 0.0
    %1672 = vmatprep.subr.mxu0 0.0
    %1673 = vmatpush1.msra.mxu0 0.0
    %1674 = vmatprep.subr.mxu0 0.0
    %1675 = vmatpush1.msra.mxu0 0.0
    %1676 = vmatprep.subr.mxu0 0.0
    %1677 = vmatpush1.msra.mxu0 0.0
    %1678 = vmatprep.subr.mxu0 0.0
    %1679 = vmatpush1.msra.mxu0 0.0
    %1680 = vmatprep.subr.mxu0 0.0
    %1681 = vmatpush1.msra.mxu0 0.0
    %1682 = vmatprep.subr.mxu0 0.0
    %1683 = vmatpush1.msra.mxu0 0.0
    %1684 = vmatprep.subr.mxu0 0.0
    %1685 = vmatpush1.msra.mxu0 0.0
    %1686 = vmatprep.subr.mxu0 0.0
    %1687 = vmatpush1.msra.mxu0 %v1627
    %1688 = vmatprep.subr.mxu0 0.0
    %1689 = vmatpush2.msra.mxu0 0.0
    %1690 = vmatprep.subr.mxu0 0.0
    %1691 = vmatpush2.msra.mxu0 0.0
    %1692 = vmatprep.subr.mxu0 0.0
    %1693 = vmatpush2.msra.mxu0 0.0
    %1694 = vmatprep.subr.mxu0 0.0
    %1695 = vmatpush2.msra.mxu0 0.0
    %1696 = vmatprep.subr.mxu0 0.0
    %1697 = vmatpush2.msra.mxu0 0.0
    %1698 = vmatprep.subr.mxu0 0.0
    %1699 = vmatpush2.msra.mxu0 0.0
    %1700 = vmatprep.subr.mxu0 0.0
    %1701 = vmatpush2.msra.mxu0 0.0
    %1702 = vmatprep.subr.mxu0 0.0
    %1703 = vmatpush2.msra.mxu0 0.0
    %1704 = vmatprep.subr.mxu0 0.0
    %1705 = vmatpush2.msra.mxu0 0.0
    %1706 = vmatprep.subr.mxu0 0.0
    %1707 = vmatpush2.msra.mxu0 0.0
    %1708 = vmatprep.subr.mxu0 0.0
    %1709 = vmatpush2.msra.mxu0 0.0
    %1710 = vmatprep.subr.mxu0 0.0
    %1711 = vmatpush2.msra.mxu0 0.0
    %1712 = vmatprep.subr.mxu0 0.0
    %1713 = vmatpush2.msra.mxu0 0.0
    %1714 = vmatprep.subr.mxu0 0.0
    %1715 = vmatpush2.msra.mxu0 0.0
    %1716 = vmatprep.subr.mxu0 0.0
    %1717 = vmatpush2.msra.mxu0 0.0
    %1718 = vmatprep.subr.mxu0 0.0
    %1719 = vmatpush2.msra.mxu0 0.0
    %1720 = vmatprep.mubr.f32.mxu0 0.0
    %1721 = vmatmul.mubr.f32.gmra.mxu0 %v1651
    %v1722 = vpop.f32.mrf.mxu0
    %v1723 = vadd.f32 %v1648, %v1722
    %v1724 = vpop.f32.mrf.mxu0
    %1725 = vmatprep.mubr.f32.mxu0 0.0
    %1726 = vmatmul.mubr.f32.gmra.mxu0 %v1654
    %v1727 = vpop.f32.mrf.mxu0
    %v1728 = vadd.f32 %v1648, %v1727
    %v1729 = vpop.f32.mrf.mxu0
    %1730 = vdwg.mxu0
    %1731 = vmatprep.subr.mxu0 0.0
    %1732 = vmatpush1.msra.mxu0 0.0
    %1733 = vmatprep.subr.mxu0 0.0
    %1734 = vmatpush1.msra.mxu0 0.0
    %1735 = vmatprep.subr.mxu0 0.0
    %1736 = vmatpush1.msra.mxu0 0.0
    %1737 = vmatprep.subr.mxu0 0.0
    %1738 = vmatpush1.msra.mxu0 0.0
    %1739 = vmatprep.subr.mxu0 0.0
    %1740 = vmatpush1.msra.mxu0 0.0
    %1741 = vmatprep.subr.mxu0 0.0
    %1742 = vmatpush1.msra.mxu0 0.0
    %1743 = vmatprep.subr.mxu0 0.0
    %1744 = vmatpush1.msra.mxu0 0.0
    %1745 = vmatprep.subr.mxu0 0.0
    %1746 = vmatpush1.msra.mxu0 0.0
    %1747 = vmatprep.subr.mxu0 0.0
    %1748 = vmatpush1.msra.mxu0 0.0
    %1749 = vmatprep.subr.mxu0 0.0
    %1750 = vmatpush1.msra.mxu0 0.0
    %1751 = vmatprep.subr.mxu0 0.0
    %1752 = vmatpush1.msra.mxu0 0.0
    %1753 = vmatprep.subr.mxu0 0.0
    %1754 = vmatpush1.msra.mxu0 0.0
    %1755 = vmatprep.subr.mxu0 0.0
    %1756 = vmatpush1.msra.mxu0 0.0
    %1757 = vmatprep.subr.mxu0 0.0
    %1758 = vmatpush1.msra.mxu0 0.0
    %1759 = vmatprep.subr.mxu0 0.0
    %1760 = vmatpush1.msra.mxu0 0.0
    %1761 = vmatprep.subr.mxu0 0.0
    %1762 = vmatpush1.msra.mxu0 %v1355
    %1763 = vmatprep.subr.mxu0 0.0
    %1764 = vmatpush2.msra.mxu0 0.0
    %1765 = vmatprep.subr.mxu0 0.0
    %1766 = vmatpush2.msra.mxu0 0.0
    %1767 = vmatprep.subr.mxu0 0.0
    %1768 = vmatpush2.msra.mxu0 0.0
    %1769 = vmatprep.subr.mxu0 0.0
    %1770 = vmatpush2.msra.mxu0 0.0
    %1771 = vmatprep.subr.mxu0 0.0
    %1772 = vmatpush2.msra.mxu0 0.0
    %1773 = vmatprep.subr.mxu0 0.0
    %1774 = vmatpush2.msra.mxu0 0.0
    %1775 = vmatprep.subr.mxu0 0.0
    %1776 = vmatpush2.msra.mxu0 0.0
    %1777 = vmatprep.subr.mxu0 0.0
    %1778 = vmatpush2.msra.mxu0 0.0
    %1779 = vmatprep.subr.mxu0 0.0
    %1780 = vmatpush2.msra.mxu0 0.0
    %1781 = vmatprep.subr.mxu0 0.0
    %1782 = vmatpush2.msra.mxu0 0.0
    %1783 = vmatprep.subr.mxu0 0.0
    %1784 = vmatpush2.msra.mxu0 0.0
    %1785 = vmatprep.subr.mxu0 0.0
    %1786 = vmatpush2.msra.mxu0 0.0
    %1787 = vmatprep.subr.mxu0 0.0
    %1788 = vmatpush2.msra.mxu0 0.0
    %1789 = vmatprep.subr.mxu0 0.0
    %1790 = vmatpush2.msra.mxu0 0.0
    %1791 = vmatprep.subr.mxu0 0.0
    %1792 = vmatpush2.msra.mxu0 0.0
    %1793 = vmatprep.subr.mxu0 0.0
    %1794 = vmatpush2.msra.mxu0 0.0
    %1795 = vmatprep.mubr.f32.mxu0 0.0
    %1796 = vmatmul.mubr.f32.gmra.mxu0 %v387
    %v1797 = vpop.f32.mrf.mxu0
    %v1798 = vadd.f32 0.0, %v1797
    %v1799 = vpop.f32.mrf.mxu0
    %1800 = vmatprep.mubr.f32.mxu0 0.0
    %1801 = vmatmul.mubr.f32.gmra.mxu0 %v390
    %v1802 = vpop.f32.mrf.mxu0
    %v1803 = vadd.f32 0.0, %v1802
    %v1804 = vpop.f32.mrf.mxu0
    %1805 = vdwg.mxu0
    %1806 = vmatprep.subr.mxu0 0.0
    %1807 = vmatpush1.msra.mxu0 0.0
    %1808 = vmatprep.subr.mxu0 0.0
    %1809 = vmatpush1.msra.mxu0 0.0
    %1810 = vmatprep.subr.mxu0 0.0
    %1811 = vmatpush1.msra.mxu0 0.0
    %1812 = vmatprep.subr.mxu0 0.0
    %1813 = vmatpush1.msra.mxu0 0.0
    %1814 = vmatprep.subr.mxu0 0.0
    %1815 = vmatpush1.msra.mxu0 0.0
    %1816 = vmatprep.subr.mxu0 0.0
    %1817 = vmatpush1.msra.mxu0 0.0
    %1818 = vmatprep.subr.mxu0 0.0
    %1819 = vmatpush1.msra.mxu0 0.0
    %1820 = vmatprep.subr.mxu0 0.0
    %1821 = vmatpush1.msra.mxu0 0.0
    %1822 = vmatprep.subr.mxu0 0.0
    %1823 = vmatpush1.msra.mxu0 0.0
    %1824 = vmatprep.subr.mxu0 0.0
    %1825 = vmatpush1.msra.mxu0 0.0
    %1826 = vmatprep.subr.mxu0 0.0
    %1827 = vmatpush1.msra.mxu0 0.0
    %1828 = vmatprep.subr.mxu0 0.0
    %1829 = vmatpush1.msra.mxu0 0.0
    %1830 = vmatprep.subr.mxu0 0.0
    %1831 = vmatpush1.msra.mxu0 0.0
    %1832 = vmatprep.subr.mxu0 0.0
    %1833 = vmatpush1.msra.mxu0 0.0
    %1834 = vmatprep.subr.mxu0 0.0
    %1835 = vmatpush1.msra.mxu0 0.0
    %1836 = vmatprep.subr.mxu0 0.0
    %1837 = vmatpush1.msra.mxu0 %v1355
    %1838 = vmatprep.subr.mxu0 0.0
    %1839 = vmatpush2.msra.mxu0 0.0
    %1840 = vmatprep.subr.mxu0 0.0
    %1841 = vmatpush2.msra.mxu0 0.0
    %1842 = vmatprep.subr.mxu0 0.0
    %1843 = vmatpush2.msra.mxu0 0.0
    %1844 = vmatprep.subr.mxu0 0.0
    %1845 = vmatpush2.msra.mxu0 0.0
    %1846 = vmatprep.subr.mxu0 0.0
    %1847 = vmatpush2.msra.mxu0 0.0
    %1848 = vmatprep.subr.mxu0 0.0
    %1849 = vmatpush2.msra.mxu0 0.0
    %1850 = vmatprep.subr.mxu0 0.0
    %1851 = vmatpush2.msra.mxu0 0.0
    %1852 = vmatprep.subr.mxu0 0.0
    %1853 = vmatpush2.msra.mxu0 0.0
    %1854 = vmatprep.subr.mxu0 0.0
    %1855 = vmatpush2.msra.mxu0 0.0
    %1856 = vmatprep.subr.mxu0 0.0
    %1857 = vmatpush2.msra.mxu0 0.0
    %1858 = vmatprep.subr.mxu0 0.0
    %1859 = vmatpush2.msra.mxu0 0.0
    %1860 = vmatprep.subr.mxu0 0.0
    %1861 = vmatpush2.msra.mxu0 0.0
    %1862 = vmatprep.subr.mxu0 0.0
    %1863 = vmatpush2.msra.mxu0 0.0
    %1864 = vmatprep.subr.mxu0 0.0
    %1865 = vmatpush2.msra.mxu0 0.0
    %1866 = vmatprep.subr.mxu0 0.0
    %1867 = vmatpush2.msra.mxu0 0.0
    %1868 = vmatprep.subr.mxu0 0.0
    %1869 = vmatpush2.msra.mxu0 0.0
    %1870 = vmatprep.mubr.f32.mxu0 0.0
    %1871 = vmatmul.mubr.f32.gmra.mxu0 %v468
    %v1872 = vpop.f32.mrf.mxu0
    %v1873 = vadd.f32 0.0, %v1872
    %v1874 = vpop.f32.mrf.mxu0
    %1875 = vmatprep.mubr.f32.mxu0 0.0
    %1876 = vmatmul.mubr.f32.gmra.mxu0 %v471
    %v1877 = vpop.f32.mrf.mxu0
    %v1878 = vadd.f32 0.0, %v1877
    %v1879 = vpop.f32.mrf.mxu0
    %1880 = vdwg.mxu0
    %v1881 = vadd.f32 %v1798, %v1873
    %v1882 = vadd.f32 %v1803, %v1878
    %v1883 = vmul.f32 %v1881, 0.5
    %v1884 = vmul.f32 %v1882, 0.5
    %v1886 = vsel %vm385, %v1883, 0
    %v1889 = vsel %vm385, %v1884, 0
    %1891 = vmatprep.subr.mxu0 0.0
    %1892 = vmatpush1.msra.mxu0 0.0
    %1893 = vmatprep.subr.mxu0 0.0
    %1894 = vmatpush1.msra.mxu0 0.0
    %1895 = vmatprep.subr.mxu0 0.0
    %1896 = vmatpush1.msra.mxu0 0.0
    %1897 = vmatprep.subr.mxu0 0.0
    %1898 = vmatpush1.msra.mxu0 0.0
    %1899 = vmatprep.subr.mxu0 0.0
    %1900 = vmatpush1.msra.mxu0 0.0
    %1901 = vmatprep.subr.mxu0 0.0
    %1902 = vmatpush1.msra.mxu0 0.0
    %1903 = vmatprep.subr.mxu0 0.0
    %1904 = vmatpush1.msra.mxu0 0.0
    %1905 = vmatprep.subr.mxu0 0.0
    %1906 = vmatpush1.msra.mxu0 0.0
    %1907 = vmatprep.subr.mxu0 0.0
    %1908 = vmatpush1.msra.mxu0 0.0
    %1909 = vmatprep.subr.mxu0 0.0
    %1910 = vmatpush1.msra.mxu0 0.0
    %1911 = vmatprep.subr.mxu0 0.0
    %1912 = vmatpush1.msra.mxu0 0.0
    %1913 = vmatprep.subr.mxu0 0.0
    %1914 = vmatpush1.msra.mxu0 0.0
    %1915 = vmatprep.subr.mxu0 0.0
    %1916 = vmatpush1.msra.mxu0 0.0
    %1917 = vmatprep.subr.mxu0 0.0
    %1918 = vmatpush1.msra.mxu0 0.0
    %1919 = vmatprep.subr.mxu0 0.0
    %1920 = vmatpush1.msra.mxu0 0.0
    %1921 = vmatprep.subr.mxu0 0.0
    %1922 = vmatpush1.msra.mxu0 %v1621
    %1923 = vmatprep.subr.mxu0 0.0
    %1924 = vmatpush2.msra.mxu0 0.0
    %1925 = vmatprep.subr.mxu0 0.0
    %1926 = vmatpush2.msra.mxu0 0.0
    %1927 = vmatprep.subr.mxu0 0.0
    %1928 = vmatpush2.msra.mxu0 0.0
    %1929 = vmatprep.subr.mxu0 0.0
    %1930 = vmatpush2.msra.mxu0 0.0
    %1931 = vmatprep.subr.mxu0 0.0
    %1932 = vmatpush2.msra.mxu0 0.0
    %1933 = vmatprep.subr.mxu0 0.0
    %1934 = vmatpush2.msra.mxu0 0.0
    %1935 = vmatprep.subr.mxu0 0.0
    %1936 = vmatpush2.msra.mxu0 0.0
    %1937 = vmatprep.subr.mxu0 0.0
    %1938 = vmatpush2.msra.mxu0 0.0
    %1939 = vmatprep.subr.mxu0 0.0
    %1940 = vmatpush2.msra.mxu0 0.0
    %1941 = vmatprep.subr.mxu0 0.0
    %1942 = vmatpush2.msra.mxu0 0.0
    %1943 = vmatprep.subr.mxu0 0.0
    %1944 = vmatpush2.msra.mxu0 0.0
    %1945 = vmatprep.subr.mxu0 0.0
    %1946 = vmatpush2.msra.mxu0 0.0
    %1947 = vmatprep.subr.mxu0 0.0
    %1948 = vmatpush2.msra.mxu0 0.0
    %1949 = vmatprep.subr.mxu0 0.0
    %1950 = vmatpush2.msra.mxu0 0.0
    %1951 = vmatprep.subr.mxu0 0.0
    %1952 = vmatpush2.msra.mxu0 0.0
    %1953 = vmatprep.subr.mxu0 0.0
    %1954 = vmatpush2.msra.mxu0 0.0
    %1955 = vmatprep.mubr.f32.mxu0 0.0
    %1956 = vmatmul.mubr.f32.gmra.mxu0 %v1886
    %v1957 = vpop.f32.mrf.mxu0
    %v1958 = vadd.f32 0.0, %v1957
    %v1959 = vpop.f32.mrf.mxu0
    %1960 = vmatprep.mubr.f32.mxu0 0.0
    %1961 = vmatmul.mubr.f32.gmra.mxu0 %v1889
    %v1962 = vpop.f32.mrf.mxu0
    %v1963 = vadd.f32 0.0, %v1962
    %v1964 = vpop.f32.mrf.mxu0
    %1965 = vdwg.mxu0
    %v1966 = vadd.f32 %v1723, %v1958
    %v1967 = vadd.f32 %v1728, %v1963
    %v1968 = vsub.f32 %v1798, %v1873
    %v1969 = vsub.f32 %v1803, %v1878
    %v1970 = vand.u32 2147483647, %v1968
    %v1971 = vand.u32 2147483647, %v1969
    %v1972 = vmul.f32 %v1970, 0.5
    %v1973 = vmul.f32 %v1971, 0.5
    %v1975 = vsel %vm385, %v1972, 0
    %v1978 = vsel %vm385, %v1973, 0
    %1980 = vmatprep.subr.mxu0 0.0
    %1981 = vmatpush1.msra.mxu0 0.0
    %1982 = vmatprep.subr.mxu0 0.0
    %1983 = vmatpush1.msra.mxu0 0.0
    %1984 = vmatprep.subr.mxu0 0.0
    %1985 = vmatpush1.msra.mxu0 0.0
    %1986 = vmatprep.subr.mxu0 0.0
    %1987 = vmatpush1.msra.mxu0 0.0
    %1988 = vmatprep.subr.mxu0 0.0
    %1989 = vmatpush1.msra.mxu0 0.0
    %1990 = vmatprep.subr.mxu0 0.0
    %1991 = vmatpush1.msra.mxu0 0.0
    %1992 = vmatprep.subr.mxu0 0.0
    %1993 = vmatpush1.msra.mxu0 0.0
    %1994 = vmatprep.subr.mxu0 0.0
    %1995 = vmatpush1.msra.mxu0 0.0
    %1996 = vmatprep.subr.mxu0 0.0
    %1997 = vmatpush1.msra.mxu0 0.0
    %1998 = vmatprep.subr.mxu0 0.0
    %1999 = vmatpush1.msra.mxu0 0.0
    %2000 = vmatprep.subr.mxu0 0.0
    %2001 = vmatpush1.msra.mxu0 0.0
    %2002 = vmatprep.subr.mxu0 0.0
    %2003 = vmatpush1.msra.mxu0 0.0
    %2004 = vmatprep.subr.mxu0 0.0
    %2005 = vmatpush1.msra.mxu0 0.0
    %2006 = vmatprep.subr.mxu0 0.0
    %2007 = vmatpush1.msra.mxu0 0.0
    %2008 = vmatprep.subr.mxu0 0.0
    %2009 = vmatpush1.msra.mxu0 0.0
    %2010 = vmatprep.subr.mxu0 0.0
    %2011 = vmatpush1.msra.mxu0 %v1624
    %2012 = vmatprep.subr.mxu0 0.0
    %2013 = vmatpush2.msra.mxu0 0.0
    %2014 = vmatprep.subr.mxu0 0.0
    %2015 = vmatpush2.msra.mxu0 0.0
    %2016 = vmatprep.subr.mxu0 0.0
    %2017 = vmatpush2.msra.mxu0 0.0
    %2018 = vmatprep.subr.mxu0 0.0
    %2019 = vmatpush2.msra.mxu0 0.0
    %2020 = vmatprep.subr.mxu0 0.0
    %2021 = vmatpush2.msra.mxu0 0.0
    %2022 = vmatprep.subr.mxu0 0.0
    %2023 = vmatpush2.msra.mxu0 0.0
    %2024 = vmatprep.subr.mxu0 0.0
    %2025 = vmatpush2.msra.mxu0 0.0
    %2026 = vmatprep.subr.mxu0 0.0
    %2027 = vmatpush2.msra.mxu0 0.0
    %2028 = vmatprep.subr.mxu0 0.0
    %2029 = vmatpush2.msra.mxu0 0.0
    %2030 = vmatprep.subr.mxu0 0.0
    %2031 = vmatpush2.msra.mxu0 0.0
    %2032 = vmatprep.subr.mxu0 0.0
    %2033 = vmatpush2.msra.mxu0 0.0
    %2034 = vmatprep.subr.mxu0 0.0
    %2035 = vmatpush2.msra.mxu0 0.0
    %2036 = vmatprep.subr.mxu0 0.0
    %2037 = vmatpush2.msra.mxu0 0.0
    %2038 = vmatprep.subr.mxu0 0.0
    %2039 = vmatpush2.msra.mxu0 0.0
    %2040 = vmatprep.subr.mxu0 0.0
    %2041 = vmatpush2.msra.mxu0 0.0
    %2042 = vmatprep.subr.mxu0 0.0
    %2043 = vmatpush2.msra.mxu0 0.0
    %2044 = vmatprep.mubr.f32.mxu0 0.0
    %2045 = vmatmul.mubr.f32.gmra.mxu0 %v1975
    %v2046 = vpop.f32.mrf.mxu0
    %v2047 = vadd.f32 0.0, %v2046
    %v2048 = vpop.f32.mrf.mxu0
    %2049 = vmatprep.mubr.f32.mxu0 0.0
    %2050 = vmatmul.mubr.f32.gmra.mxu0 %v1978
    %v2051 = vpop.f32.mrf.mxu0
    %v2052 = vadd.f32 0.0, %v2051
    %v2053 = vpop.f32.mrf.mxu0
    %2054 = vdwg.mxu0
    %v2055 = vadd.f32 %v1966, %v2047
    %v2056 = vadd.f32 %v1967, %v2052
    %2057 = vmatprep.subr.mxu0 0.0
    %2058 = vmatpush1.msra.mxu0 0.0
    %2059 = vmatprep.subr.mxu0 0.0
    %2060 = vmatpush1.msra.mxu0 0.0
    %2061 = vmatprep.subr.mxu0 0.0
    %2062 = vmatpush1.msra.mxu0 0.0
    %2063 = vmatprep.subr.mxu0 0.0
    %2064 = vmatpush1.msra.mxu0 0.0
    %2065 = vmatprep.subr.mxu0 0.0
    %2066 = vmatpush1.msra.mxu0 0.0
    %2067 = vmatprep.subr.mxu0 0.0
    %2068 = vmatpush1.msra.mxu0 0.0
    %2069 = vmatprep.subr.mxu0 0.0
    %2070 = vmatpush1.msra.mxu0 0.0
    %2071 = vmatprep.subr.mxu0 0.0
    %2072 = vmatpush1.msra.mxu0 0.0
    %2073 = vmatprep.subr.mxu0 0.0
    %2074 = vmatpush1.msra.mxu0 0.0
    %2075 = vmatprep.subr.mxu0 0.0
    %2076 = vmatpush1.msra.mxu0 0.0
    %2077 = vmatprep.subr.mxu0 0.0
    %2078 = vmatpush1.msra.mxu0 0.0
    %2079 = vmatprep.subr.mxu0 0.0
    %2080 = vmatpush1.msra.mxu0 0.0
    %2081 = vmatprep.subr.mxu0 0.0
    %2082 = vmatpush1.msra.mxu0 0.0
    %2083 = vmatprep.subr.mxu0 0.0
    %2084 = vmatpush1.msra.mxu0 0.0
    %2085 = vmatprep.subr.mxu0 0.0
    %2086 = vmatpush1.msra.mxu0 0.0
    %2087 = vmatprep.subr.mxu0 0.0
    %2088 = vmatpush1.msra.mxu0 %v272
    %2089 = vmatprep.subr.mxu0 0.0
    %2090 = vmatpush2.msra.mxu0 0.0
    %2091 = vmatprep.subr.mxu0 0.0
    %2092 = vmatpush2.msra.mxu0 0.0
    %2093 = vmatprep.subr.mxu0 0.0
    %2094 = vmatpush2.msra.mxu0 0.0
    %2095 = vmatprep.subr.mxu0 0.0
    %2096 = vmatpush2.msra.mxu0 0.0
    %2097 = vmatprep.subr.mxu0 0.0
    %2098 = vmatpush2.msra.mxu0 0.0
    %2099 = vmatprep.subr.mxu0 0.0
    %2100 = vmatpush2.msra.mxu0 0.0
    %2101 = vmatprep.subr.mxu0 0.0
    %2102 = vmatpush2.msra.mxu0 0.0
    %2103 = vmatprep.subr.mxu0 0.0
    %2104 = vmatpush2.msra.mxu0 0.0
    %2105 = vmatprep.subr.mxu0 0.0
    %2106 = vmatpush2.msra.mxu0 0.0
    %2107 = vmatprep.subr.mxu0 0.0
    %2108 = vmatpush2.msra.mxu0 0.0
    %2109 = vmatprep.subr.mxu0 0.0
    %2110 = vmatpush2.msra.mxu0 0.0
    %2111 = vmatprep.subr.mxu0 0.0
    %2112 = vmatpush2.msra.mxu0 0.0
    %2113 = vmatprep.subr.mxu0 0.0
    %2114 = vmatpush2.msra.mxu0 0.0
    %2115 = vmatprep.subr.mxu0 0.0
    %2116 = vmatpush2.msra.mxu0 0.0
    %2117 = vmatprep.subr.mxu0 0.0
    %2118 = vmatpush2.msra.mxu0 0.0
    %2119 = vmatprep.subr.mxu0 0.0
    %2120 = vmatpush2.msra.mxu0 0.0
    %2121 = vmatprep.mubr.f32.mxu0 0.0
    %2122 = vmatmul.mubr.f32.gmra.mxu0 %v387
    %v2123 = vpop.f32.mrf.mxu0
    %v2124 = vadd.f32 0.0, %v2123
    %v2125 = vpop.f32.mrf.mxu0
    %2126 = vmatprep.mubr.f32.mxu0 0.0
    %2127 = vmatmul.mubr.f32.gmra.mxu0 %v390
    %v2128 = vpop.f32.mrf.mxu0
    %v2129 = vadd.f32 0.0, %v2128
    %v2130 = vpop.f32.mrf.mxu0
    %2131 = vdwg.mxu0
    %2132 = vmatprep.subr.mxu0 0.0
    %2133 = vmatpush1.msra.mxu0 0.0
    %2134 = vmatprep.subr.mxu0 0.0
    %2135 = vmatpush1.msra.mxu0 0.0
    %2136 = vmatprep.subr.mxu0 0.0
    %2137 = vmatpush1.msra.mxu0 0.0
    %2138 = vmatprep.subr.mxu0 0.0
    %2139 = vmatpush1.msra.mxu0 0.0
    %2140 = vmatprep.subr.mxu0 0.0
    %2141 = vmatpush1.msra.mxu0 0.0
    %2142 = vmatprep.subr.mxu0 0.0
    %2143 = vmatpush1.msra.mxu0 0.0
    %2144 = vmatprep.subr.mxu0 0.0
    %2145 = vmatpush1.msra.mxu0 0.0
    %2146 = vmatprep.subr.mxu0 0.0
    %2147 = vmatpush1.msra.mxu0 0.0
    %2148 = vmatprep.subr.mxu0 0.0
    %2149 = vmatpush1.msra.mxu0 0.0
    %2150 = vmatprep.subr.mxu0 0.0
    %2151 = vmatpush1.msra.mxu0 0.0
    %2152 = vmatprep.subr.mxu0 0.0
    %2153 = vmatpush1.msra.mxu0 0.0
    %2154 = vmatprep.subr.mxu0 0.0
    %2155 = vmatpush1.msra.mxu0 0.0
    %2156 = vmatprep.subr.mxu0 0.0
    %2157 = vmatpush1.msra.mxu0 0.0
    %2158 = vmatprep.subr.mxu0 0.0
    %2159 = vmatpush1.msra.mxu0 0.0
    %2160 = vmatprep.subr.mxu0 0.0
    %2161 = vmatpush1.msra.mxu0 0.0
    %2162 = vmatprep.subr.mxu0 0.0
    %2163 = vmatpush1.msra.mxu0 %v272
    %2164 = vmatprep.subr.mxu0 0.0
    %2165 = vmatpush2.msra.mxu0 0.0
    %2166 = vmatprep.subr.mxu0 0.0
    %2167 = vmatpush2.msra.mxu0 0.0
    %2168 = vmatprep.subr.mxu0 0.0
    %2169 = vmatpush2.msra.mxu0 0.0
    %2170 = vmatprep.subr.mxu0 0.0
    %2171 = vmatpush2.msra.mxu0 0.0
    %2172 = vmatprep.subr.mxu0 0.0
    %2173 = vmatpush2.msra.mxu0 0.0
    %2174 = vmatprep.subr.mxu0 0.0
    %2175 = vmatpush2.msra.mxu0 0.0
    %2176 = vmatprep.subr.mxu0 0.0
    %2177 = vmatpush2.msra.mxu0 0.0
    %2178 = vmatprep.subr.mxu0 0.0
    %2179 = vmatpush2.msra.mxu0 0.0
    %2180 = vmatprep.subr.mxu0 0.0
    %2181 = vmatpush2.msra.mxu0 0.0
    %2182 = vmatprep.subr.mxu0 0.0
    %2183 = vmatpush2.msra.mxu0 0.0
    %2184 = vmatprep.subr.mxu0 0.0
    %2185 = vmatpush2.msra.mxu0 0.0
    %2186 = vmatprep.subr.mxu0 0.0
    %2187 = vmatpush2.msra.mxu0 0.0
    %2188 = vmatprep.subr.mxu0 0.0
    %2189 = vmatpush2.msra.mxu0 0.0
    %2190 = vmatprep.subr.mxu0 0.0
    %2191 = vmatpush2.msra.mxu0 0.0
    %2192 = vmatprep.subr.mxu0 0.0
    %2193 = vmatpush2.msra.mxu0 0.0
    %2194 = vmatprep.subr.mxu0 0.0
    %2195 = vmatpush2.msra.mxu0 0.0
    %2196 = vmatprep.mubr.f32.mxu0 0.0
    %2197 = vmatmul.mubr.f32.gmra.mxu0 %v468
    %v2198 = vpop.f32.mrf.mxu0
    %v2199 = vadd.f32 0.0, %v2198
    %v2200 = vpop.f32.mrf.mxu0
    %2201 = vmatprep.mubr.f32.mxu0 0.0
    %2202 = vmatmul.mubr.f32.gmra.mxu0 %v471
    %v2203 = vpop.f32.mrf.mxu0
    %v2204 = vadd.f32 0.0, %v2203
    %v2205 = vpop.f32.mrf.mxu0
    %2206 = vdwg.mxu0
    %v2207 = vadd.f32 %v2124, %v2199
    %v2208 = vadd.f32 %v2129, %v2204
    %v2209 = vmul.f32 %v2207, 0.5
    %v2210 = vmul.f32 %v2208, 0.5
    %vm2211 = vcmask 15360
    %v2213 = vsel %vm2211, %v2209, 0
    %v2216 = vsel %vm2211, %v2210, 0
    %vm2218 = vcmask 1041408
    %v2220 = vsel %vm2218, %v1622, 0
    %2222 = vmatprep.subr.mxu0 0.0
    %2223 = vmatpush1.msra.mxu0 0.0
    %2224 = vmatprep.subr.mxu0 0.0
    %2225 = vmatpush1.msra.mxu0 0.0
    %2226 = vmatprep.subr.mxu0 0.0
    %2227 = vmatpush1.msra.mxu0 0.0
    %2228 = vmatprep.subr.mxu0 0.0
    %2229 = vmatpush1.msra.mxu0 0.0
    %2230 = vmatprep.subr.mxu0 0.0
    %2231 = vmatpush1.msra.mxu0 0.0
    %2232 = vmatprep.subr.mxu0 0.0
    %2233 = vmatpush1.msra.mxu0 0.0
    %2234 = vmatprep.subr.mxu0 0.0
    %2235 = vmatpush1.msra.mxu0 0.0
    %2236 = vmatprep.subr.mxu0 0.0
    %2237 = vmatpush1.msra.mxu0 0.0
    %2238 = vmatprep.subr.mxu0 0.0
    %2239 = vmatpush1.msra.mxu0 0.0
    %2240 = vmatprep.subr.mxu0 0.0
    %2241 = vmatpush1.msra.mxu0 0.0
    %2242 = vmatprep.subr.mxu0 0.0
    %2243 = vmatpush1.msra.mxu0 0.0
    %2244 = vmatprep.subr.mxu0 0.0
    %2245 = vmatpush1.msra.mxu0 0.0
    %2246 = vmatprep.subr.mxu0 0.0
    %2247 = vmatpush1.msra.mxu0 0.0
    %2248 = vmatprep.subr.mxu0 0.0
    %2249 = vmatpush1.msra.mxu0 0.0
    %2250 = vmatprep.subr.mxu0 0.0
    %2251 = vmatpush1.msra.mxu0 0.0
    %2252 = vmatprep.subr.mxu0 0.0
    %2253 = vmatpush1.msra.mxu0 %v2220
    %2254 = vmatprep.subr.mxu0 0.0
    %2255 = vmatpush2.msra.mxu0 0.0
    %2256 = vmatprep.subr.mxu0 0.0
    %2257 = vmatpush2.msra.mxu0 0.0
    %2258 = vmatprep.subr.mxu0 0.0
    %2259 = vmatpush2.msra.mxu0 0.0
    %2260 = vmatprep.subr.mxu0 0.0
    %2261 = vmatpush2.msra.mxu0 0.0
    %2262 = vmatprep.subr.mxu0 0.0
    %2263 = vmatpush2.msra.mxu0 0.0
    %2264 = vmatprep.subr.mxu0 0.0
    %2265 = vmatpush2.msra.mxu0 0.0
    %2266 = vmatprep.subr.mxu0 0.0
    %2267 = vmatpush2.msra.mxu0 0.0
    %2268 = vmatprep.subr.mxu0 0.0
    %2269 = vmatpush2.msra.mxu0 0.0
    %2270 = vmatprep.subr.mxu0 0.0
    %2271 = vmatpush2.msra.mxu0 0.0
    %2272 = vmatprep.subr.mxu0 0.0
    %2273 = vmatpush2.msra.mxu0 0.0
    %2274 = vmatprep.subr.mxu0 0.0
    %2275 = vmatpush2.msra.mxu0 0.0
    %2276 = vmatprep.subr.mxu0 0.0
    %2277 = vmatpush2.msra.mxu0 0.0
    %2278 = vmatprep.subr.mxu0 0.0
    %2279 = vmatpush2.msra.mxu0 0.0
    %2280 = vmatprep.subr.mxu0 0.0
    %2281 = vmatpush2.msra.mxu0 0.0
    %2282 = vmatprep.subr.mxu0 0.0
    %2283 = vmatpush2.msra.mxu0 0.0
    %2284 = vmatprep.subr.mxu0 0.0
    %2285 = vmatpush2.msra.mxu0 0.0
    %2286 = vmatprep.mubr.f32.mxu0 0.0
    %2287 = vmatmul.mubr.f32.gmra.mxu0 %v2213
    %v2288 = vpop.f32.mrf.mxu0
    %v2289 = vadd.f32 0.0, %v2288
    %v2290 = vpop.f32.mrf.mxu0
    %2291 = vmatprep.mubr.f32.mxu0 0.0
    %2292 = vmatmul.mubr.f32.gmra.mxu0 %v2216
    %v2293 = vpop.f32.mrf.mxu0
    %v2294 = vadd.f32 0.0, %v2293
    %v2295 = vpop.f32.mrf.mxu0
    %2296 = vdwg.mxu0
    %v2297 = vadd.f32 %v2055, %v2289
    %v2298 = vadd.f32 %v2056, %v2294
    %v2299 = vsub.f32 %v2124, %v2199
    %v2300 = vsub.f32 %v2129, %v2204
    %v2301 = vand.u32 2147483647, %v2299
    %v2302 = vand.u32 2147483647, %v2300
    %v2303 = vmul.f32 %v2301, 0.5
    %v2304 = vmul.f32 %v2302, 0.5
    %v2306 = vsel %vm2211, %v2303, 0
    %v2309 = vsel %vm2211, %v2304, 0
    %v2312 = vsel %vm2218, %v1625, 0
    %2314 = vmatprep.subr.mxu0 0.0
    %2315 = vmatpush1.msra.mxu0 0.0
    %2316 = vmatprep.subr.mxu0 0.0
    %2317 = vmatpush1.msra.mxu0 0.0
    %2318 = vmatprep.subr.mxu0 0.0
    %2319 = vmatpush1.msra.mxu0 0.0
    %2320 = vmatprep.subr.mxu0 0.0
    %2321 = vmatpush1.msra.mxu0 0.0
    %2322 = vmatprep.subr.mxu0 0.0
    %2323 = vmatpush1.msra.mxu0 0.0
    %2324 = vmatprep.subr.mxu0 0.0
    %2325 = vmatpush1.msra.mxu0 0.0
    %2326 = vmatprep.subr.mxu0 0.0
    %2327 = vmatpush1.msra.mxu0 0.0
    %2328 = vmatprep.subr.mxu0 0.0
    %2329 = vmatpush1.msra.mxu0 0.0
    %2330 = vmatprep.subr.mxu0 0.0
    %2331 = vmatpush1.msra.mxu0 0.0
    %2332 = vmatprep.subr.mxu0 0.0
    %2333 = vmatpush1.msra.mxu0 0.0
    %2334 = vmatprep.subr.mxu0 0.0
    %2335 = vmatpush1.msra.mxu0 0.0
    %2336 = vmatprep.subr.mxu0 0.0
    %2337 = vmatpush1.msra.mxu0 0.0
    %2338 = vmatprep.subr.mxu0 0.0
    %2339 = vmatpush1.msra.mxu0 0.0
    %2340 = vmatprep.subr.mxu0 0.0
    %2341 = vmatpush1.msra.mxu0 0.0
    %2342 = vmatprep.subr.mxu0 0.0
    %2343 = vmatpush1.msra.mxu0 0.0
    %2344 = vmatprep.subr.mxu0 0.0
    %2345 = vmatpush1.msra.mxu0 %v2312
    %2346 = vmatprep.subr.mxu0 0.0
    %2347 = vmatpush2.msra.mxu0 0.0
    %2348 = vmatprep.subr.mxu0 0.0
    %2349 = vmatpush2.msra.mxu0 0.0
    %2350 = vmatprep.subr.mxu0 0.0
    %2351 = vmatpush2.msra.mxu0 0.0
    %2352 = vmatprep.subr.mxu0 0.0
    %2353 = vmatpush2.msra.mxu0 0.0
    %2354 = vmatprep.subr.mxu0 0.0
    %2355 = vmatpush2.msra.mxu0 0.0
    %2356 = vmatprep.subr.mxu0 0.0
    %2357 = vmatpush2.msra.mxu0 0.0
    %2358 = vmatprep.subr.mxu0 0.0
    %2359 = vmatpush2.msra.mxu0 0.0
    %2360 = vmatprep.subr.mxu0 0.0
    %2361 = vmatpush2.msra.mxu0 0.0
    %2362 = vmatprep.subr.mxu0 0.0
    %2363 = vmatpush2.msra.mxu0 0.0
    %2364 = vmatprep.subr.mxu0 0.0
    %2365 = vmatpush2.msra.mxu0 0.0
    %2366 = vmatprep.subr.mxu0 0.0
    %2367 = vmatpush2.msra.mxu0 0.0
    %2368 = vmatprep.subr.mxu0 0.0
    %2369 = vmatpush2.msra.mxu0 0.0
    %2370 = vmatprep.subr.mxu0 0.0
    %2371 = vmatpush2.msra.mxu0 0.0
    %2372 = vmatprep.subr.mxu0 0.0
    %2373 = vmatpush2.msra.mxu0 0.0
    %2374 = vmatprep.subr.mxu0 0.0
    %2375 = vmatpush2.msra.mxu0 0.0
    %2376 = vmatprep.subr.mxu0 0.0
    %2377 = vmatpush2.msra.mxu0 0.0
    %2378 = vmatprep.mubr.f32.mxu0 0.0
    %2379 = vmatmul.mubr.f32.gmra.mxu0 %v2306
    %v2380 = vpop.f32.mrf.mxu0
    %v2381 = vadd.f32 0.0, %v2380
    %v2382 = vpop.f32.mrf.mxu0
    %2383 = vmatprep.mubr.f32.mxu0 0.0
    %2384 = vmatmul.mubr.f32.gmra.mxu0 %v2309
    %v2385 = vpop.f32.mrf.mxu0
    %v2386 = vadd.f32 0.0, %v2385
    %v2387 = vpop.f32.mrf.mxu0
    %2388 = vdwg.mxu0
    %v2389 = vadd.f32 %v2297, %v2381
    %v2390 = vadd.f32 %v2298, %v2386
    %2391 = vmatprep.subr.mxu0 0.0
    %2392 = vmatpush1.msra.mxu0 0.0
    %2393 = vmatprep.subr.mxu0 0.0
    %2394 = vmatpush1.msra.mxu0 0.0
    %2395 = vmatprep.subr.mxu0 0.0
    %2396 = vmatpush1.msra.mxu0 0.0
    %2397 = vmatprep.subr.mxu0 0.0
    %2398 = vmatpush1.msra.mxu0 0.0
    %2399 = vmatprep.subr.mxu0 0.0
    %2400 = vmatpush1.msra.mxu0 0.0
    %2401 = vmatprep.subr.mxu0 0.0
    %2402 = vmatpush1.msra.mxu0 0.0
    %2403 = vmatprep.subr.mxu0 0.0
    %2404 = vmatpush1.msra.mxu0 0.0
    %2405 = vmatprep.subr.mxu0 0.0
    %2406 = vmatpush1.msra.mxu0 0.0
    %2407 = vmatprep.subr.mxu0 0.0
    %2408 = vmatpush1.msra.mxu0 0.0
    %2409 = vmatprep.subr.mxu0 0.0
    %2410 = vmatpush1.msra.mxu0 0.0
    %2411 = vmatprep.subr.mxu0 0.0
    %2412 = vmatpush1.msra.mxu0 0.0
    %2413 = vmatprep.subr.mxu0 0.0
    %2414 = vmatpush1.msra.mxu0 0.0
    %2415 = vmatprep.subr.mxu0 0.0
    %2416 = vmatpush1.msra.mxu0 0.0
    %2417 = vmatprep.subr.mxu0 0.0
    %2418 = vmatpush1.msra.mxu0 0.0
    %2419 = vmatprep.subr.mxu0 0.0
    %2420 = vmatpush1.msra.mxu0 0.0
    %2421 = vmatprep.subr.mxu0 0.0
    %2422 = vmatpush1.msra.mxu0 %v1618
    %2423 = vmatprep.subr.mxu0 0.0
    %2424 = vmatpush2.msra.mxu0 0.0
    %2425 = vmatprep.subr.mxu0 0.0
    %2426 = vmatpush2.msra.mxu0 0.0
    %2427 = vmatprep.subr.mxu0 0.0
    %2428 = vmatpush2.msra.mxu0 0.0
    %2429 = vmatprep.subr.mxu0 0.0
    %2430 = vmatpush2.msra.mxu0 0.0
    %2431 = vmatprep.subr.mxu0 0.0
    %2432 = vmatpush2.msra.mxu0 0.0
    %2433 = vmatprep.subr.mxu0 0.0
    %2434 = vmatpush2.msra.mxu0 0.0
    %2435 = vmatprep.subr.mxu0 0.0
    %2436 = vmatpush2.msra.mxu0 0.0
    %2437 = vmatprep.subr.mxu0 0.0
    %2438 = vmatpush2.msra.mxu0 0.0
    %2439 = vmatprep.subr.mxu0 0.0
    %2440 = vmatpush2.msra.mxu0 0.0
    %2441 = vmatprep.subr.mxu0 0.0
    %2442 = vmatpush2.msra.mxu0 0.0
    %2443 = vmatprep.subr.mxu0 0.0
    %2444 = vmatpush2.msra.mxu0 0.0
    %2445 = vmatprep.subr.mxu0 0.0
    %2446 = vmatpush2.msra.mxu0 0.0
    %2447 = vmatprep.subr.mxu0 0.0
    %2448 = vmatpush2.msra.mxu0 0.0
    %2449 = vmatprep.subr.mxu0 0.0
    %2450 = vmatpush2.msra.mxu0 0.0
    %2451 = vmatprep.subr.mxu0 0.0
    %2452 = vmatpush2.msra.mxu0 0.0
    %2453 = vmatprep.subr.mxu0 0.0
    %2454 = vmatpush2.msra.mxu0 0.0
    %2455 = vmatprep.mubr.f32.mxu0 0.0
    %2456 = vmatmul.mubr.f32.gmra.mxu0 %v387
    %v2457 = vpop.f32.mrf.mxu0
    %v2458 = vadd.f32 0.0, %v2457
    %v2459 = vpop.f32.mrf.mxu0
    %2460 = vmatprep.mubr.f32.mxu0 0.0
    %2461 = vmatmul.mubr.f32.gmra.mxu0 %v390
    %v2462 = vpop.f32.mrf.mxu0
    %v2463 = vadd.f32 0.0, %v2462
    %v2464 = vpop.f32.mrf.mxu0
    %2465 = vdwg.mxu0
    %2466 = vmatprep.subr.mxu0 0.0
    %2467 = vmatpush1.msra.mxu0 0.0
    %2468 = vmatprep.subr.mxu0 0.0
    %2469 = vmatpush1.msra.mxu0 0.0
    %2470 = vmatprep.subr.mxu0 0.0
    %2471 = vmatpush1.msra.mxu0 0.0
    %2472 = vmatprep.subr.mxu0 0.0
    %2473 = vmatpush1.msra.mxu0 0.0
    %2474 = vmatprep.subr.mxu0 0.0
    %2475 = vmatpush1.msra.mxu0 0.0
    %2476 = vmatprep.subr.mxu0 0.0
    %2477 = vmatpush1.msra.mxu0 0.0
    %2478 = vmatprep.subr.mxu0 0.0
    %2479 = vmatpush1.msra.mxu0 0.0
    %2480 = vmatprep.subr.mxu0 0.0
    %2481 = vmatpush1.msra.mxu0 0.0
    %2482 = vmatprep.subr.mxu0 0.0
    %2483 = vmatpush1.msra.mxu0 0.0
    %2484 = vmatprep.subr.mxu0 0.0
    %2485 = vmatpush1.msra.mxu0 0.0
    %2486 = vmatprep.subr.mxu0 0.0
    %2487 = vmatpush1.msra.mxu0 0.0
    %2488 = vmatprep.subr.mxu0 0.0
    %2489 = vmatpush1.msra.mxu0 0.0
    %2490 = vmatprep.subr.mxu0 0.0
    %2491 = vmatpush1.msra.mxu0 0.0
    %2492 = vmatprep.subr.mxu0 0.0
    %2493 = vmatpush1.msra.mxu0 0.0
    %2494 = vmatprep.subr.mxu0 0.0
    %2495 = vmatpush1.msra.mxu0 0.0
    %2496 = vmatprep.subr.mxu0 0.0
    %2497 = vmatpush1.msra.mxu0 %v1618
    %2498 = vmatprep.subr.mxu0 0.0
    %2499 = vmatpush2.msra.mxu0 0.0
    %2500 = vmatprep.subr.mxu0 0.0
    %2501 = vmatpush2.msra.mxu0 0.0
    %2502 = vmatprep.subr.mxu0 0.0
    %2503 = vmatpush2.msra.mxu0 0.0
    %2504 = vmatprep.subr.mxu0 0.0
    %2505 = vmatpush2.msra.mxu0 0.0
    %2506 = vmatprep.subr.mxu0 0.0
    %2507 = vmatpush2.msra.mxu0 0.0
    %2508 = vmatprep.subr.mxu0 0.0
    %2509 = vmatpush2.msra.mxu0 0.0
    %2510 = vmatprep.subr.mxu0 0.0
    %2511 = vmatpush2.msra.mxu0 0.0
    %2512 = vmatprep.subr.mxu0 0.0
    %2513 = vmatpush2.msra.mxu0 0.0
    %2514 = vmatprep.subr.mxu0 0.0
    %2515 = vmatpush2.msra.mxu0 0.0
    %2516 = vmatprep.subr.mxu0 0.0
    %2517 = vmatpush2.msra.mxu0 0.0
    %2518 = vmatprep.subr.mxu0 0.0
    %2519 = vmatpush2.msra.mxu0 0.0
    %2520 = vmatprep.subr.mxu0 0.0
    %2521 = vmatpush2.msra.mxu0 0.0
    %2522 = vmatprep.subr.mxu0 0.0
    %2523 = vmatpush2.msra.mxu0 0.0
    %2524 = vmatprep.subr.mxu0 0.0
    %2525 = vmatpush2.msra.mxu0 0.0
    %2526 = vmatprep.subr.mxu0 0.0
    %2527 = vmatpush2.msra.mxu0 0.0
    %2528 = vmatprep.subr.mxu0 0.0
    %2529 = vmatpush2.msra.mxu0 0.0
    %2530 = vmatprep.mubr.f32.mxu0 0.0
    %2531 = vmatmul.mubr.f32.gmra.mxu0 %v468
    %v2532 = vpop.f32.mrf.mxu0
    %v2533 = vadd.f32 0.0, %v2532
    %v2534 = vpop.f32.mrf.mxu0
    %2535 = vmatprep.mubr.f32.mxu0 0.0
    %2536 = vmatmul.mubr.f32.gmra.mxu0 %v471
    %v2537 = vpop.f32.mrf.mxu0
    %v2538 = vadd.f32 0.0, %v2537
    %v2539 = vpop.f32.mrf.mxu0
    %2540 = vdwg.mxu0
    %v2541 = vadd.f32 %v2458, %v2533
    %v2542 = vadd.f32 %v2463, %v2538
    %v2543 = vmul.f32 %v2541, 0.5
    %v2544 = vmul.f32 %v2542, 0.5
    %v2546 = vsel %vm385, %v2543, 0
    %v2549 = vsel %vm385, %v2544, 0
    %2551 = vmatprep.subr.mxu0 0.0
    %2552 = vmatpush1.msra.mxu0 0.0
    %2553 = vmatprep.subr.mxu0 0.0
    %2554 = vmatpush1.msra.mxu0 0.0
    %2555 = vmatprep.subr.mxu0 0.0
    %2556 = vmatpush1.msra.mxu0 0.0
    %2557 = vmatprep.subr.mxu0 0.0
    %2558 = vmatpush1.msra.mxu0 0.0
    %2559 = vmatprep.subr.mxu0 0.0
    %2560 = vmatpush1.msra.mxu0 0.0
    %2561 = vmatprep.subr.mxu0 0.0
    %2562 = vmatpush1.msra.mxu0 0.0
    %2563 = vmatprep.subr.mxu0 0.0
    %2564 = vmatpush1.msra.mxu0 0.0
    %2565 = vmatprep.subr.mxu0 0.0
    %2566 = vmatpush1.msra.mxu0 0.0
    %2567 = vmatprep.subr.mxu0 0.0
    %2568 = vmatpush1.msra.mxu0 0.0
    %2569 = vmatprep.subr.mxu0 0.0
    %2570 = vmatpush1.msra.mxu0 0.0
    %2571 = vmatprep.subr.mxu0 0.0
    %2572 = vmatpush1.msra.mxu0 0.0
    %2573 = vmatprep.subr.mxu0 0.0
    %2574 = vmatpush1.msra.mxu0 0.0
    %2575 = vmatprep.subr.mxu0 0.0
    %2576 = vmatpush1.msra.mxu0 0.0
    %2577 = vmatprep.subr.mxu0 0.0
    %2578 = vmatpush1.msra.mxu0 0.0
    %2579 = vmatprep.subr.mxu0 0.0
    %2580 = vmatpush1.msra.mxu0 0.0
    %2581 = vmatprep.subr.mxu0 0.0
    %2582 = vmatpush1.msra.mxu0 %v1623
    %2583 = vmatprep.subr.mxu0 0.0
    %2584 = vmatpush2.msra.mxu0 0.0
    %2585 = vmatprep.subr.mxu0 0.0
    %2586 = vmatpush2.msra.mxu0 0.0
    %2587 = vmatprep.subr.mxu0 0.0
    %2588 = vmatpush2.msra.mxu0 0.0
    %2589 = vmatprep.subr.mxu0 0.0
    %2590 = vmatpush2.msra.mxu0 0.0
    %2591 = vmatprep.subr.mxu0 0.0
    %2592 = vmatpush2.msra.mxu0 0.0
    %2593 = vmatprep.subr.mxu0 0.0
    %2594 = vmatpush2.msra.mxu0 0.0
    %2595 = vmatprep.subr.mxu0 0.0
    %2596 = vmatpush2.msra.mxu0 0.0
    %2597 = vmatprep.subr.mxu0 0.0
    %2598 = vmatpush2.msra.mxu0 0.0
    %2599 = vmatprep.subr.mxu0 0.0
    %2600 = vmatpush2.msra.mxu0 0.0
    %2601 = vmatprep.subr.mxu0 0.0
    %2602 = vmatpush2.msra.mxu0 0.0
    %2603 = vmatprep.subr.mxu0 0.0
    %2604 = vmatpush2.msra.mxu0 0.0
    %2605 = vmatprep.subr.mxu0 0.0
    %2606 = vmatpush2.msra.mxu0 0.0
    %2607 = vmatprep.subr.mxu0 0.0
    %2608 = vmatpush2.msra.mxu0 0.0
    %2609 = vmatprep.subr.mxu0 0.0
    %2610 = vmatpush2.msra.mxu0 0.0
    %2611 = vmatprep.subr.mxu0 0.0
    %2612 = vmatpush2.msra.mxu0 0.0
    %2613 = vmatprep.subr.mxu0 0.0
    %2614 = vmatpush2.msra.mxu0 0.0
    %2615 = vmatprep.mubr.f32.mxu0 0.0
    %2616 = vmatmul.mubr.f32.gmra.mxu0 %v2546
    %v2617 = vpop.f32.mrf.mxu0
    %v2618 = vadd.f32 0.0, %v2617
    %v2619 = vpop.f32.mrf.mxu0
    %2620 = vmatprep.mubr.f32.mxu0 0.0
    %2621 = vmatmul.mubr.f32.gmra.mxu0 %v2549
    %v2622 = vpop.f32.mrf.mxu0
    %v2623 = vadd.f32 0.0, %v2622
    %v2624 = vpop.f32.mrf.mxu0
    %2625 = vdwg.mxu0
    %v2626 = vadd.f32 %v2389, %v2618
    %v2627 = vadd.f32 %v2390, %v2623
    %v2628 = vsub.f32 %v2458, %v2533
    %v2629 = vsub.f32 %v2463, %v2538
    %v2630 = vand.u32 2147483647, %v2628
    %v2631 = vand.u32 2147483647, %v2629
    %v2632 = vmul.f32 %v2630, 0.5
    %v2633 = vmul.f32 %v2631, 0.5
    %v2635 = vsel %vm385, %v2632, 0
    %v2638 = vsel %vm385, %v2633, 0
    %2640 = vmatprep.subr.mxu0 0.0
    %2641 = vmatpush1.msra.mxu0 0.0
    %2642 = vmatprep.subr.mxu0 0.0
    %2643 = vmatpush1.msra.mxu0 0.0
    %2644 = vmatprep.subr.mxu0 0.0
    %2645 = vmatpush1.msra.mxu0 0.0
    %2646 = vmatprep.subr.mxu0 0.0
    %2647 = vmatpush1.msra.mxu0 0.0
    %2648 = vmatprep.subr.mxu0 0.0
    %2649 = vmatpush1.msra.mxu0 0.0
    %2650 = vmatprep.subr.mxu0 0.0
    %2651 = vmatpush1.msra.mxu0 0.0
    %2652 = vmatprep.subr.mxu0 0.0
    %2653 = vmatpush1.msra.mxu0 0.0
    %2654 = vmatprep.subr.mxu0 0.0
    %2655 = vmatpush1.msra.mxu0 0.0
    %2656 = vmatprep.subr.mxu0 0.0
    %2657 = vmatpush1.msra.mxu0 0.0
    %2658 = vmatprep.subr.mxu0 0.0
    %2659 = vmatpush1.msra.mxu0 0.0
    %2660 = vmatprep.subr.mxu0 0.0
    %2661 = vmatpush1.msra.mxu0 0.0
    %2662 = vmatprep.subr.mxu0 0.0
    %2663 = vmatpush1.msra.mxu0 0.0
    %2664 = vmatprep.subr.mxu0 0.0
    %2665 = vmatpush1.msra.mxu0 0.0
    %2666 = vmatprep.subr.mxu0 0.0
    %2667 = vmatpush1.msra.mxu0 0.0
    %2668 = vmatprep.subr.mxu0 0.0
    %2669 = vmatpush1.msra.mxu0 0.0
    %2670 = vmatprep.subr.mxu0 0.0
    %2671 = vmatpush1.msra.mxu0 %v1626
    %2672 = vmatprep.subr.mxu0 0.0
    %2673 = vmatpush2.msra.mxu0 0.0
    %2674 = vmatprep.subr.mxu0 0.0
    %2675 = vmatpush2.msra.mxu0 0.0
    %2676 = vmatprep.subr.mxu0 0.0
    %2677 = vmatpush2.msra.mxu0 0.0
    %2678 = vmatprep.subr.mxu0 0.0
    %2679 = vmatpush2.msra.mxu0 0.0
    %2680 = vmatprep.subr.mxu0 0.0
    %2681 = vmatpush2.msra.mxu0 0.0
    %2682 = vmatprep.subr.mxu0 0.0
    %2683 = vmatpush2.msra.mxu0 0.0
    %2684 = vmatprep.subr.mxu0 0.0
    %2685 = vmatpush2.msra.mxu0 0.0
    %2686 = vmatprep.subr.mxu0 0.0
    %2687 = vmatpush2.msra.mxu0 0.0
    %2688 = vmatprep.subr.mxu0 0.0
    %2689 = vmatpush2.msra.mxu0 0.0
    %2690 = vmatprep.subr.mxu0 0.0
    %2691 = vmatpush2.msra.mxu0 0.0
    %2692 = vmatprep.subr.mxu0 0.0
    %2693 = vmatpush2.msra.mxu0 0.0
    %2694 = vmatprep.subr.mxu0 0.0
    %2695 = vmatpush2.msra.mxu0 0.0
    %2696 = vmatprep.subr.mxu0 0.0
    %2697 = vmatpush2.msra.mxu0 0.0
    %2698 = vmatprep.subr.mxu0 0.0
    %2699 = vmatpush2.msra.mxu0 0.0
    %2700 = vmatprep.subr.mxu0 0.0
    %2701 = vmatpush2.msra.mxu0 0.0
    %2702 = vmatprep.subr.mxu0 0.0
    %2703 = vmatpush2.msra.mxu0 0.0
    %2704 = vmatprep.mubr.f32.mxu0 0.0
    %2705 = vmatmul.mubr.f32.gmra.mxu0 %v2635
    %v2706 = vpop.f32.mrf.mxu0
    %v2707 = vadd.f32 0.0, %v2706
    %v2708 = vpop.f32.mrf.mxu0
    %2709 = vmatprep.mubr.f32.mxu0 0.0
    %2710 = vmatmul.mubr.f32.gmra.mxu0 %v2638
    %v2711 = vpop.f32.mrf.mxu0
    %v2712 = vadd.f32 0.0, %v2711
    %v2713 = vpop.f32.mrf.mxu0
    %2714 = vdwg.mxu0
    %v2715 = vadd.f32 %v2626, %v2707
    %v2716 = vadd.f32 %v2627, %v2712
    %v2717 = vmax.f32 %v2715, 0.0
    %v2718 = vmax.f32 %v2716, 0.0
    %v2720 = vlaneseq
    %v2721 = vshrl.u32 %v2720, 7
    %v2722 = vsub.s32 0, %v2721
    %v2723 = vrot.slane %v1633, %v2722
    %v2726 = vsel %vm740, %v2717, 0
    %v2729 = vsel %vm740, %v2718, 0
    %2731 = vmatprep.subr.mxu0 0.0
    %2732 = vmatpush1.msra.mxu0 0.0
    %2733 = vmatprep.subr.mxu0 0.0
    %2734 = vmatpush1.msra.mxu0 0.0
    %2735 = vmatprep.subr.mxu0 0.0
    %2736 = vmatpush1.msra.mxu0 0.0
    %2737 = vmatprep.subr.mxu0 0.0
    %2738 = vmatpush1.msra.mxu0 0.0
    %2739 = vmatprep.subr.mxu0 0.0
    %2740 = vmatpush1.msra.mxu0 0.0
    %2741 = vmatprep.subr.mxu0 0.0
    %2742 = vmatpush1.msra.mxu0 0.0
    %2743 = vmatprep.subr.mxu0 0.0
    %2744 = vmatpush1.msra.mxu0 0.0
    %2745 = vmatprep.subr.mxu0 0.0
    %2746 = vmatpush1.msra.mxu0 0.0
    %2747 = vmatprep.subr.mxu0 0.0
    %2748 = vmatpush1.msra.mxu0 0.0
    %2749 = vmatprep.subr.mxu0 0.0
    %2750 = vmatpush1.msra.mxu0 0.0
    %2751 = vmatprep.subr.mxu0 0.0
    %2752 = vmatpush1.msra.mxu0 0.0
    %2753 = vmatprep.subr.mxu0 0.0
    %2754 = vmatpush1.msra.mxu0 0.0
    %2755 = vmatprep.subr.mxu0 0.0
    %2756 = vmatpush1.msra.mxu0 %v1632
    %2757 = vmatprep.subr.mxu0 0.0
    %2758 = vmatpush1.msra.mxu0 %v1631
    %2759 = vmatprep.subr.mxu0 0.0
    %2760 = vmatpush1.msra.mxu0 %v1630
    %2761 = vmatprep.subr.mxu0 0.0
    %2762 = vmatpush1.msra.mxu0 %v1629
    %2763 = vmatprep.subr.mxu0 0.0
    %2764 = vmatpush2.msra.mxu0 0.0
    %2765 = vmatprep.subr.mxu0 0.0
    %2766 = vmatpush2.msra.mxu0 0.0
    %2767 = vmatprep.subr.mxu0 0.0
    %2768 = vmatpush2.msra.mxu0 0.0
    %2769 = vmatprep.subr.mxu0 0.0
    %2770 = vmatpush2.msra.mxu0 0.0
    %2771 = vmatprep.subr.mxu0 0.0
    %2772 = vmatpush2.msra.mxu0 0.0
    %2773 = vmatprep.subr.mxu0 0.0
    %2774 = vmatpush2.msra.mxu0 0.0
    %2775 = vmatprep.subr.mxu0 0.0
    %2776 = vmatpush2.msra.mxu0 0.0
    %2777 = vmatprep.subr.mxu0 0.0
    %2778 = vmatpush2.msra.mxu0 0.0
    %2779 = vmatprep.subr.mxu0 0.0
    %2780 = vmatpush2.msra.mxu0 0.0
    %2781 = vmatprep.subr.mxu0 0.0
    %2782 = vmatpush2.msra.mxu0 0.0
    %2783 = vmatprep.subr.mxu0 0.0
    %2784 = vmatpush2.msra.mxu0 0.0
    %2785 = vmatprep.subr.mxu0 0.0
    %2786 = vmatpush2.msra.mxu0 0.0
    %2787 = vmatprep.subr.mxu0 0.0
    %2788 = vmatpush2.msra.mxu0 0.0
    %2789 = vmatprep.subr.mxu0 0.0
    %2790 = vmatpush2.msra.mxu0 0.0
    %2791 = vmatprep.subr.mxu0 0.0
    %2792 = vmatpush2.msra.mxu0 0.0
    %2793 = vmatprep.subr.mxu0 0.0
    %2794 = vmatpush2.msra.mxu0 0.0
    %2795 = vmatprep.mubr.f32.mxu0 0.0
    %2796 = vmatmul.mubr.f32.gmra.mxu0 %v2726
    %v2797 = vpop.f32.mrf.mxu0
    %v2798 = vadd.f32 %v2723, %v2797
    %v2799 = vpop.f32.mrf.mxu0
    %2800 = vmatprep.mubr.f32.mxu0 0.0
    %2801 = vmatmul.mubr.f32.gmra.mxu0 %v2729
    %v2802 = vpop.f32.mrf.mxu0
    %v2803 = vadd.f32 %v2723, %v2802
    %v2804 = vpop.f32.mrf.mxu0
    %2805 = vdwg.mxu0
    %2806 = vmatprep.subr.mxu0 0.0
    %2807 = vmatpush1.msra.mxu0 0.0
    %2808 = vmatprep.subr.mxu0 0.0
    %2809 = vmatpush1.msra.mxu0 0.0
    %2810 = vmatprep.subr.mxu0 0.0
    %2811 = vmatpush1.msra.mxu0 0.0
    %2812 = vmatprep.subr.mxu0 0.0
    %2813 = vmatpush1.msra.mxu0 0.0
    %2814 = vmatprep.subr.mxu0 0.0
    %2815 = vmatpush1.msra.mxu0 0.0
    %2816 = vmatprep.subr.mxu0 0.0
    %2817 = vmatpush1.msra.mxu0 0.0
    %2818 = vmatprep.subr.mxu0 0.0
    %2819 = vmatpush1.msra.mxu0 0.0
    %2820 = vmatprep.subr.mxu0 0.0
    %2821 = vmatpush1.msra.mxu0 0.0
    %2822 = vmatprep.subr.mxu0 0.0
    %2823 = vmatpush1.msra.mxu0 0.0
    %2824 = vmatprep.subr.mxu0 0.0
    %2825 = vmatpush1.msra.mxu0 0.0
    %2826 = vmatprep.subr.mxu0 0.0
    %2827 = vmatpush1.msra.mxu0 0.0
    %2828 = vmatprep.subr.mxu0 0.0
    %2829 = vmatpush1.msra.mxu0 0.0
    %2830 = vmatprep.subr.mxu0 0.0
    %2831 = vmatpush1.msra.mxu0 0.0
    %2832 = vmatprep.subr.mxu0 0.0
    %2833 = vmatpush1.msra.mxu0 0.0
    %2834 = vmatprep.subr.mxu0 0.0
    %2835 = vmatpush1.msra.mxu0 %v2803
    %2836 = vmatprep.subr.mxu0 0.0
    %2837 = vmatpush1.msra.mxu0 %v2798
    %2838 = vmatprep.subr.mxu0 0.0
    %2839 = vmatpush2.msra.mxu0 0.0
    %2840 = vmatprep.subr.mxu0 0.0
    %2841 = vmatpush2.msra.mxu0 0.0
    %2842 = vmatprep.subr.mxu0 0.0
    %2843 = vmatpush2.msra.mxu0 0.0
    %2844 = vmatprep.subr.mxu0 0.0
    %2845 = vmatpush2.msra.mxu0 0.0
    %2846 = vmatprep.subr.mxu0 0.0
    %2847 = vmatpush2.msra.mxu0 0.0
    %2848 = vmatprep.subr.mxu0 0.0
    %2849 = vmatpush2.msra.mxu0 0.0
    %2850 = vmatprep.subr.mxu0 0.0
    %2851 = vmatpush2.msra.mxu0 0.0
    %2852 = vmatprep.subr.mxu0 0.0
    %2853 = vmatpush2.msra.mxu0 0.0
    %2854 = vmatprep.subr.mxu0 0.0
    %2855 = vmatpush2.msra.mxu0 0.0
    %2856 = vmatprep.subr.mxu0 0.0
    %2857 = vmatpush2.msra.mxu0 0.0
    %2858 = vmatprep.subr.mxu0 0.0
    %2859 = vmatpush2.msra.mxu0 0.0
    %2860 = vmatprep.subr.mxu0 0.0
    %2861 = vmatpush2.msra.mxu0 0.0
    %2862 = vmatprep.subr.mxu0 0.0
    %2863 = vmatpush2.msra.mxu0 0.0
    %2864 = vmatprep.subr.mxu0 0.0
    %2865 = vmatpush2.msra.mxu0 0.0
    %2866 = vmatprep.subr.mxu0 0.0
    %2867 = vmatpush2.msra.mxu0 0.0
    %2868 = vmatprep.subr.mxu0 0.0
    %2869 = vmatpush2.msra.mxu0 0.0
    %2870 = vmatprep.mubr.f32.mxu0 0.0
    %2871 = vmatmul.mubr.f32.gmra.mxu0 %v824
    %v2872 = vpop.f32.mrf.mxu0
    %v2873 = vadd.f32 0.0, %v2872
    %v2874 = vpop.f32.mrf.mxu0
    %2875 = vdwg.mxu0
    %v2877 = vlaneseq
    %v2878 = vshrl.u32 %v2877, 7
    %v2879 = vsub.s32 0, %v2878
    %v2880 = vrot.slane %v1638, %v2879
    %v2883 = vsel %vm385, %v2873, 0
    %2885 = vmatprep.subr.mxu0 0.0
    %2886 = vmatpush1.msra.mxu0 0.0
    %2887 = vmatprep.subr.mxu0 0.0
    %2888 = vmatpush1.msra.mxu0 0.0
    %2889 = vmatprep.subr.mxu0 0.0
    %2890 = vmatpush1.msra.mxu0 0.0
    %2891 = vmatprep.subr.mxu0 0.0
    %2892 = vmatpush1.msra.mxu0 0.0
    %2893 = vmatprep.subr.mxu0 0.0
    %2894 = vmatpush1.msra.mxu0 0.0
    %2895 = vmatprep.subr.mxu0 0.0
    %2896 = vmatpush1.msra.mxu0 0.0
    %2897 = vmatprep.subr.mxu0 0.0
    %2898 = vmatpush1.msra.mxu0 0.0
    %2899 = vmatprep.subr.mxu0 0.0
    %2900 = vmatpush1.msra.mxu0 0.0
    %2901 = vmatprep.subr.mxu0 0.0
    %2902 = vmatpush1.msra.mxu0 0.0
    %2903 = vmatprep.subr.mxu0 0.0
    %2904 = vmatpush1.msra.mxu0 0.0
    %2905 = vmatprep.subr.mxu0 0.0
    %2906 = vmatpush1.msra.mxu0 0.0
    %2907 = vmatprep.subr.mxu0 0.0
    %2908 = vmatpush1.msra.mxu0 0.0
    %2909 = vmatprep.subr.mxu0 0.0
    %2910 = vmatpush1.msra.mxu0 0.0
    %2911 = vmatprep.subr.mxu0 0.0
    %2912 = vmatpush1.msra.mxu0 0.0
    %2913 = vmatprep.subr.mxu0 0.0
    %2914 = vmatpush1.msra.mxu0 0.0
    %2915 = vmatprep.subr.mxu0 0.0
    %2916 = vmatpush1.msra.mxu0 %v1637
    %2917 = vmatprep.subr.mxu0 0.0
    %2918 = vmatpush2.msra.mxu0 0.0
    %2919 = vmatprep.subr.mxu0 0.0
    %2920 = vmatpush2.msra.mxu0 0.0
    %2921 = vmatprep.subr.mxu0 0.0
    %2922 = vmatpush2.msra.mxu0 0.0
    %2923 = vmatprep.subr.mxu0 0.0
    %2924 = vmatpush2.msra.mxu0 0.0
    %2925 = vmatprep.subr.mxu0 0.0
    %2926 = vmatpush2.msra.mxu0 0.0
    %2927 = vmatprep.subr.mxu0 0.0
    %2928 = vmatpush2.msra.mxu0 0.0
    %2929 = vmatprep.subr.mxu0 0.0
    %2930 = vmatpush2.msra.mxu0 0.0
    %2931 = vmatprep.subr.mxu0 0.0
    %2932 = vmatpush2.msra.mxu0 0.0
    %2933 = vmatprep.subr.mxu0 0.0
    %2934 = vmatpush2.msra.mxu0 0.0
    %2935 = vmatprep.subr.mxu0 0.0
    %2936 = vmatpush2.msra.mxu0 0.0
    %2937 = vmatprep.subr.mxu0 0.0
    %2938 = vmatpush2.msra.mxu0 0.0
    %2939 = vmatprep.subr.mxu0 0.0
    %2940 = vmatpush2.msra.mxu0 0.0
    %2941 = vmatprep.subr.mxu0 0.0
    %2942 = vmatpush2.msra.mxu0 0.0
    %2943 = vmatprep.subr.mxu0 0.0
    %2944 = vmatpush2.msra.mxu0 0.0
    %2945 = vmatprep.subr.mxu0 0.0
    %2946 = vmatpush2.msra.mxu0 0.0
    %2947 = vmatprep.subr.mxu0 0.0
    %2948 = vmatpush2.msra.mxu0 0.0
    %2949 = vmatprep.mubr.f32.mxu0 0.0
    %2950 = vmatmul.mubr.f32.gmra.mxu0 %v2883
    %v2951 = vpop.f32.mrf.mxu0
    %v2952 = vadd.f32 %v2880, %v2951
    %v2953 = vpop.f32.mrf.mxu0
    %2954 = vdwg.mxu0
    %v2956 = vsel %vm385, %v1355, 0
    %2958 = vmatprep.subr.mxu0 0.0
    %2959 = vmatpush1.msra.mxu0 0.0
    %2960 = vmatprep.subr.mxu0 0.0
    %2961 = vmatpush1.msra.mxu0 0.0
    %2962 = vmatprep.subr.mxu0 0.0
    %2963 = vmatpush1.msra.mxu0 0.0
    %2964 = vmatprep.subr.mxu0 0.0
    %2965 = vmatpush1.msra.mxu0 0.0
    %2966 = vmatprep.subr.mxu0 0.0
    %2967 = vmatpush1.msra.mxu0 0.0
    %2968 = vmatprep.subr.mxu0 0.0
    %2969 = vmatpush1.msra.mxu0 0.0
    %2970 = vmatprep.subr.mxu0 0.0
    %2971 = vmatpush1.msra.mxu0 0.0
    %2972 = vmatprep.subr.mxu0 0.0
    %2973 = vmatpush1.msra.mxu0 0.0
    %2974 = vmatprep.subr.mxu0 0.0
    %2975 = vmatpush1.msra.mxu0 0.0
    %2976 = vmatprep.subr.mxu0 0.0
    %2977 = vmatpush1.msra.mxu0 0.0
    %2978 = vmatprep.subr.mxu0 0.0
    %2979 = vmatpush1.msra.mxu0 0.0
    %2980 = vmatprep.subr.mxu0 0.0
    %2981 = vmatpush1.msra.mxu0 0.0
    %2982 = vmatprep.subr.mxu0 0.0
    %2983 = vmatpush1.msra.mxu0 0.0
    %2984 = vmatprep.subr.mxu0 0.0
    %2985 = vmatpush1.msra.mxu0 0.0
    %2986 = vmatprep.subr.mxu0 0.0
    %2987 = vmatpush1.msra.mxu0 0.0
    %2988 = vmatprep.subr.mxu0 0.0
    %2989 = vmatpush1.msra.mxu0 %v1634
    %2990 = vmatprep.subr.mxu0 0.0
    %2991 = vmatpush2.msra.mxu0 0.0
    %2992 = vmatprep.subr.mxu0 0.0
    %2993 = vmatpush2.msra.mxu0 0.0
    %2994 = vmatprep.subr.mxu0 0.0
    %2995 = vmatpush2.msra.mxu0 0.0
    %2996 = vmatprep.subr.mxu0 0.0
    %2997 = vmatpush2.msra.mxu0 0.0
    %2998 = vmatprep.subr.mxu0 0.0
    %2999 = vmatpush2.msra.mxu0 0.0
    %3000 = vmatprep.subr.mxu0 0.0
    %3001 = vmatpush2.msra.mxu0 0.0
    %3002 = vmatprep.subr.mxu0 0.0
    %3003 = vmatpush2.msra.mxu0 0.0
    %3004 = vmatprep.subr.mxu0 0.0
    %3005 = vmatpush2.msra.mxu0 0.0
    %3006 = vmatprep.subr.mxu0 0.0
    %3007 = vmatpush2.msra.mxu0 0.0
    %3008 = vmatprep.subr.mxu0 0.0
    %3009 = vmatpush2.msra.mxu0 0.0
    %3010 = vmatprep.subr.mxu0 0.0
    %3011 = vmatpush2.msra.mxu0 0.0
    %3012 = vmatprep.subr.mxu0 0.0
    %3013 = vmatpush2.msra.mxu0 0.0
    %3014 = vmatprep.subr.mxu0 0.0
    %3015 = vmatpush2.msra.mxu0 0.0
    %3016 = vmatprep.subr.mxu0 0.0
    %3017 = vmatpush2.msra.mxu0 0.0
    %3018 = vmatprep.subr.mxu0 0.0
    %3019 = vmatpush2.msra.mxu0 0.0
    %3020 = vmatprep.subr.mxu0 0.0
    %3021 = vmatpush2.msra.mxu0 0.0
    %3022 = vmatprep.mubr.f32.mxu0 0.0
    %3023 = vmatmul.mubr.f32.gmra.mxu0 %v2956
    %v3024 = vpop.f32.mrf.mxu0
    %v3025 = vadd.f32 0.0, %v3024
    %v3026 = vpop.f32.mrf.mxu0
    %3027 = vdwg.mxu0
    %v3028 = vadd.f32 %v2952, %v3025
    %v3030 = vsel %vm2211, %v272, 0
    %v3033 = vsel %vm2218, %v1635, 0
    %3035 = vmatprep.subr.mxu0 0.0
    %3036 = vmatpush1.msra.mxu0 0.0
    %3037 = vmatprep.subr.mxu0 0.0
    %3038 = vmatpush1.msra.mxu0 0.0
    %3039 = vmatprep.subr.mxu0 0.0
    %3040 = vmatpush1.msra.mxu0 0.0
    %3041 = vmatprep.subr.mxu0 0.0
    %3042 = vmatpush1.msra.mxu0 0.0
    %3043 = vmatprep.subr.mxu0 0.0
    %3044 = vmatpush1.msra.mxu0 0.0
    %3045 = vmatprep.subr.mxu0 0.0
    %3046 = vmatpush1.msra.mxu0 0.0
    %3047 = vmatprep.subr.mxu0 0.0
    %3048 = vmatpush1.msra.mxu0 0.0
    %3049 = vmatprep.subr.mxu0 0.0
    %3050 = vmatpush1.msra.mxu0 0.0
    %3051 = vmatprep.subr.mxu0 0.0
    %3052 = vmatpush1.msra.mxu0 0.0
    %3053 = vmatprep.subr.mxu0 0.0
    %3054 = vmatpush1.msra.mxu0 0.0
    %3055 = vmatprep.subr.mxu0 0.0
    %3056 = vmatpush1.msra.mxu0 0.0
    %3057 = vmatprep.subr.mxu0 0.0
    %3058 = vmatpush1.msra.mxu0 0.0
    %3059 = vmatprep.subr.mxu0 0.0
    %3060 = vmatpush1.msra.mxu0 0.0
    %3061 = vmatprep.subr.mxu0 0.0
    %3062 = vmatpush1.msra.mxu0 0.0
    %3063 = vmatprep.subr.mxu0 0.0
    %3064 = vmatpush1.msra.mxu0 0.0
    %3065 = vmatprep.subr.mxu0 0.0
    %3066 = vmatpush1.msra.mxu0 %v3033
    %3067 = vmatprep.subr.mxu0 0.0
    %3068 = vmatpush2.msra.mxu0 0.0
    %3069 = vmatprep.subr.mxu0 0.0
    %3070 = vmatpush2.msra.mxu0 0.0
    %3071 = vmatprep.subr.mxu0 0.0
    %3072 = vmatpush2.msra.mxu0 0.0
    %3073 = vmatprep.subr.mxu0 0.0
    %3074 = vmatpush2.msra.mxu0 0.0
    %3075 = vmatprep.subr.mxu0 0.0
    %3076 = vmatpush2.msra.mxu0 0.0
    %3077 = vmatprep.subr.mxu0 0.0
    %3078 = vmatpush2.msra.mxu0 0.0
    %3079 = vmatprep.subr.mxu0 0.0
    %3080 = vmatpush2.msra.mxu0 0.0
    %3081 = vmatprep.subr.mxu0 0.0
    %3082 = vmatpush2.msra.mxu0 0.0
    %3083 = vmatprep.subr.mxu0 0.0
    %3084 = vmatpush2.msra.mxu0 0.0
    %3085 = vmatprep.subr.mxu0 0.0
    %3086 = vmatpush2.msra.mxu0 0.0
    %3087 = vmatprep.subr.mxu0 0.0
    %3088 = vmatpush2.msra.mxu0 0.0
    %3089 = vmatprep.subr.mxu0 0.0
    %3090 = vmatpush2.msra.mxu0 0.0
    %3091 = vmatprep.subr.mxu0 0.0
    %3092 = vmatpush2.msra.mxu0 0.0
    %3093 = vmatprep.subr.mxu0 0.0
    %3094 = vmatpush2.msra.mxu0 0.0
    %3095 = vmatprep.subr.mxu0 0.0
    %3096 = vmatpush2.msra.mxu0 0.0
    %3097 = vmatprep.subr.mxu0 0.0
    %3098 = vmatpush2.msra.mxu0 0.0
    %3099 = vmatprep.mubr.f32.mxu0 0.0
    %3100 = vmatmul.mubr.f32.gmra.mxu0 %v3030
    %v3101 = vpop.f32.mrf.mxu0
    %v3102 = vadd.f32 0.0, %v3101
    %v3103 = vpop.f32.mrf.mxu0
    %3104 = vdwg.mxu0
    %v3105 = vadd.f32 %v3028, %v3102
    %v3107 = vsel %vm385, %v1618, 0
    %3109 = vmatprep.subr.mxu0 0.0
    %3110 = vmatpush1.msra.mxu0 0.0
    %3111 = vmatprep.subr.mxu0 0.0
    %3112 = vmatpush1.msra.mxu0 0.0
    %3113 = vmatprep.subr.mxu0 0.0
    %3114 = vmatpush1.msra.mxu0 0.0
    %3115 = vmatprep.subr.mxu0 0.0
    %3116 = vmatpush1.msra.mxu0 0.0
    %3117 = vmatprep.subr.mxu0 0.0
    %3118 = vmatpush1.msra.mxu0 0.0
    %3119 = vmatprep.subr.mxu0 0.0
    %3120 = vmatpush1.msra.mxu0 0.0
    %3121 = vmatprep.subr.mxu0 0.0
    %3122 = vmatpush1.msra.mxu0 0.0
    %3123 = vmatprep.subr.mxu0 0.0
    %3124 = vmatpush1.msra.mxu0 0.0
    %3125 = vmatprep.subr.mxu0 0.0
    %3126 = vmatpush1.msra.mxu0 0.0
    %3127 = vmatprep.subr.mxu0 0.0
    %3128 = vmatpush1.msra.mxu0 0.0
    %3129 = vmatprep.subr.mxu0 0.0
    %3130 = vmatpush1.msra.mxu0 0.0
    %3131 = vmatprep.subr.mxu0 0.0
    %3132 = vmatpush1.msra.mxu0 0.0
    %3133 = vmatprep.subr.mxu0 0.0
    %3134 = vmatpush1.msra.mxu0 0.0
    %3135 = vmatprep.subr.mxu0 0.0
    %3136 = vmatpush1.msra.mxu0 0.0
    %3137 = vmatprep.subr.mxu0 0.0
    %3138 = vmatpush1.msra.mxu0 0.0
    %3139 = vmatprep.subr.mxu0 0.0
    %3140 = vmatpush1.msra.mxu0 %v1636
    %3141 = vmatprep.subr.mxu0 0.0
    %3142 = vmatpush2.msra.mxu0 0.0
    %3143 = vmatprep.subr.mxu0 0.0
    %3144 = vmatpush2.msra.mxu0 0.0
    %3145 = vmatprep.subr.mxu0 0.0
    %3146 = vmatpush2.msra.mxu0 0.0
    %3147 = vmatprep.subr.mxu0 0.0
    %3148 = vmatpush2.msra.mxu0 0.0
    %3149 = vmatprep.subr.mxu0 0.0
    %3150 = vmatpush2.msra.mxu0 0.0
    %3151 = vmatprep.subr.mxu0 0.0
    %3152 = vmatpush2.msra.mxu0 0.0
    %3153 = vmatprep.subr.mxu0 0.0
    %3154 = vmatpush2.msra.mxu0 0.0
    %3155 = vmatprep.subr.mxu0 0.0
    %3156 = vmatpush2.msra.mxu0 0.0
    %3157 = vmatprep.subr.mxu0 0.0
    %3158 = vmatpush2.msra.mxu0 0.0
    %3159 = vmatprep.subr.mxu0 0.0
    %3160 = vmatpush2.msra.mxu0 0.0
    %3161 = vmatprep.subr.mxu0 0.0
    %3162 = vmatpush2.msra.mxu0 0.0
    %3163 = vmatprep.subr.mxu0 0.0
    %3164 = vmatpush2.msra.mxu0 0.0
    %3165 = vmatprep.subr.mxu0 0.0
    %3166 = vmatpush2.msra.mxu0 0.0
    %3167 = vmatprep.subr.mxu0 0.0
    %3168 = vmatpush2.msra.mxu0 0.0
    %3169 = vmatprep.subr.mxu0 0.0
    %3170 = vmatpush2.msra.mxu0 0.0
    %3171 = vmatprep.subr.mxu0 0.0
    %3172 = vmatpush2.msra.mxu0 0.0
    %3173 = vmatprep.mubr.f32.mxu0 0.0
    %3174 = vmatmul.mubr.f32.gmra.mxu0 %v3107
    %v3175 = vpop.f32.mrf.mxu0
    %v3176 = vadd.f32 0.0, %v3175
    %v3177 = vpop.f32.mrf.mxu0
    %3178 = vdwg.mxu0
    %v3179 = vadd.f32 %v3105, %v3176
    %v3180 = vmax.f32 %v3179, 0.0
    %v3182 = vlaneseq
    %v3183 = vshrl.u32 %v3182, 7
    %v3184 = vsub.s32 0, %v3183
    %v3185 = vrot.slane %v1643, %v3184
    %v3188 = vsel %vm740, %v3180, 0
    %3190 = vmatprep.subr.mxu0 0.0
    %3191 = vmatpush1.msra.mxu0 0.0
    %3192 = vmatprep.subr.mxu0 0.0
    %3193 = vmatpush1.msra.mxu0 0.0
    %3194 = vmatprep.subr.mxu0 0.0
    %3195 = vmatpush1.msra.mxu0 0.0
    %3196 = vmatprep.subr.mxu0 0.0
    %3197 = vmatpush1.msra.mxu0 0.0
    %3198 = vmatprep.subr.mxu0 0.0
    %3199 = vmatpush1.msra.mxu0 0.0
    %3200 = vmatprep.subr.mxu0 0.0
    %3201 = vmatpush1.msra.mxu0 0.0
    %3202 = vmatprep.subr.mxu0 0.0
    %3203 = vmatpush1.msra.mxu0 0.0
    %3204 = vmatprep.subr.mxu0 0.0
    %3205 = vmatpush1.msra.mxu0 0.0
    %3206 = vmatprep.subr.mxu0 0.0
    %3207 = vmatpush1.msra.mxu0 0.0
    %3208 = vmatprep.subr.mxu0 0.0
    %3209 = vmatpush1.msra.mxu0 0.0
    %3210 = vmatprep.subr.mxu0 0.0
    %3211 = vmatpush1.msra.mxu0 0.0
    %3212 = vmatprep.subr.mxu0 0.0
    %3213 = vmatpush1.msra.mxu0 0.0
    %3214 = vmatprep.subr.mxu0 0.0
    %3215 = vmatpush1.msra.mxu0 %v1642
    %3216 = vmatprep.subr.mxu0 0.0
    %3217 = vmatpush1.msra.mxu0 %v1641
    %3218 = vmatprep.subr.mxu0 0.0
    %3219 = vmatpush1.msra.mxu0 %v1640
    %3220 = vmatprep.subr.mxu0 0.0
    %3221 = vmatpush1.msra.mxu0 %v1639
    %3222 = vmatprep.subr.mxu0 0.0
    %3223 = vmatpush2.msra.mxu0 0.0
    %3224 = vmatprep.subr.mxu0 0.0
    %3225 = vmatpush2.msra.mxu0 0.0
    %3226 = vmatprep.subr.mxu0 0.0
    %3227 = vmatpush2.msra.mxu0 0.0
    %3228 = vmatprep.subr.mxu0 0.0
    %3229 = vmatpush2.msra.mxu0 0.0
    %3230 = vmatprep.subr.mxu0 0.0
    %3231 = vmatpush2.msra.mxu0 0.0
    %3232 = vmatprep.subr.mxu0 0.0
    %3233 = vmatpush2.msra.mxu0 0.0
    %3234 = vmatprep.subr.mxu0 0.0
    %3235 = vmatpush2.msra.mxu0 0.0
    %3236 = vmatprep.subr.mxu0 0.0
    %3237 = vmatpush2.msra.mxu0 0.0
    %3238 = vmatprep.subr.mxu0 0.0
    %3239 = vmatpush2.msra.mxu0 0.0
    %3240 = vmatprep.subr.mxu0 0.0
    %3241 = vmatpush2.msra.mxu0 0.0
    %3242 = vmatprep.subr.mxu0 0.0
    %3243 = vmatpush2.msra.mxu0 0.0
    %3244 = vmatprep.subr.mxu0 0.0
    %3245 = vmatpush2.msra.mxu0 0.0
    %3246 = vmatprep.subr.mxu0 0.0
    %3247 = vmatpush2.msra.mxu0 0.0
    %3248 = vmatprep.subr.mxu0 0.0
    %3249 = vmatpush2.msra.mxu0 0.0
    %3250 = vmatprep.subr.mxu0 0.0
    %3251 = vmatpush2.msra.mxu0 0.0
    %3252 = vmatprep.subr.mxu0 0.0
    %3253 = vmatpush2.msra.mxu0 0.0
    %3254 = vmatprep.mubr.f32.mxu0 0.0
    %3255 = vmatmul.mubr.f32.gmra.mxu0 %v3188
    %v3256 = vpop.f32.mrf.mxu0
    %v3257 = vadd.f32 %v3185, %v3256
    %v3258 = vpop.f32.mrf.mxu0
    %3259 = vdwg.mxu0
    %v3260 = vmax.f32 %v3257, 0.0
    %3261 = vmatprep.subr.mxu0 0.0
    %3262 = vmatpush1.msra.mxu0 0.0
    %3263 = vmatprep.subr.mxu0 0.0
    %3264 = vmatpush1.msra.mxu0 0.0
    %3265 = vmatprep.subr.mxu0 0.0
    %3266 = vmatpush1.msra.mxu0 0.0
    %3267 = vmatprep.subr.mxu0 0.0
    %3268 = vmatpush1.msra.mxu0 0.0
    %3269 = vmatprep.subr.mxu0 0.0
    %3270 = vmatpush1.msra.mxu0 0.0
    %3271 = vmatprep.subr.mxu0 0.0
    %3272 = vmatpush1.msra.mxu0 0.0
    %3273 = vmatprep.subr.mxu0 0.0
    %3274 = vmatpush1.msra.mxu0 0.0
    %3275 = vmatprep.subr.mxu0 0.0
    %3276 = vmatpush1.msra.mxu0 0.0
    %3277 = vmatprep.subr.mxu0 0.0
    %3278 = vmatpush1.msra.mxu0 0.0
    %3279 = vmatprep.subr.mxu0 0.0
    %3280 = vmatpush1.msra.mxu0 0.0
    %3281 = vmatprep.subr.mxu0 0.0
    %3282 = vmatpush1.msra.mxu0 0.0
    %3283 = vmatprep.subr.mxu0 0.0
    %3284 = vmatpush1.msra.mxu0 0.0
    %3285 = vmatprep.subr.mxu0 0.0
    %3286 = vmatpush1.msra.mxu0 0.0
    %3287 = vmatprep.subr.mxu0 0.0
    %3288 = vmatpush1.msra.mxu0 0.0
    %3289 = vmatprep.subr.mxu0 0.0
    %3290 = vmatpush1.msra.mxu0 0.0
    %3291 = vmatprep.subr.mxu0 0.0
    %3292 = vmatpush1.msra.mxu0 %v3260
    %3293 = vmatprep.subr.mxu0 0.0
    %3294 = vmatpush2.msra.mxu0 0.0
    %3295 = vmatprep.subr.mxu0 0.0
    %3296 = vmatpush2.msra.mxu0 0.0
    %3297 = vmatprep.subr.mxu0 0.0
    %3298 = vmatpush2.msra.mxu0 0.0
    %3299 = vmatprep.subr.mxu0 0.0
    %3300 = vmatpush2.msra.mxu0 0.0
    %3301 = vmatprep.subr.mxu0 0.0
    %3302 = vmatpush2.msra.mxu0 0.0
    %3303 = vmatprep.subr.mxu0 0.0
    %3304 = vmatpush2.msra.mxu0 0.0
    %3305 = vmatprep.subr.mxu0 0.0
    %3306 = vmatpush2.msra.mxu0 0.0
    %3307 = vmatprep.subr.mxu0 0.0
    %3308 = vmatpush2.msra.mxu0 0.0
    %3309 = vmatprep.subr.mxu0 0.0
    %3310 = vmatpush2.msra.mxu0 0.0
    %3311 = vmatprep.subr.mxu0 0.0
    %3312 = vmatpush2.msra.mxu0 0.0
    %3313 = vmatprep.subr.mxu0 0.0
    %3314 = vmatpush2.msra.mxu0 0.0
    %3315 = vmatprep.subr.mxu0 0.0
    %3316 = vmatpush2.msra.mxu0 0.0
    %3317 = vmatprep.subr.mxu0 0.0
    %3318 = vmatpush2.msra.mxu0 0.0
    %3319 = vmatprep.subr.mxu0 0.0
    %3320 = vmatpush2.msra.mxu0 0.0
    %3321 = vmatprep.subr.mxu0 0.0
    %3322 = vmatpush2.msra.mxu0 0.0
    %3323 = vmatprep.subr.mxu0 0.0
    %3324 = vmatpush2.msra.mxu0 0.0
    %3325 = vmatprep.mubr.f32.mxu0 0.0
    %3326 = vmatmul.mubr.f32.gmra.mxu0 %v468
    %v3327 = vpop.f32.mrf.mxu0
    %v3328 = vadd.f32 0.0, %v3327
    %v3329 = vpop.f32.mrf.mxu0
    %3330 = vmatprep.mubr.f32.mxu0 0.0
    %3331 = vmatmul.mubr.f32.gmra.mxu0 %v471
    %v3332 = vpop.f32.mrf.mxu0
    %v3333 = vadd.f32 0.0, %v3332
    %v3334 = vpop.f32.mrf.mxu0
    %3335 = vdwg.mxu0
    %3336 = vmatprep.subr.mxu0 0.0
    %3337 = vmatpush1.msra.mxu0 0.0
    %3338 = vmatprep.subr.mxu0 0.0
    %3339 = vmatpush1.msra.mxu0 0.0
    %3340 = vmatprep.subr.mxu0 0.0
    %3341 = vmatpush1.msra.mxu0 0.0
    %3342 = vmatprep.subr.mxu0 0.0
    %3343 = vmatpush1.msra.mxu0 0.0
    %3344 = vmatprep.subr.mxu0 0.0
    %3345 = vmatpush1.msra.mxu0 0.0
    %3346 = vmatprep.subr.mxu0 0.0
    %3347 = vmatpush1.msra.mxu0 0.0
    %3348 = vmatprep.subr.mxu0 0.0
    %3349 = vmatpush1.msra.mxu0 0.0
    %3350 = vmatprep.subr.mxu0 0.0
    %3351 = vmatpush1.msra.mxu0 0.0
    %3352 = vmatprep.subr.mxu0 0.0
    %3353 = vmatpush1.msra.mxu0 0.0
    %3354 = vmatprep.subr.mxu0 0.0
    %3355 = vmatpush1.msra.mxu0 0.0
    %3356 = vmatprep.subr.mxu0 0.0
    %3357 = vmatpush1.msra.mxu0 0.0
    %3358 = vmatprep.subr.mxu0 0.0
    %3359 = vmatpush1.msra.mxu0 0.0
    %3360 = vmatprep.subr.mxu0 0.0
    %3361 = vmatpush1.msra.mxu0 0.0
    %3362 = vmatprep.subr.mxu0 0.0
    %3363 = vmatpush1.msra.mxu0 0.0
    %3364 = vmatprep.subr.mxu0 0.0
    %3365 = vmatpush1.msra.mxu0 0.0
    %3366 = vmatprep.subr.mxu0 0.0
    %3367 = vmatpush1.msra.mxu0 %v3260
    %3368 = vmatprep.subr.mxu0 0.0
    %3369 = vmatpush2.msra.mxu0 0.0
    %3370 = vmatprep.subr.mxu0 0.0
    %3371 = vmatpush2.msra.mxu0 0.0
    %3372 = vmatprep.subr.mxu0 0.0
    %3373 = vmatpush2.msra.mxu0 0.0
    %3374 = vmatprep.subr.mxu0 0.0
    %3375 = vmatpush2.msra.mxu0 0.0
    %3376 = vmatprep.subr.mxu0 0.0
    %3377 = vmatpush2.msra.mxu0 0.0
    %3378 = vmatprep.subr.mxu0 0.0
    %3379 = vmatpush2.msra.mxu0 0.0
    %3380 = vmatprep.subr.mxu0 0.0
    %3381 = vmatpush2.msra.mxu0 0.0
    %3382 = vmatprep.subr.mxu0 0.0
    %3383 = vmatpush2.msra.mxu0 0.0
    %3384 = vmatprep.subr.mxu0 0.0
    %3385 = vmatpush2.msra.mxu0 0.0
    %3386 = vmatprep.subr.mxu0 0.0
    %3387 = vmatpush2.msra.mxu0 0.0
    %3388 = vmatprep.subr.mxu0 0.0
    %3389 = vmatpush2.msra.mxu0 0.0
    %3390 = vmatprep.subr.mxu0 0.0
    %3391 = vmatpush2.msra.mxu0 0.0
    %3392 = vmatprep.subr.mxu0 0.0
    %3393 = vmatpush2.msra.mxu0 0.0
    %3394 = vmatprep.subr.mxu0 0.0
    %3395 = vmatpush2.msra.mxu0 0.0
    %3396 = vmatprep.subr.mxu0 0.0
    %3397 = vmatpush2.msra.mxu0 0.0
    %3398 = vmatprep.subr.mxu0 0.0
    %3399 = vmatpush2.msra.mxu0 0.0
    %3400 = vmatprep.mubr.f32.mxu0 0.0
    %3401 = vmatmul.mubr.f32.gmra.mxu0 %v387
    %v3402 = vpop.f32.mrf.mxu0
    %v3403 = vadd.f32 %v3328, %v3402
    %v3404 = vpop.f32.mrf.mxu0
    %3405 = vmatprep.mubr.f32.mxu0 0.0
    %3406 = vmatmul.mubr.f32.gmra.mxu0 %v390
    %v3407 = vpop.f32.mrf.mxu0
    %v3408 = vadd.f32 %v3333, %v3407
    %v3409 = vpop.f32.mrf.mxu0
    %3410 = vdwg.mxu0
    %v3411 = vmul.f32 %v3403, 0.5
    %v3412 = vmul.f32 %v3408, 0.5
    %3413 = vmatprep.subr.mxu0 0.0
    %3414 = vmatpush1.msra.mxu0 0.0
    %3415 = vmatprep.subr.mxu0 0.0
    %3416 = vmatpush1.msra.mxu0 0.0
    %3417 = vmatprep.subr.mxu0 0.0
    %3418 = vmatpush1.msra.mxu0 0.0
    %3419 = vmatprep.subr.mxu0 0.0
    %3420 = vmatpush1.msra.mxu0 0.0
    %3421 = vmatprep.subr.mxu0 0.0
    %3422 = vmatpush1.msra.mxu0 0.0
    %3423 = vmatprep.subr.mxu0 0.0
    %3424 = vmatpush1.msra.mxu0 0.0
    %3425 = vmatprep.subr.mxu0 0.0
    %3426 = vmatpush1.msra.mxu0 0.0
    %3427 = vmatprep.subr.mxu0 0.0
    %3428 = vmatpush1.msra.mxu0 0.0
    %3429 = vmatprep.subr.mxu0 0.0
    %3430 = vmatpush1.msra.mxu0 0.0
    %3431 = vmatprep.subr.mxu0 0.0
    %3432 = vmatpush1.msra.mxu0 0.0
    %3433 = vmatprep.subr.mxu0 0.0
    %3434 = vmatpush1.msra.mxu0 0.0
    %3435 = vmatprep.subr.mxu0 0.0
    %3436 = vmatpush1.msra.mxu0 0.0
    %3437 = vmatprep.subr.mxu0 0.0
    %3438 = vmatpush1.msra.mxu0 0.0
    %3439 = vmatprep.subr.mxu0 0.0
    %3440 = vmatpush1.msra.mxu0 0.0
    %3441 = vmatprep.subr.mxu0 0.0
    %3442 = vmatpush1.msra.mxu0 %v3412
    %3443 = vmatprep.subr.mxu0 0.0
    %3444 = vmatpush1.msra.mxu0 %v3411
    %3445 = vmatprep.subr.mxu0 0.0
    %3446 = vmatpush2.msra.mxu0 0.0
    %3447 = vmatprep.subr.mxu0 0.0
    %3448 = vmatpush2.msra.mxu0 0.0
    %3449 = vmatprep.subr.mxu0 0.0
    %3450 = vmatpush2.msra.mxu0 0.0
    %3451 = vmatprep.subr.mxu0 0.0
    %3452 = vmatpush2.msra.mxu0 0.0
    %3453 = vmatprep.subr.mxu0 0.0
    %3454 = vmatpush2.msra.mxu0 0.0
    %3455 = vmatprep.subr.mxu0 0.0
    %3456 = vmatpush2.msra.mxu0 0.0
    %3457 = vmatprep.subr.mxu0 0.0
    %3458 = vmatpush2.msra.mxu0 0.0
    %3459 = vmatprep.subr.mxu0 0.0
    %3460 = vmatpush2.msra.mxu0 0.0
    %3461 = vmatprep.subr.mxu0 0.0
    %3462 = vmatpush2.msra.mxu0 0.0
    %3463 = vmatprep.subr.mxu0 0.0
    %3464 = vmatpush2.msra.mxu0 0.0
    %3465 = vmatprep.subr.mxu0 0.0
    %3466 = vmatpush2.msra.mxu0 0.0
    %3467 = vmatprep.subr.mxu0 0.0
    %3468 = vmatpush2.msra.mxu0 0.0
    %3469 = vmatprep.subr.mxu0 0.0
    %3470 = vmatpush2.msra.mxu0 0.0
    %3471 = vmatprep.subr.mxu0 0.0
    %3472 = vmatpush2.msra.mxu0 0.0
    %3473 = vmatprep.subr.mxu0 0.0
    %3474 = vmatpush2.msra.mxu0 0.0
    %3475 = vmatprep.subr.mxu0 0.0
    %3476 = vmatpush2.msra.mxu0 0.0
    %3477 = vmatprep.mubr.f32.mxu0 0.0
    %3478 = vmatmul.mubr.f32.gmra.mxu0 %v1286
    %v3479 = vpop.f32.mrf.mxu0
    %v3480 = vadd.f32 0.0, %v3479
    %v3481 = vpop.f32.mrf.mxu0
    %3482 = vdwg.mxu0
    %v3483 = vld [vmem:[%s85] sm:$0xf]
    %v3484 = vld [vmem:[%s87] sm:$0xff]
    %3485 = vmatprep.subr.mxu0 0.0
    %3486 = vmatpush1.msra.mxu0 0.0
    %3487 = vmatprep.subr.mxu0 0.0
    %3488 = vmatpush1.msra.mxu0 0.0
    %3489 = vmatprep.subr.mxu0 0.0
    %3490 = vmatpush1.msra.mxu0 0.0
    %3491 = vmatprep.subr.mxu0 0.0
    %3492 = vmatpush1.msra.mxu0 0.0
    %3493 = vmatprep.subr.mxu0 0.0
    %3494 = vmatpush1.msra.mxu0 0.0
    %3495 = vmatprep.subr.mxu0 0.0
    %3496 = vmatpush1.msra.mxu0 0.0
    %3497 = vmatprep.subr.mxu0 0.0
    %3498 = vmatpush1.msra.mxu0 0.0
    %3499 = vmatprep.subr.mxu0 0.0
    %3500 = vmatpush1.msra.mxu0 0.0
    %3501 = vmatprep.subr.mxu0 0.0
    %3502 = vmatpush1.msra.mxu0 0.0
    %3503 = vmatprep.subr.mxu0 0.0
    %3504 = vmatpush1.msra.mxu0 0.0
    %3505 = vmatprep.subr.mxu0 0.0
    %3506 = vmatpush1.msra.mxu0 0.0
    %3507 = vmatprep.subr.mxu0 0.0
    %3508 = vmatpush1.msra.mxu0 0.0
    %3509 = vmatprep.subr.mxu0 0.0
    %3510 = vmatpush1.msra.mxu0 0.0
    %3511 = vmatprep.subr.mxu0 0.0
    %3512 = vmatpush1.msra.mxu0 0.0
    %3513 = vmatprep.subr.mxu0 0.0
    %3514 = vmatpush1.msra.mxu0 0.0
    %3515 = vmatprep.subr.mxu0 0.0
    %3516 = vmatpush1.msra.mxu0 %v3484
    %3517 = vmatprep.subr.mxu0 0.0
    %3518 = vmatpush2.msra.mxu0 0.0
    %3519 = vmatprep.subr.mxu0 0.0
    %3520 = vmatpush2.msra.mxu0 0.0
    %3521 = vmatprep.subr.mxu0 0.0
    %3522 = vmatpush2.msra.mxu0 0.0
    %3523 = vmatprep.subr.mxu0 0.0
    %3524 = vmatpush2.msra.mxu0 0.0
    %3525 = vmatprep.subr.mxu0 0.0
    %3526 = vmatpush2.msra.mxu0 0.0
    %3527 = vmatprep.subr.mxu0 0.0
    %3528 = vmatpush2.msra.mxu0 0.0
    %3529 = vmatprep.subr.mxu0 0.0
    %3530 = vmatpush2.msra.mxu0 0.0
    %3531 = vmatprep.subr.mxu0 0.0
    %3532 = vmatpush2.msra.mxu0 0.0
    %3533 = vmatprep.subr.mxu0 0.0
    %3534 = vmatpush2.msra.mxu0 0.0
    %3535 = vmatprep.subr.mxu0 0.0
    %3536 = vmatpush2.msra.mxu0 0.0
    %3537 = vmatprep.subr.mxu0 0.0
    %3538 = vmatpush2.msra.mxu0 0.0
    %3539 = vmatprep.subr.mxu0 0.0
    %3540 = vmatpush2.msra.mxu0 0.0
    %3541 = vmatprep.subr.mxu0 0.0
    %3542 = vmatpush2.msra.mxu0 0.0
    %3543 = vmatprep.subr.mxu0 0.0
    %3544 = vmatpush2.msra.mxu0 0.0
    %3545 = vmatprep.subr.mxu0 0.0
    %3546 = vmatpush2.msra.mxu0 0.0
    %3547 = vmatprep.subr.mxu0 0.0
    %3548 = vmatpush2.msra.mxu0 0.0
    %3549 = vmatprep.mubr.f32.mxu0 0.0
    %3550 = vmatmul.mubr.f32.gmra.mxu0 %v3107
    %v3551 = vpop.f32.mrf.mxu0
    %v3552 = vadd.f32 0.0, %v3551
    %v3553 = vpop.f32.mrf.mxu0
    %3554 = vdwg.mxu0
    %v3556 = vsel %vm306, %v3483, 0
    %3558 = vmatprep.subr.mxu0 0.0
    %3559 = vmatpush1.msra.mxu0 0.0
    %3560 = vmatprep.subr.mxu0 0.0
    %3561 = vmatpush1.msra.mxu0 0.0
    %3562 = vmatprep.subr.mxu0 0.0
    %3563 = vmatpush1.msra.mxu0 0.0
    %3564 = vmatprep.subr.mxu0 0.0
    %3565 = vmatpush1.msra.mxu0 0.0
    %3566 = vmatprep.subr.mxu0 0.0
    %3567 = vmatpush1.msra.mxu0 0.0
    %3568 = vmatprep.subr.mxu0 0.0
    %3569 = vmatpush1.msra.mxu0 0.0
    %3570 = vmatprep.subr.mxu0 0.0
    %3571 = vmatpush1.msra.mxu0 0.0
    %3572 = vmatprep.subr.mxu0 0.0
    %3573 = vmatpush1.msra.mxu0 0.0
    %3574 = vmatprep.subr.mxu0 0.0
    %3575 = vmatpush1.msra.mxu0 0.0
    %3576 = vmatprep.subr.mxu0 0.0
    %3577 = vmatpush1.msra.mxu0 0.0
    %3578 = vmatprep.subr.mxu0 0.0
    %3579 = vmatpush1.msra.mxu0 0.0
    %3580 = vmatprep.subr.mxu0 0.0
    %3581 = vmatpush1.msra.mxu0 0.0
    %3582 = vmatprep.subr.mxu0 0.0
    %3583 = vmatpush1.msra.mxu0 0.0
    %3584 = vmatprep.subr.mxu0 0.0
    %3585 = vmatpush1.msra.mxu0 0.0
    %3586 = vmatprep.subr.mxu0 0.0
    %3587 = vmatpush1.msra.mxu0 0.0
    %3588 = vmatprep.subr.mxu0 0.0
    %3589 = vmatpush1.msra.mxu0 %v3556
    %3590 = vmatprep.subr.mxu0 0.0
    %3591 = vmatpush2.msra.mxu0 0.0
    %3592 = vmatprep.subr.mxu0 0.0
    %3593 = vmatpush2.msra.mxu0 0.0
    %3594 = vmatprep.subr.mxu0 0.0
    %3595 = vmatpush2.msra.mxu0 0.0
    %3596 = vmatprep.subr.mxu0 0.0
    %3597 = vmatpush2.msra.mxu0 0.0
    %3598 = vmatprep.subr.mxu0 0.0
    %3599 = vmatpush2.msra.mxu0 0.0
    %3600 = vmatprep.subr.mxu0 0.0
    %3601 = vmatpush2.msra.mxu0 0.0
    %3602 = vmatprep.subr.mxu0 0.0
    %3603 = vmatpush2.msra.mxu0 0.0
    %3604 = vmatprep.subr.mxu0 0.0
    %3605 = vmatpush2.msra.mxu0 0.0
    %3606 = vmatprep.subr.mxu0 0.0
    %3607 = vmatpush2.msra.mxu0 0.0
    %3608 = vmatprep.subr.mxu0 0.0
    %3609 = vmatpush2.msra.mxu0 0.0
    %3610 = vmatprep.subr.mxu0 0.0
    %3611 = vmatpush2.msra.mxu0 0.0
    %3612 = vmatprep.subr.mxu0 0.0
    %3613 = vmatpush2.msra.mxu0 0.0
    %3614 = vmatprep.subr.mxu0 0.0
    %3615 = vmatpush2.msra.mxu0 0.0
    %3616 = vmatprep.subr.mxu0 0.0
    %3617 = vmatpush2.msra.mxu0 0.0
    %3618 = vmatprep.subr.mxu0 0.0
    %3619 = vmatpush2.msra.mxu0 0.0
    %3620 = vmatprep.subr.mxu0 0.0
    %3621 = vmatpush2.msra.mxu0 0.0
    %3622 = vmatprep.mubr.f32.mxu0 0.0
    %3623 = vmatmul.mubr.f32.gmra.mxu0 %v1380
    %v3624 = vpop.f32.mrf.mxu0
    %v3625 = vadd.f32 %v3552, %v3624
    %v3626 = vpop.f32.mrf.mxu0
    %3627 = vdwg.mxu0
    %v3628 = vld [vmem:[#allocation2] sm:$0x1]
    %v3629 = vld [vmem:[%s91] sm:$0xff]
    %v3630 = vld [vmem:[%s91 + $0x8] sm:$0xff]
    %v3631 = vld [vmem:[%s91 + $0x10] sm:$0xff]
    %v3632 = vld [vmem:[#allocation4] sm:$0x1]
    %v3633 = vld [vmem:[%s95] sm:$0xff]
    %v3634 = vld [vmem:[%s95 + $0x8] sm:$0xff]
    %v3635 = vld [vmem:[%s95 + $0x10] sm:$0xff]
    %v3636 = vld [vmem:[%s95 + $0x18] sm:$0xff]
    %v3637 = vld [vmem:[%s95 + $0x20] sm:$0xff]
    %v3638 = vld [vmem:[%s95 + $0x28] sm:$0xff]
    %v3639 = vld [vmem:[%s95 + $0x30] sm:$0xff]
    %v3640 = vld [vmem:[%s95 + $0x38] sm:$0xff]
    %v3641 = vld [vmem:[#allocation6] sm:$0x1]
    %v3643 = vlaneseq
    %v3644 = vshrl.u32 %v3643, 7
    %v3645 = vsub.s32 0, %v3644
    %v3646 = vrot.slane %v3628, %v3645
    %v3648 = vadd.f32 %v3625, %v3646
    %vm3649 = vcmp.gt.f32.partialorder %v3648, 0.0
    %v3650 = vmul.f32 %v3648, 0.01
    %v3651 = vsel %vm3649, %v3648, %v3650
    %v3653 = vlaneseq
    %v3654 = vshrl.u32 %v3653, 7
    %v3655 = vsub.s32 0, %v3654
    %v3656 = vrot.slane %v3632, %v3655
    %v3659 = vsel %vm1464, %v3651, 0
    %3661 = vmatprep.subr.mxu0 0.0
    %3662 = vmatpush1.msra.mxu0 0.0
    %3663 = vmatprep.subr.mxu0 0.0
    %3664 = vmatpush1.msra.mxu0 0.0
    %3665 = vmatprep.subr.mxu0 0.0
    %3666 = vmatpush1.msra.mxu0 0.0
    %3667 = vmatprep.subr.mxu0 0.0
    %3668 = vmatpush1.msra.mxu0 0.0
    %3669 = vmatprep.subr.mxu0 0.0
    %3670 = vmatpush1.msra.mxu0 0.0
    %3671 = vmatprep.subr.mxu0 0.0
    %3672 = vmatpush1.msra.mxu0 0.0
    %3673 = vmatprep.subr.mxu0 0.0
    %3674 = vmatpush1.msra.mxu0 0.0
    %3675 = vmatprep.subr.mxu0 0.0
    %3676 = vmatpush1.msra.mxu0 0.0
    %3677 = vmatprep.subr.mxu0 0.0
    %3678 = vmatpush1.msra.mxu0 0.0
    %3679 = vmatprep.subr.mxu0 0.0
    %3680 = vmatpush1.msra.mxu0 0.0
    %3681 = vmatprep.subr.mxu0 0.0
    %3682 = vmatpush1.msra.mxu0 0.0
    %3683 = vmatprep.subr.mxu0 0.0
    %3684 = vmatpush1.msra.mxu0 0.0
    %3685 = vmatprep.subr.mxu0 0.0
    %3686 = vmatpush1.msra.mxu0 0.0
    %3687 = vmatprep.subr.mxu0 0.0
    %3688 = vmatpush1.msra.mxu0 %v3631
    %3689 = vmatprep.subr.mxu0 0.0
    %3690 = vmatpush1.msra.mxu0 %v3630
    %3691 = vmatprep.subr.mxu0 0.0
    %3692 = vmatpush1.msra.mxu0 %v3629
    %3693 = vmatprep.subr.mxu0 0.0
    %3694 = vmatpush2.msra.mxu0 0.0
    %3695 = vmatprep.subr.mxu0 0.0
    %3696 = vmatpush2.msra.mxu0 0.0
    %3697 = vmatprep.subr.mxu0 0.0
    %3698 = vmatpush2.msra.mxu0 0.0
    %3699 = vmatprep.subr.mxu0 0.0
    %3700 = vmatpush2.msra.mxu0 0.0
    %3701 = vmatprep.subr.mxu0 0.0
    %3702 = vmatpush2.msra.mxu0 0.0
    %3703 = vmatprep.subr.mxu0 0.0
    %3704 = vmatpush2.msra.mxu0 0.0
    %3705 = vmatprep.subr.mxu0 0.0
    %3706 = vmatpush2.msra.mxu0 0.0
    %3707 = vmatprep.subr.mxu0 0.0
    %3708 = vmatpush2.msra.mxu0 0.0
    %3709 = vmatprep.subr.mxu0 0.0
    %3710 = vmatpush2.msra.mxu0 0.0
    %3711 = vmatprep.subr.mxu0 0.0
    %3712 = vmatpush2.msra.mxu0 0.0
    %3713 = vmatprep.subr.mxu0 0.0
    %3714 = vmatpush2.msra.mxu0 0.0
    %3715 = vmatprep.subr.mxu0 0.0
    %3716 = vmatpush2.msra.mxu0 0.0
    %3717 = vmatprep.subr.mxu0 0.0
    %3718 = vmatpush2.msra.mxu0 0.0
    %3719 = vmatprep.subr.mxu0 0.0
    %3720 = vmatpush2.msra.mxu0 0.0
    %3721 = vmatprep.subr.mxu0 0.0
    %3722 = vmatpush2.msra.mxu0 0.0
    %3723 = vmatprep.subr.mxu0 0.0
    %3724 = vmatpush2.msra.mxu0 0.0
    %3725 = vmatprep.mubr.f32.mxu0 0.0
    %3726 = vmatmul.mubr.f32.gmra.mxu0 %v3659
    %v3727 = vpop.f32.mrf.mxu0
    %v3728 = vadd.f32 %v3656, %v3727
    %v3729 = vpop.f32.mrf.mxu0
    %3730 = vdwg.mxu0
    %vm3731 = vcmp.gt.f32.partialorder %v3728, 0.0
    %v3732 = vmul.f32 %v3728, 0.01
    %v3733 = vsel %vm3731, %v3728, %v3732
    %v3735 = vlaneseq
    %v3736 = vshrl.u32 %v3735, 7
    %v3737 = vsub.s32 0, %v3736
    %v3738 = vrot.slane %v3641, %v3737
    %v3741 = vsel %vm1547, %v3733, 0
    %3743 = vmatprep.subr.mxu0 0.0
    %3744 = vmatpush1.msra.mxu0 0.0
    %3745 = vmatprep.subr.mxu0 0.0
    %3746 = vmatpush1.msra.mxu0 0.0
    %3747 = vmatprep.subr.mxu0 0.0
    %3748 = vmatpush1.msra.mxu0 0.0
    %3749 = vmatprep.subr.mxu0 0.0
    %3750 = vmatpush1.msra.mxu0 0.0
    %3751 = vmatprep.subr.mxu0 0.0
    %3752 = vmatpush1.msra.mxu0 0.0
    %3753 = vmatprep.subr.mxu0 0.0
    %3754 = vmatpush1.msra.mxu0 0.0
    %3755 = vmatprep.subr.mxu0 0.0
    %3756 = vmatpush1.msra.mxu0 0.0
    %3757 = vmatprep.subr.mxu0 0.0
    %3758 = vmatpush1.msra.mxu0 0.0
    %3759 = vmatprep.subr.mxu0 0.0
    %3760 = vmatpush1.msra.mxu0 %v3640
    %3761 = vmatprep.subr.mxu0 0.0
    %3762 = vmatpush1.msra.mxu0 %v3639
    %3763 = vmatprep.subr.mxu0 0.0
    %3764 = vmatpush1.msra.mxu0 %v3638
    %3765 = vmatprep.subr.mxu0 0.0
    %3766 = vmatpush1.msra.mxu0 %v3637
    %3767 = vmatprep.subr.mxu0 0.0
    %3768 = vmatpush1.msra.mxu0 %v3636
    %3769 = vmatprep.subr.mxu0 0.0
    %3770 = vmatpush1.msra.mxu0 %v3635
    %3771 = vmatprep.subr.mxu0 0.0
    %3772 = vmatpush1.msra.mxu0 %v3634
    %3773 = vmatprep.subr.mxu0 0.0
    %3774 = vmatpush1.msra.mxu0 %v3633
    %3775 = vmatprep.subr.mxu0 0.0
    %3776 = vmatpush2.msra.mxu0 0.0
    %3777 = vmatprep.subr.mxu0 0.0
    %3778 = vmatpush2.msra.mxu0 0.0
    %3779 = vmatprep.subr.mxu0 0.0
    %3780 = vmatpush2.msra.mxu0 0.0
    %3781 = vmatprep.subr.mxu0 0.0
    %3782 = vmatpush2.msra.mxu0 0.0
    %3783 = vmatprep.subr.mxu0 0.0
    %3784 = vmatpush2.msra.mxu0 0.0
    %3785 = vmatprep.subr.mxu0 0.0
    %3786 = vmatpush2.msra.mxu0 0.0
    %3787 = vmatprep.subr.mxu0 0.0
    %3788 = vmatpush2.msra.mxu0 0.0
    %3789 = vmatprep.subr.mxu0 0.0
    %3790 = vmatpush2.msra.mxu0 0.0
    %3791 = vmatprep.subr.mxu0 0.0
    %3792 = vmatpush2.msra.mxu0 0.0
    %3793 = vmatprep.subr.mxu0 0.0
    %3794 = vmatpush2.msra.mxu0 0.0
    %3795 = vmatprep.subr.mxu0 0.0
    %3796 = vmatpush2.msra.mxu0 0.0
    %3797 = vmatprep.subr.mxu0 0.0
    %3798 = vmatpush2.msra.mxu0 0.0
    %3799 = vmatprep.subr.mxu0 0.0
    %3800 = vmatpush2.msra.mxu0 0.0
    %3801 = vmatprep.subr.mxu0 0.0
    %3802 = vmatpush2.msra.mxu0 0.0
    %3803 = vmatprep.subr.mxu0 0.0
    %3804 = vmatpush2.msra.mxu0 0.0
    %3805 = vmatprep.subr.mxu0 0.0
    %3806 = vmatpush2.msra.mxu0 0.0
    %3807 = vmatprep.mubr.f32.mxu0 0.0
    %3808 = vmatmul.mubr.f32.gmra.mxu0 %v3741
    %v3809 = vpop.f32.mrf.mxu0
    %v3810 = vadd.f32 %v3738, %v3809
    %v3811 = vpop.f32.mrf.mxu0
    %3812 = vdwg.mxu0
    %v3813 = vld [vmem:[%s99] sm:$0xff]
    %v3814 = vld [vmem:[%s101] sm:$0x3]
    %v3815 = vld [vmem:[%s103] sm:$0xff]
    %v3816 = vld [vmem:[#allocation7] sm:$0x1]
    %v3818 = vsel %vm385, %v3480, 0
    %3820 = vmatprep.subr.mxu0 0.0
    %3821 = vmatpush1.msra.mxu0 0.0
    %3822 = vmatprep.subr.mxu0 0.0
    %3823 = vmatpush1.msra.mxu0 0.0
    %3824 = vmatprep.subr.mxu0 0.0
    %3825 = vmatpush1.msra.mxu0 0.0
    %3826 = vmatprep.subr.mxu0 0.0
    %3827 = vmatpush1.msra.mxu0 0.0
    %3828 = vmatprep.subr.mxu0 0.0
    %3829 = vmatpush1.msra.mxu0 0.0
    %3830 = vmatprep.subr.mxu0 0.0
    %3831 = vmatpush1.msra.mxu0 0.0
    %3832 = vmatprep.subr.mxu0 0.0
    %3833 = vmatpush1.msra.mxu0 0.0
    %3834 = vmatprep.subr.mxu0 0.0
    %3835 = vmatpush1.msra.mxu0 0.0
    %3836 = vmatprep.subr.mxu0 0.0
    %3837 = vmatpush1.msra.mxu0 0.0
    %3838 = vmatprep.subr.mxu0 0.0
    %3839 = vmatpush1.msra.mxu0 0.0
    %3840 = vmatprep.subr.mxu0 0.0
    %3841 = vmatpush1.msra.mxu0 0.0
    %3842 = vmatprep.subr.mxu0 0.0
    %3843 = vmatpush1.msra.mxu0 0.0
    %3844 = vmatprep.subr.mxu0 0.0
    %3845 = vmatpush1.msra.mxu0 0.0
    %3846 = vmatprep.subr.mxu0 0.0
    %3847 = vmatpush1.msra.mxu0 0.0
    %3848 = vmatprep.subr.mxu0 0.0
    %3849 = vmatpush1.msra.mxu0 0.0
    %3850 = vmatprep.subr.mxu0 0.0
    %3851 = vmatpush1.msra.mxu0 %v3813
    %3852 = vmatprep.subr.mxu0 0.0
    %3853 = vmatpush2.msra.mxu0 0.0
    %3854 = vmatprep.subr.mxu0 0.0
    %3855 = vmatpush2.msra.mxu0 0.0
    %3856 = vmatprep.subr.mxu0 0.0
    %3857 = vmatpush2.msra.mxu0 0.0
    %3858 = vmatprep.subr.mxu0 0.0
    %3859 = vmatpush2.msra.mxu0 0.0
    %3860 = vmatprep.subr.mxu0 0.0
    %3861 = vmatpush2.msra.mxu0 0.0
    %3862 = vmatprep.subr.mxu0 0.0
    %3863 = vmatpush2.msra.mxu0 0.0
    %3864 = vmatprep.subr.mxu0 0.0
    %3865 = vmatpush2.msra.mxu0 0.0
    %3866 = vmatprep.subr.mxu0 0.0
    %3867 = vmatpush2.msra.mxu0 0.0
    %3868 = vmatprep.subr.mxu0 0.0
    %3869 = vmatpush2.msra.mxu0 0.0
    %3870 = vmatprep.subr.mxu0 0.0
    %3871 = vmatpush2.msra.mxu0 0.0
    %3872 = vmatprep.subr.mxu0 0.0
    %3873 = vmatpush2.msra.mxu0 0.0
    %3874 = vmatprep.subr.mxu0 0.0
    %3875 = vmatpush2.msra.mxu0 0.0
    %3876 = vmatprep.subr.mxu0 0.0
    %3877 = vmatpush2.msra.mxu0 0.0
    %3878 = vmatprep.subr.mxu0 0.0
    %3879 = vmatpush2.msra.mxu0 0.0
    %3880 = vmatprep.subr.mxu0 0.0
    %3881 = vmatpush2.msra.mxu0 0.0
    %3882 = vmatprep.subr.mxu0 0.0
    %3883 = vmatpush2.msra.mxu0 0.0
    %3884 = vmatprep.mubr.f32.mxu0 0.0
    %3885 = vmatmul.mubr.f32.gmra.mxu0 %v3818
    %v3886 = vpop.f32.mrf.mxu0
    %v3887 = vadd.f32 0.0, %v3886
    %v3888 = vpop.f32.mrf.mxu0
    %3889 = vdwg.mxu0
    %v3891 = vlaneseq
    %v3892 = vshrl.u32 %v3891, 7
    %v3893 = vsub.s32 0, %v3892
    %v3894 = vrot.slane %v3816, %v3893
    %v3896 = vadd.f32 %v3894, %v3887
    %v3898 = vsel %vm2218, %v3814, 0
    %3900 = vmatprep.subr.mxu0 0.0
    %3901 = vmatpush1.msra.mxu0 0.0
    %3902 = vmatprep.subr.mxu0 0.0
    %3903 = vmatpush1.msra.mxu0 0.0
    %3904 = vmatprep.subr.mxu0 0.0
    %3905 = vmatpush1.msra.mxu0 0.0
    %3906 = vmatprep.subr.mxu0 0.0
    %3907 = vmatpush1.msra.mxu0 0.0
    %3908 = vmatprep.subr.mxu0 0.0
    %3909 = vmatpush1.msra.mxu0 0.0
    %3910 = vmatprep.subr.mxu0 0.0
    %3911 = vmatpush1.msra.mxu0 0.0
    %3912 = vmatprep.subr.mxu0 0.0
    %3913 = vmatpush1.msra.mxu0 0.0
    %3914 = vmatprep.subr.mxu0 0.0
    %3915 = vmatpush1.msra.mxu0 0.0
    %3916 = vmatprep.subr.mxu0 0.0
    %3917 = vmatpush1.msra.mxu0 0.0
    %3918 = vmatprep.subr.mxu0 0.0
    %3919 = vmatpush1.msra.mxu0 0.0
    %3920 = vmatprep.subr.mxu0 0.0
    %3921 = vmatpush1.msra.mxu0 0.0
    %3922 = vmatprep.subr.mxu0 0.0
    %3923 = vmatpush1.msra.mxu0 0.0
    %3924 = vmatprep.subr.mxu0 0.0
    %3925 = vmatpush1.msra.mxu0 0.0
    %3926 = vmatprep.subr.mxu0 0.0
    %3927 = vmatpush1.msra.mxu0 0.0
    %3928 = vmatprep.subr.mxu0 0.0
    %3929 = vmatpush1.msra.mxu0 0.0
    %3930 = vmatprep.subr.mxu0 0.0
    %3931 = vmatpush1.msra.mxu0 %v3898
    %3932 = vmatprep.subr.mxu0 0.0
    %3933 = vmatpush2.msra.mxu0 0.0
    %3934 = vmatprep.subr.mxu0 0.0
    %3935 = vmatpush2.msra.mxu0 0.0
    %3936 = vmatprep.subr.mxu0 0.0
    %3937 = vmatpush2.msra.mxu0 0.0
    %3938 = vmatprep.subr.mxu0 0.0
    %3939 = vmatpush2.msra.mxu0 0.0
    %3940 = vmatprep.subr.mxu0 0.0
    %3941 = vmatpush2.msra.mxu0 0.0
    %3942 = vmatprep.subr.mxu0 0.0
    %3943 = vmatpush2.msra.mxu0 0.0
    %3944 = vmatprep.subr.mxu0 0.0
    %3945 = vmatpush2.msra.mxu0 0.0
    %3946 = vmatprep.subr.mxu0 0.0
    %3947 = vmatpush2.msra.mxu0 0.0
    %3948 = vmatprep.subr.mxu0 0.0
    %3949 = vmatpush2.msra.mxu0 0.0
    %3950 = vmatprep.subr.mxu0 0.0
    %3951 = vmatpush2.msra.mxu0 0.0
    %3952 = vmatprep.subr.mxu0 0.0
    %3953 = vmatpush2.msra.mxu0 0.0
    %3954 = vmatprep.subr.mxu0 0.0
    %3955 = vmatpush2.msra.mxu0 0.0
    %3956 = vmatprep.subr.mxu0 0.0
    %3957 = vmatpush2.msra.mxu0 0.0
    %3958 = vmatprep.subr.mxu0 0.0
    %3959 = vmatpush2.msra.mxu0 0.0
    %3960 = vmatprep.subr.mxu0 0.0
    %3961 = vmatpush2.msra.mxu0 0.0
    %3962 = vmatprep.subr.mxu0 0.0
    %3963 = vmatpush2.msra.mxu0 0.0
    %3964 = vmatprep.mubr.f32.mxu0 0.0
    %3965 = vmatmul.mubr.f32.gmra.mxu0 %v3030
    %v3966 = vpop.f32.mrf.mxu0
    %v3967 = vadd.f32 0.0, %v3966
    %v3968 = vpop.f32.mrf.mxu0
    %3969 = vdwg.mxu0
    %v3970 = vadd.f32 %v3896, %v3967
    %v3972 = vsel %vm385, %v3810, 0
    %3974 = vmatprep.subr.mxu0 0.0
    %3975 = vmatpush1.msra.mxu0 0.0
    %3976 = vmatprep.subr.mxu0 0.0
    %3977 = vmatpush1.msra.mxu0 0.0
    %3978 = vmatprep.subr.mxu0 0.0
    %3979 = vmatpush1.msra.mxu0 0.0
    %3980 = vmatprep.subr.mxu0 0.0
    %3981 = vmatpush1.msra.mxu0 0.0
    %3982 = vmatprep.subr.mxu0 0.0
    %3983 = vmatpush1.msra.mxu0 0.0
    %3984 = vmatprep.subr.mxu0 0.0
    %3985 = vmatpush1.msra.mxu0 0.0
    %3986 = vmatprep.subr.mxu0 0.0
    %3987 = vmatpush1.msra.mxu0 0.0
    %3988 = vmatprep.subr.mxu0 0.0
    %3989 = vmatpush1.msra.mxu0 0.0
    %3990 = vmatprep.subr.mxu0 0.0
    %3991 = vmatpush1.msra.mxu0 0.0
    %3992 = vmatprep.subr.mxu0 0.0
    %3993 = vmatpush1.msra.mxu0 0.0
    %3994 = vmatprep.subr.mxu0 0.0
    %3995 = vmatpush1.msra.mxu0 0.0
    %3996 = vmatprep.subr.mxu0 0.0
    %3997 = vmatpush1.msra.mxu0 0.0
    %3998 = vmatprep.subr.mxu0 0.0
    %3999 = vmatpush1.msra.mxu0 0.0
    %4000 = vmatprep.subr.mxu0 0.0
    %4001 = vmatpush1.msra.mxu0 0.0
    %4002 = vmatprep.subr.mxu0 0.0
    %4003 = vmatpush1.msra.mxu0 0.0
    %4004 = vmatprep.subr.mxu0 0.0
    %4005 = vmatpush1.msra.mxu0 %v3815
    %4006 = vmatprep.subr.mxu0 0.0
    %4007 = vmatpush2.msra.mxu0 0.0
    %4008 = vmatprep.subr.mxu0 0.0
    %4009 = vmatpush2.msra.mxu0 0.0
    %4010 = vmatprep.subr.mxu0 0.0
    %4011 = vmatpush2.msra.mxu0 0.0
    %4012 = vmatprep.subr.mxu0 0.0
    %4013 = vmatpush2.msra.mxu0 0.0
    %4014 = vmatprep.subr.mxu0 0.0
    %4015 = vmatpush2.msra.mxu0 0.0
    %4016 = vmatprep.subr.mxu0 0.0
    %4017 = vmatpush2.msra.mxu0 0.0
    %4018 = vmatprep.subr.mxu0 0.0
    %4019 = vmatpush2.msra.mxu0 0.0
    %4020 = vmatprep.subr.mxu0 0.0
    %4021 = vmatpush2.msra.mxu0 0.0
    %4022 = vmatprep.subr.mxu0 0.0
    %4023 = vmatpush2.msra.mxu0 0.0
    %4024 = vmatprep.subr.mxu0 0.0
    %4025 = vmatpush2.msra.mxu0 0.0
    %4026 = vmatprep.subr.mxu0 0.0
    %4027 = vmatpush2.msra.mxu0 0.0
    %4028 = vmatprep.subr.mxu0 0.0
    %4029 = vmatpush2.msra.mxu0 0.0
    %4030 = vmatprep.subr.mxu0 0.0
    %4031 = vmatpush2.msra.mxu0 0.0
    %4032 = vmatprep.subr.mxu0 0.0
    %4033 = vmatpush2.msra.mxu0 0.0
    %4034 = vmatprep.subr.mxu0 0.0
    %4035 = vmatpush2.msra.mxu0 0.0
    %4036 = vmatprep.subr.mxu0 0.0
    %4037 = vmatpush2.msra.mxu0 0.0
    %4038 = vmatprep.mubr.f32.mxu0 0.0
    %4039 = vmatmul.mubr.f32.gmra.mxu0 %v3972
    %v4040 = vpop.f32.mrf.mxu0
    %v4041 = vadd.f32 0.0, %v4040
    %v4042 = vpop.f32.mrf.mxu0
    %4043 = vdwg.mxu0
    %v4044 = vadd.f32 %v3970, %v4041
    %4045 = vst.msk [vmem:[%s107] sm:$0xff] %vm552, %v4044
    // Predicated region
    $region230: #{tpu_custom_call.1} parent=1 // pred_check
      _
    $region231: #{tpu_custom_call.1} parent=1 // pred_check_branch
      %4047 = sbr.rel (0) target = $region233
    $region232: #{tpu_custom_call.1} parent=1 // pred_region
      _
    $region233: #{tpu_custom_call.1} parent=1 // pred_fallthru
      _
    // Predicated region
    $region234: #{tpu_custom_call.1} parent=1 // pred_check
      _
    $region235: #{tpu_custom_call.1} parent=1 // pred_check_branch
      %4049 = sbr.rel (0) target = $region237
    $region236: #{tpu_custom_call.1} parent=1 // pred_region
      _
    $region237: #{tpu_custom_call.1} parent=1 // pred_fallthru
      _
    %4050 = vsyncpa [#allocation3], 1
    %4051 = vsyncpa [#allocation5], 1
    %4052 = vsyncpa [#allocation8], 1

</llo_original>
